<compile_context>
chip_gen: v5e
topology: v5e:2x2
jax: 0.10.0
libtpu: 0.0.40
codegen_flags: <defaults>
</compile_context>

<pallas_src>
import functools

import jax
import jax.numpy as jnp
from jax import lax
from jax.experimental import pallas as pl
from jax.experimental.pallas import tpu as pltpu

D_MODEL = 64
N_HEAD = 4
HEAD_DIM = D_MODEL // N_HEAD
D_FF = 2048            # nn.TransformerEncoderLayer default dim_feedforward
N_LAYERS = 2
N_CLASSES = 7
LN_EPS = 1e-5

_STACKED_KEYS = ("in_proj_w", "in_proj_b", "out_w", "out_b", "ln1_g", "ln1_b",
                 "ff1_w", "ff1_b", "ff2_w", "ff2_b", "ln2_g", "ln2_b")


def _dot(a, w):
    # bf16 operands for the MXU (native on v5e/v6e/v7x), f32 accumulation.
    return jnp.dot(a.astype(jnp.bfloat16), w.astype(jnp.bfloat16),
                   preferred_element_type=jnp.float32)


def _layernorm(x, g, b):
    mean = jnp.mean(x, axis=-1, keepdims=True)
    var = jnp.mean(jnp.square(x - mean), axis=-1, keepdims=True)
    return (x - mean) * lax.rsqrt(var + LN_EPS) * g + b


def _split_heads(qkv, col0, batch, seq):
    """(B*S, 3D) lane slab -> (N_HEAD*B, S, HEAD_DIM) head-batched value.

    One up-front relayout per q/k/v per layer: N_HEAD lane slices stacked on a
    leading (head-major) batch axis so a single batched contraction covers all
    heads and sequences.
    """
    parts = []
    for hi in range(N_HEAD):
        c = col0 + hi * HEAD_DIM
        parts.append(qkv[:, c:c + HEAD_DIM].reshape(batch, seq, HEAD_DIM))
    return jnp.concatenate(parts, axis=0)


def _merge_heads(ctx, batch, seq):
    """(N_HEAD*B, S, HEAD_DIM) -> (B*S, D_MODEL) with PyTorch head ordering."""
    outs = []
    for hi in range(N_HEAD):
        outs.append(ctx[hi * batch:(hi + 1) * batch].reshape(batch * seq,
                                                             HEAD_DIM))
    return jnp.concatenate(outs, axis=-1)


def _fused_kernel(x_ref, emb_w, emb_b, fc_w, fc_b,
                  inw, inb, outw, outb, ln1g, ln1b,
                  f1w, f1b, f2w, f2b, ln2g, ln2b,
                  o_ref, h_ref, *, batch, seq):
    layer = pl.program_id(0)

    # ---- embedding (only on the first layer iteration) ----
    @pl.when(layer == 0)
    def _():
        h_ref[...] = _dot(x_ref[...], emb_w[...]) + emb_b[...]   # (N, D) f32

    h = h_ref[...]

    # ---- self attention: QKV proj + single head-batched SDPA ----
    qkv = _dot(h, inw[0]) + inb[0]                               # (N, 3D) f32
    qh = _split_heads(qkv, 0, batch, seq)                        # (H*B, S, Dh)
    kh = _split_heads(qkv, D_MODEL, batch, seq)
    vh = _split_heads(qkv, 2 * D_MODEL, batch, seq)

    # scale 1/sqrt(Dh) already folded into the Q projection at init time.
    s = jnp.einsum('bqd,bkd->bqk',
                   qh.astype(jnp.bfloat16), kh.astype(jnp.bfloat16),
                   preferred_element_type=jnp.float32)           # (H*B, S, S)
    m = jnp.max(s, axis=-1, keepdims=True)
    p = jnp.exp(s - m)
    p = p * pl.reciprocal(jnp.sum(p, axis=-1, keepdims=True), approx=True)
    ctx = jnp.einsum('bqk,bkd->bqd',
                     p.astype(jnp.bfloat16), vh.astype(jnp.bfloat16),
                     preferred_element_type=jnp.float32)         # (H*B, S, Dh)
    a = _merge_heads(ctx, batch, seq)                            # (N, D)

    a = _dot(a, outw[0]) + outb[0]
    h = _layernorm(h + a, ln1g[0], ln1b[0])                      # post-norm

    # ---- feed-forward block ----
    ff = jnp.maximum(_dot(h, f1w[0]) + f1b[0], 0.0)
    ff = _dot(ff, f2w[0]) + f2b[0]
    h = _layernorm(h + ff, ln2g[0], ln2b[0])
    # TODO(synk): dropout (p=0.1) is identity in eval mode; omitted here.

    h_ref[...] = h

    # ---- last-token select (== x[-1] in seq-first layout) + classifier ----
    @pl.when(layer == pl.num_programs(0) - 1)
    def _():
        last = jnp.concatenate(
            [h[b * seq + seq - 1: b * seq + seq, :] for b in range(batch)],
            axis=0)                                              # (B, D)
        o_ref[...] = (_dot(last, fc_w[...]) + fc_b[...]).astype(o_ref.dtype)


def transformer_forward(x, params):
    B, S, in_dim = x.shape
    n = B * S
    x2 = x.reshape(n, in_dim).astype(jnp.float32)
    num_layers = params["in_proj_w"].shape[0]

    const_inputs = [x2, params["emb_w"], params["emb_b"],
                    params["fc_w"], params["fc_b"]]
    layer_inputs = [params[k] for k in _STACKED_KEYS]

    # Constants: fetched once (same block index for every layer step).
    const_specs = [pl.BlockSpec(a.shape, lambda l: (0, 0))
                   for a in const_inputs]
    # Per-layer stacked weights: block (1, in, out) indexed by the layer grid
    # axis -> Pallas double-buffers layer l+1's weights behind layer l.
    layer_specs = [pl.BlockSpec((1,) + a.shape[1:], lambda l: (l, 0, 0))
                   for a in layer_inputs]

    kernel = functools.partial(_fused_kernel, batch=B, seq=S)
    return pl.pallas_call(
        kernel,
        out_shape=jax.ShapeDtypeStruct((B, N_CLASSES), jnp.float32),
        grid=(num_layers,),
        in_specs=const_specs + layer_specs,
        out_specs=pl.BlockSpec((B, N_CLASSES), lambda l: (0, 0)),
        scratch_shapes=[pltpu.VMEM((n, D_MODEL), jnp.float32)],   # h carry
        compiler_params=pltpu.CompilerParams(
            dimension_semantics=("arbitrary",)),
    )(*const_inputs, *layer_inputs)


# -------- Deterministic parameter init (pre-transposed / pre-stacked) --------
def init_params(key, input_dim):
    scale = 1.0 / (HEAD_DIM ** 0.5)
    ks = jax.random.split(key, 6)

    def w(k, shape, s=0.05):
        return s * jax.random.normal(k, shape, dtype=jnp.float32)

    in_proj_w = w(ks[2], (N_LAYERS, D_MODEL, 3 * D_MODEL))
    in_proj_b = jnp.zeros((N_LAYERS, 1, 3 * D_MODEL), jnp.float32)
    # Fold the 1/sqrt(head_dim) attention scale into the Q projection
    # (init-time weight fold, zero runtime cost).
    in_proj_w = in_proj_w.at[:, :, :D_MODEL].multiply(scale)
    in_proj_b = in_proj_b.at[:, :, :D_MODEL].multiply(scale)

    return {
        "emb_w": w(ks[0], (input_dim, D_MODEL)).astype(jnp.bfloat16),
        "emb_b": jnp.zeros((1, D_MODEL), jnp.float32),
        "fc_w": w(ks[1], (D_MODEL, N_CLASSES)).astype(jnp.bfloat16),
        "fc_b": jnp.zeros((1, N_CLASSES), jnp.float32),
        "in_proj_w": in_proj_w.astype(jnp.bfloat16),
        "in_proj_b": in_proj_b,
        "out_w": w(ks[3], (N_LAYERS, D_MODEL, D_MODEL)).astype(jnp.bfloat16),
        "out_b": jnp.zeros((N_LAYERS, 1, D_MODEL), jnp.float32),
        "ln1_g": jnp.ones((N_LAYERS, 1, D_MODEL), jnp.float32),
        "ln1_b": jnp.zeros((N_LAYERS, 1, D_MODEL), jnp.float32),
        "ff1_w": w(ks[4], (N_LAYERS, D_MODEL, D_FF)).astype(jnp.bfloat16),
        "ff1_b": jnp.zeros((N_LAYERS, 1, D_FF), jnp.float32),
        "ff2_w": w(ks[5], (N_LAYERS, D_FF, D_MODEL)).astype(jnp.bfloat16),
        "ff2_b": jnp.zeros((N_LAYERS, 1, D_MODEL), jnp.float32),
        "ln2_g": jnp.ones((N_LAYERS, 1, D_MODEL), jnp.float32),
        "ln2_b": jnp.zeros((N_LAYERS, 1, D_MODEL), jnp.float32),
    }


if __name__ == "__main__":
    key = jax.random.PRNGKey(0)
    pkey, xkey = jax.random.split(key)
    B, S, IN_DIM = 2, 8, 16
    params = init_params(pkey, IN_DIM)
    x = jax.random.normal(xkey, (B, S, IN_DIM), dtype=jnp.float32)
    out = jax.jit(transformer_forward)(x, params)
    jax.block_until_ready(out)
    assert out.shape == (B, N_CLASSES), out.shape
    print("KERNEL_OK")
</pallas_src>

<mosaic_0001>
module attributes {stable_mosaic.version = 11 : i64} {
  func.func @_fused_kernel(%arg0: i32, %arg1: memref<16x16xf32, #tpu.memory_space<vmem>>, %arg2: memref<16x64xbf16, #tpu.memory_space<vmem>>, %arg3: memref<1x64xf32, #tpu.memory_space<vmem>>, %arg4: memref<64x7xbf16, #tpu.memory_space<vmem>>, %arg5: memref<1x7xf32, #tpu.memory_space<vmem>>, %arg6: memref<1x64x192xbf16, #tpu.memory_space<vmem>>, %arg7: memref<1x1x192xf32, #tpu.memory_space<vmem>>, %arg8: memref<1x64x64xbf16, #tpu.memory_space<vmem>>, %arg9: memref<1x1x64xf32, #tpu.memory_space<vmem>>, %arg10: memref<1x1x64xf32, #tpu.memory_space<vmem>>, %arg11: memref<1x1x64xf32, #tpu.memory_space<vmem>>, %arg12: memref<1x64x2048xbf16, #tpu.memory_space<vmem>>, %arg13: memref<1x1x2048xf32, #tpu.memory_space<vmem>>, %arg14: memref<1x2048x64xbf16, #tpu.memory_space<vmem>>, %arg15: memref<1x1x64xf32, #tpu.memory_space<vmem>>, %arg16: memref<1x1x64xf32, #tpu.memory_space<vmem>>, %arg17: memref<1x1x64xf32, #tpu.memory_space<vmem>>, %arg18: memref<2x7xf32, #tpu.memory_space<vmem>>, %arg19: memref<16x64xf32, #tpu.memory_space<vmem>>) attributes {dimension_semantics = [#tpu.dimension_semantics<arbitrary>], iteration_bounds = array<i64: 2>, scalar_prefetch = 0 : i64, scratch_operands = 1 : i64, tpu.core_type = #tpu.core_type<tc>, window_params = [{pipeline_mode = #tpu.pipeline_mode<synchronous>, transform_indices = @transform_0, window_bounds = array<i64: 16, 16>}, {pipeline_mode = #tpu.pipeline_mode<synchronous>, transform_indices = @transform_1, window_bounds = array<i64: 16, 64>}, {pipeline_mode = #tpu.pipeline_mode<synchronous>, transform_indices = @transform_2, window_bounds = array<i64: 1, 64>}, {pipeline_mode = #tpu.pipeline_mode<synchronous>, transform_indices = @transform_3, window_bounds = array<i64: 64, 7>}, {pipeline_mode = #tpu.pipeline_mode<synchronous>, transform_indices = @transform_4, window_bounds = array<i64: 1, 7>}, {transform_indices = @transform_5, window_bounds = array<i64: 1, 64, 192>}, {transform_indices = @transform_6, window_bounds = array<i64: 1, 1, 192>}, {transform_indices = @transform_7, window_bounds = array<i64: 1, 64, 64>}, {transform_indices = @transform_8, window_bounds = array<i64: 1, 1, 64>}, {transform_indices = @transform_9, window_bounds = array<i64: 1, 1, 64>}, {transform_indices = @transform_10, window_bounds = array<i64: 1, 1, 64>}, {transform_indices = @transform_11, window_bounds = array<i64: 1, 64, 2048>}, {transform_indices = @transform_12, window_bounds = array<i64: 1, 1, 2048>}, {transform_indices = @transform_13, window_bounds = array<i64: 1, 2048, 64>}, {transform_indices = @transform_14, window_bounds = array<i64: 1, 1, 64>}, {transform_indices = @transform_15, window_bounds = array<i64: 1, 1, 64>}, {transform_indices = @transform_16, window_bounds = array<i64: 1, 1, 64>}, {pipeline_mode = #tpu.pipeline_mode<synchronous>, transform_indices = @transform_17, window_bounds = array<i64: 2, 7>}]} {
    %c0_i32 = arith.constant 0 : i32
    %0 = arith.cmpi eq, %arg0, %c0_i32 : i32
    %1 = arith.extui %0 : i1 to i32
    %c0_i32_0 = arith.constant 0 : i32
    %2 = arith.cmpi ne, %1, %c0_i32_0 : i32
    scf.if %2 {
      %c0_59 = arith.constant 0 : index
      %c0_60 = arith.constant 0 : index
      %148 = vector.load %arg1[%c0_59, %c0_60] : memref<16x16xf32, #tpu.memory_space<vmem>>, vector<16x16xf32>
      %c0_61 = arith.constant 0 : index
      %c0_62 = arith.constant 0 : index
      %149 = vector.load %arg2[%c0_61, %c0_62] : memref<16x64xbf16, #tpu.memory_space<vmem>>, vector<16x64xbf16>
      %150 = arith.truncf %148 : vector<16x16xf32> to vector<16x16xbf16>
      %cst_63 = arith.constant dense<0.000000e+00> : vector<16x64xf32>
      %151 = tpu.matmul %150, %149, %cst_63 {dimension_numbers = #tpu.dot_dimension_numbers<[1], [0], [0], [1], [0, 0, 1, 1], [], []>} : vector<16x16xbf16>, vector<16x64xbf16>, vector<16x64xf32> -> vector<16x64xf32>
      %c0_64 = arith.constant 0 : index
      %c0_65 = arith.constant 0 : index
      %152 = vector.load %arg3[%c0_64, %c0_65] : memref<1x64xf32, #tpu.memory_space<vmem>>, vector<1x64xf32>
      %153 = vector.broadcast %152 : vector<1x64xf32> to vector<16x64xf32>
      %154 = arith.addf %151, %153 : vector<16x64xf32>
      %c0_66 = arith.constant 0 : index
      %c0_67 = arith.constant 0 : index
      %155 = vector.load %arg19[%c0_66, %c0_67] : memref<16x64xf32, #tpu.memory_space<vmem>>, vector<16x64xf32>
      tpu.vector_store %arg19[%c0_66, %c0_67], %154 {strides = array<i32>} : memref<16x64xf32, #tpu.memory_space<vmem>>, vector<16x64xf32>,
    } else {
    }
    %c0 = arith.constant 0 : index
    %c0_1 = arith.constant 0 : index
    %3 = vector.load %arg19[%c0, %c0_1] : memref<16x64xf32, #tpu.memory_space<vmem>>, vector<16x64xf32>
    %c0_2 = arith.constant 0 : index
    %c0_3 = arith.constant 0 : index
    %c0_4 = arith.constant 0 : index
    %4 = vector.load %arg6[%c0_2, %c0_3, %c0_4] : memref<1x64x192xbf16, #tpu.memory_space<vmem>>, vector<1x64x192xbf16>
    %5 = vector.shape_cast %4 : vector<1x64x192xbf16> to vector<64x192xbf16>
    %6 = arith.truncf %3 : vector<16x64xf32> to vector<16x64xbf16>
    %cst = arith.constant dense<0.000000e+00> : vector<16x192xf32>
    %7 = tpu.matmul %6, %5, %cst {dimension_numbers = #tpu.dot_dimension_numbers<[1], [0], [0], [1], [0, 0, 1, 1], [], []>} : vector<16x64xbf16>, vector<64x192xbf16>, vector<16x192xf32> -> vector<16x192xf32>
    %c0_5 = arith.constant 0 : index
    %c0_6 = arith.constant 0 : index
    %c0_7 = arith.constant 0 : index
    %8 = vector.load %arg7[%c0_5, %c0_6, %c0_7] : memref<1x1x192xf32, #tpu.memory_space<vmem>>, vector<1x1x192xf32>
    %9 = vector.shape_cast %8 : vector<1x1x192xf32> to vector<1x192xf32>
    %10 = vector.broadcast %9 : vector<1x192xf32> to vector<16x192xf32>
    %11 = arith.addf %7, %10 : vector<16x192xf32>
    %12 = vector.extract_strided_slice %11 {offsets = [0, 0], sizes = [16, 16], strides = [1, 1]} : vector<16x192xf32> to vector<16x16xf32>
    %13 = vector.shape_cast %12 : vector<16x16xf32> to vector<2x8x16xf32>
    %14 = vector.extract_strided_slice %11 {offsets = [0, 16], sizes = [16, 16], strides = [1, 1]} : vector<16x192xf32> to vector<16x16xf32>
    %15 = vector.shape_cast %14 : vector<16x16xf32> to vector<2x8x16xf32>
    %16 = vector.extract_strided_slice %11 {offsets = [0, 32], sizes = [16, 16], strides = [1, 1]} : vector<16x192xf32> to vector<16x16xf32>
    %17 = vector.shape_cast %16 : vector<16x16xf32> to vector<2x8x16xf32>
    %18 = vector.extract_strided_slice %11 {offsets = [0, 48], sizes = [16, 16], strides = [1, 1]} : vector<16x192xf32> to vector<16x16xf32>
    %19 = vector.shape_cast %18 : vector<16x16xf32> to vector<2x8x16xf32>
    %20 = tpu.concatenate %13, %15, %17, %19 in 0 : vector<2x8x16xf32>, vector<2x8x16xf32>, vector<2x8x16xf32>, vector<2x8x16xf32> -> vector<8x8x16xf32>
    %21 = vector.extract_strided_slice %11 {offsets = [0, 64], sizes = [16, 16], strides = [1, 1]} : vector<16x192xf32> to vector<16x16xf32>
    %22 = vector.shape_cast %21 : vector<16x16xf32> to vector<2x8x16xf32>
    %23 = vector.extract_strided_slice %11 {offsets = [0, 80], sizes = [16, 16], strides = [1, 1]} : vector<16x192xf32> to vector<16x16xf32>
    %24 = vector.shape_cast %23 : vector<16x16xf32> to vector<2x8x16xf32>
    %25 = vector.extract_strided_slice %11 {offsets = [0, 96], sizes = [16, 16], strides = [1, 1]} : vector<16x192xf32> to vector<16x16xf32>
    %26 = vector.shape_cast %25 : vector<16x16xf32> to vector<2x8x16xf32>
    %27 = vector.extract_strided_slice %11 {offsets = [0, 112], sizes = [16, 16], strides = [1, 1]} : vector<16x192xf32> to vector<16x16xf32>
    %28 = vector.shape_cast %27 : vector<16x16xf32> to vector<2x8x16xf32>
    %29 = tpu.concatenate %22, %24, %26, %28 in 0 : vector<2x8x16xf32>, vector<2x8x16xf32>, vector<2x8x16xf32>, vector<2x8x16xf32> -> vector<8x8x16xf32>
    %30 = vector.extract_strided_slice %11 {offsets = [0, 128], sizes = [16, 16], strides = [1, 1]} : vector<16x192xf32> to vector<16x16xf32>
    %31 = vector.shape_cast %30 : vector<16x16xf32> to vector<2x8x16xf32>
    %32 = vector.extract_strided_slice %11 {offsets = [0, 144], sizes = [16, 16], strides = [1, 1]} : vector<16x192xf32> to vector<16x16xf32>
    %33 = vector.shape_cast %32 : vector<16x16xf32> to vector<2x8x16xf32>
    %34 = vector.extract_strided_slice %11 {offsets = [0, 160], sizes = [16, 16], strides = [1, 1]} : vector<16x192xf32> to vector<16x16xf32>
    %35 = vector.shape_cast %34 : vector<16x16xf32> to vector<2x8x16xf32>
    %36 = vector.extract_strided_slice %11 {offsets = [0, 176], sizes = [16, 16], strides = [1, 1]} : vector<16x192xf32> to vector<16x16xf32>
    %37 = vector.shape_cast %36 : vector<16x16xf32> to vector<2x8x16xf32>
    %38 = tpu.concatenate %31, %33, %35, %37 in 0 : vector<2x8x16xf32>, vector<2x8x16xf32>, vector<2x8x16xf32>, vector<2x8x16xf32> -> vector<8x8x16xf32>
    %39 = arith.truncf %20 : vector<8x8x16xf32> to vector<8x8x16xbf16>
    %40 = arith.truncf %29 : vector<8x8x16xf32> to vector<8x8x16xbf16>
    "tpu.trace_start"() <{level = 10 : i32, message = "bqd,bkd->bqk"}> : () -> ()
    %cst_8 = arith.constant dense<0.000000e+00> : vector<8x8x8xf32>
    %41 = tpu.matmul %39, %40, %cst_8 {dimension_numbers = #tpu.dot_dimension_numbers<[2], [2], [1], [1], [0, 0, 0, 1, 1, 1], [0], [0]>} : vector<8x8x16xbf16>, vector<8x8x16xbf16>, vector<8x8x8xf32> -> vector<8x8x8xf32>
    "tpu.trace_stop"() : () -> ()
    %cst_9 = arith.constant dense<0xFF800000> : vector<8x8xf32>
    %42 = vector.multi_reduction <maximumf>, %41, %cst_9 [2] : vector<8x8x8xf32> to vector<8x8xf32>
    %43 = vector.shape_cast %42 : vector<8x8xf32> to vector<8x8x1xf32>
    %44 = vector.broadcast %43 : vector<8x8x1xf32> to vector<8x8x8xf32>
    %45 = arith.subf %41, %44 : vector<8x8x8xf32>
    %46 = math.exp %45 : vector<8x8x8xf32>
    %cst_10 = arith.constant dense<0.000000e+00> : vector<8x8xf32>
    %47 = vector.multi_reduction <add>, %46, %cst_10 [2] : vector<8x8x8xf32> to vector<8x8xf32>
    %48 = vector.shape_cast %47 : vector<8x8xf32> to vector<8x8x1xf32>
    %49 = tpu.reciprocal %48 {approx = true} : vector<8x8x1xf32> -> vector<8x8x1xf32>
    %50 = vector.broadcast %49 : vector<8x8x1xf32> to vector<8x8x8xf32>
    %51 = arith.mulf %46, %50 : vector<8x8x8xf32>
    %52 = arith.truncf %51 : vector<8x8x8xf32> to vector<8x8x8xbf16>
    %53 = arith.truncf %38 : vector<8x8x16xf32> to vector<8x8x16xbf16>
    "tpu.trace_start"() <{level = 10 : i32, message = "bqk,bkd->bqd"}> : () -> ()
    %cst_11 = arith.constant dense<0.000000e+00> : vector<8x8x16xf32>
    %54 = tpu.matmul %52, %53, %cst_11 {dimension_numbers = #tpu.dot_dimension_numbers<[2], [1], [1], [2], [0, 0, 0, 1, 1, 2], [0], [0]>} : vector<8x8x8xbf16>, vector<8x8x16xbf16>, vector<8x8x16xf32> -> vector<8x8x16xf32>
    "tpu.trace_stop"() : () -> ()
    %55 = vector.extract_strided_slice %54 {offsets = [0, 0, 0], sizes = [2, 8, 16], strides = [1, 1, 1]} : vector<8x8x16xf32> to vector<2x8x16xf32>
    %56 = vector.shape_cast %55 : vector<2x8x16xf32> to vector<16x16xf32>
    %57 = vector.extract_strided_slice %54 {offsets = [2, 0, 0], sizes = [2, 8, 16], strides = [1, 1, 1]} : vector<8x8x16xf32> to vector<2x8x16xf32>
    %58 = vector.shape_cast %57 : vector<2x8x16xf32> to vector<16x16xf32>
    %59 = vector.extract_strided_slice %54 {offsets = [4, 0, 0], sizes = [2, 8, 16], strides = [1, 1, 1]} : vector<8x8x16xf32> to vector<2x8x16xf32>
    %60 = vector.shape_cast %59 : vector<2x8x16xf32> to vector<16x16xf32>
    %61 = vector.extract_strided_slice %54 {offsets = [6, 0, 0], sizes = [2, 8, 16], strides = [1, 1, 1]} : vector<8x8x16xf32> to vector<2x8x16xf32>
    %62 = vector.shape_cast %61 : vector<2x8x16xf32> to vector<16x16xf32>
    %63 = tpu.concatenate %56, %58, %60, %62 in 1 : vector<16x16xf32>, vector<16x16xf32>, vector<16x16xf32>, vector<16x16xf32> -> vector<16x64xf32>
    %c0_12 = arith.constant 0 : index
    %c0_13 = arith.constant 0 : index
    %c0_14 = arith.constant 0 : index
    %64 = vector.load %arg8[%c0_12, %c0_13, %c0_14] : memref<1x64x64xbf16, #tpu.memory_space<vmem>>, vector<1x64x64xbf16>
    %65 = vector.shape_cast %64 : vector<1x64x64xbf16> to vector<64x64xbf16>
    %66 = arith.truncf %63 : vector<16x64xf32> to vector<16x64xbf16>
    %cst_15 = arith.constant dense<0.000000e+00> : vector<16x64xf32>
    %67 = tpu.matmul %66, %65, %cst_15 {dimension_numbers = #tpu.dot_dimension_numbers<[1], [0], [0], [1], [0, 0, 1, 1], [], []>} : vector<16x64xbf16>, vector<64x64xbf16>, vector<16x64xf32> -> vector<16x64xf32>
    %c0_16 = arith.constant 0 : index
    %c0_17 = arith.constant 0 : index
    %c0_18 = arith.constant 0 : index
    %68 = vector.load %arg9[%c0_16, %c0_17, %c0_18] : memref<1x1x64xf32, #tpu.memory_space<vmem>>, vector<1x1x64xf32>
    %69 = vector.shape_cast %68 : vector<1x1x64xf32> to vector<1x64xf32>
    %70 = vector.broadcast %69 : vector<1x64xf32> to vector<16x64xf32>
    %71 = arith.addf %67, %70 : vector<16x64xf32>
    %72 = arith.addf %3, %71 : vector<16x64xf32>
    %c0_19 = arith.constant 0 : index
    %c0_20 = arith.constant 0 : index
    %c0_21 = arith.constant 0 : index
    %73 = vector.load %arg10[%c0_19, %c0_20, %c0_21] : memref<1x1x64xf32, #tpu.memory_space<vmem>>, vector<1x1x64xf32>
    %74 = vector.shape_cast %73 : vector<1x1x64xf32> to vector<1x64xf32>
    %c0_22 = arith.constant 0 : index
    %c0_23 = arith.constant 0 : index
    %c0_24 = arith.constant 0 : index
    %75 = vector.load %arg11[%c0_22, %c0_23, %c0_24] : memref<1x1x64xf32, #tpu.memory_space<vmem>>, vector<1x1x64xf32>
    %76 = vector.shape_cast %75 : vector<1x1x64xf32> to vector<1x64xf32>
    %cst_25 = arith.constant dense<0.000000e+00> : vector<16xf32>
    %77 = vector.multi_reduction <add>, %72, %cst_25 [1] : vector<16x64xf32> to vector<16xf32>
    %78 = vector.shape_cast %77 : vector<16xf32> to vector<16x1xf32>
    %cst_26 = arith.constant 6.400000e+01 : f32
    %79 = vector.broadcast %cst_26 : f32 to vector<16x1xf32>
    %80 = arith.divf %78, %79 : vector<16x1xf32>
    %81 = vector.broadcast %80 : vector<16x1xf32> to vector<16x64xf32>
    %82 = arith.subf %72, %81 : vector<16x64xf32>
    %83 = arith.mulf %82, %82 : vector<16x64xf32>
    %cst_27 = arith.constant dense<0.000000e+00> : vector<16xf32>
    %84 = vector.multi_reduction <add>, %83, %cst_27 [1] : vector<16x64xf32> to vector<16xf32>
    %85 = vector.shape_cast %84 : vector<16xf32> to vector<16x1xf32>
    %cst_28 = arith.constant 6.400000e+01 : f32
    %86 = vector.broadcast %cst_28 : f32 to vector<16x1xf32>
    %87 = arith.divf %85, %86 : vector<16x1xf32>
    %88 = vector.broadcast %80 : vector<16x1xf32> to vector<16x64xf32>
    %89 = arith.subf %72, %88 : vector<16x64xf32>
    %cst_29 = arith.constant 9.99999974E-6 : f32
    %90 = vector.broadcast %cst_29 : f32 to vector<16x1xf32>
    %91 = arith.addf %87, %90 : vector<16x1xf32>
    %92 = math.rsqrt %91 : vector<16x1xf32>
    %93 = vector.broadcast %92 : vector<16x1xf32> to vector<16x64xf32>
    %94 = arith.mulf %89, %93 : vector<16x64xf32>
    %95 = vector.broadcast %74 : vector<1x64xf32> to vector<16x64xf32>
    %96 = arith.mulf %94, %95 : vector<16x64xf32>
    %97 = vector.broadcast %76 : vector<1x64xf32> to vector<16x64xf32>
    %98 = arith.addf %96, %97 : vector<16x64xf32>
    %c0_30 = arith.constant 0 : index
    %c0_31 = arith.constant 0 : index
    %c0_32 = arith.constant 0 : index
    %99 = vector.load %arg12[%c0_30, %c0_31, %c0_32] : memref<1x64x2048xbf16, #tpu.memory_space<vmem>>, vector<1x64x2048xbf16>
    %100 = vector.shape_cast %99 : vector<1x64x2048xbf16> to vector<64x2048xbf16>
    %101 = arith.truncf %98 : vector<16x64xf32> to vector<16x64xbf16>
    %cst_33 = arith.constant dense<0.000000e+00> : vector<16x2048xf32>
    %102 = tpu.matmul %101, %100, %cst_33 {dimension_numbers = #tpu.dot_dimension_numbers<[1], [0], [0], [1], [0, 0, 1, 1], [], []>} : vector<16x64xbf16>, vector<64x2048xbf16>, vector<16x2048xf32> -> vector<16x2048xf32>
    %c0_34 = arith.constant 0 : index
    %c0_35 = arith.constant 0 : index
    %c0_36 = arith.constant 0 : index
    %103 = vector.load %arg13[%c0_34, %c0_35, %c0_36] : memref<1x1x2048xf32, #tpu.memory_space<vmem>>, vector<1x1x2048xf32>
    %104 = vector.shape_cast %103 : vector<1x1x2048xf32> to vector<1x2048xf32>
    %105 = vector.broadcast %104 : vector<1x2048xf32> to vector<16x2048xf32>
    %106 = arith.addf %102, %105 : vector<16x2048xf32>
    %cst_37 = arith.constant 0.000000e+00 : f32
    %107 = vector.broadcast %cst_37 : f32 to vector<16x2048xf32>
    %108 = arith.maximumf %106, %107 : vector<16x2048xf32>
    %c0_38 = arith.constant 0 : index
    %c0_39 = arith.constant 0 : index
    %c0_40 = arith.constant 0 : index
    %109 = vector.load %arg14[%c0_38, %c0_39, %c0_40] : memref<1x2048x64xbf16, #tpu.memory_space<vmem>>, vector<1x2048x64xbf16>
    %110 = vector.shape_cast %109 : vector<1x2048x64xbf16> to vector<2048x64xbf16>
    %111 = arith.truncf %108 : vector<16x2048xf32> to vector<16x2048xbf16>
    %cst_41 = arith.constant dense<0.000000e+00> : vector<16x64xf32>
    %112 = tpu.matmul %111, %110, %cst_41 {dimension_numbers = #tpu.dot_dimension_numbers<[1], [0], [0], [1], [0, 0, 1, 1], [], []>} : vector<16x2048xbf16>, vector<2048x64xbf16>, vector<16x64xf32> -> vector<16x64xf32>
    %c0_42 = arith.constant 0 : index
    %c0_43 = arith.constant 0 : index
    %c0_44 = arith.constant 0 : index
    %113 = vector.load %arg15[%c0_42, %c0_43, %c0_44] : memref<1x1x64xf32, #tpu.memory_space<vmem>>, vector<1x1x64xf32>
    %114 = vector.shape_cast %113 : vector<1x1x64xf32> to vector<1x64xf32>
    %115 = vector.broadcast %114 : vector<1x64xf32> to vector<16x64xf32>
    %116 = arith.addf %112, %115 : vector<16x64xf32>
    %117 = arith.addf %98, %116 : vector<16x64xf32>
    %c0_45 = arith.constant 0 : index
    %c0_46 = arith.constant 0 : index
    %c0_47 = arith.constant 0 : index
    %118 = vector.load %arg16[%c0_45, %c0_46, %c0_47] : memref<1x1x64xf32, #tpu.memory_space<vmem>>, vector<1x1x64xf32>
    %119 = vector.shape_cast %118 : vector<1x1x64xf32> to vector<1x64xf32>
    %c0_48 = arith.constant 0 : index
    %c0_49 = arith.constant 0 : index
    %c0_50 = arith.constant 0 : index
    %120 = vector.load %arg17[%c0_48, %c0_49, %c0_50] : memref<1x1x64xf32, #tpu.memory_space<vmem>>, vector<1x1x64xf32>
    %121 = vector.shape_cast %120 : vector<1x1x64xf32> to vector<1x64xf32>
    %cst_51 = arith.constant dense<0.000000e+00> : vector<16xf32>
    %122 = vector.multi_reduction <add>, %117, %cst_51 [1] : vector<16x64xf32> to vector<16xf32>
    %123 = vector.shape_cast %122 : vector<16xf32> to vector<16x1xf32>
    %cst_52 = arith.constant 6.400000e+01 : f32
    %124 = vector.broadcast %cst_52 : f32 to vector<16x1xf32>
    %125 = arith.divf %123, %124 : vector<16x1xf32>
    %126 = vector.broadcast %125 : vector<16x1xf32> to vector<16x64xf32>
    %127 = arith.subf %117, %126 : vector<16x64xf32>
    %128 = arith.mulf %127, %127 : vector<16x64xf32>
    %cst_53 = arith.constant dense<0.000000e+00> : vector<16xf32>
    %129 = vector.multi_reduction <add>, %128, %cst_53 [1] : vector<16x64xf32> to vector<16xf32>
    %130 = vector.shape_cast %129 : vector<16xf32> to vector<16x1xf32>
    %cst_54 = arith.constant 6.400000e+01 : f32
    %131 = vector.broadcast %cst_54 : f32 to vector<16x1xf32>
    %132 = arith.divf %130, %131 : vector<16x1xf32>
    %133 = vector.broadcast %125 : vector<16x1xf32> to vector<16x64xf32>
    %134 = arith.subf %117, %133 : vector<16x64xf32>
    %cst_55 = arith.constant 9.99999974E-6 : f32
    %135 = vector.broadcast %cst_55 : f32 to vector<16x1xf32>
    %136 = arith.addf %132, %135 : vector<16x1xf32>
    %137 = math.rsqrt %136 : vector<16x1xf32>
    %138 = vector.broadcast %137 : vector<16x1xf32> to vector<16x64xf32>
    %139 = arith.mulf %134, %138 : vector<16x64xf32>
    %140 = vector.broadcast %119 : vector<1x64xf32> to vector<16x64xf32>
    %141 = arith.mulf %139, %140 : vector<16x64xf32>
    %142 = vector.broadcast %121 : vector<1x64xf32> to vector<16x64xf32>
    %143 = arith.addf %141, %142 : vector<16x64xf32>
    %c0_56 = arith.constant 0 : index
    %c0_57 = arith.constant 0 : index
    %144 = vector.load %arg19[%c0_56, %c0_57] : memref<16x64xf32, #tpu.memory_space<vmem>>, vector<16x64xf32>
    tpu.vector_store %arg19[%c0_56, %c0_57], %143 {strides = array<i32>} : memref<16x64xf32, #tpu.memory_space<vmem>>, vector<16x64xf32>,
    %c1_i32 = arith.constant 1 : i32
    %145 = arith.cmpi eq, %arg0, %c1_i32 : i32
    %146 = arith.extui %145 : i1 to i32
    %c0_i32_58 = arith.constant 0 : i32
    %147 = arith.cmpi ne, %146, %c0_i32_58 : i32
    scf.if %147 {
      %148 = vector.extract_strided_slice %143 {offsets = [7, 0], sizes = [1, 64], strides = [1, 1]} : vector<16x64xf32> to vector<1x64xf32>
      %149 = vector.extract_strided_slice %143 {offsets = [15, 0], sizes = [1, 64], strides = [1, 1]} : vector<16x64xf32> to vector<1x64xf32>
      %150 = tpu.concatenate %148, %149 in 0 : vector<1x64xf32>, vector<1x64xf32> -> vector<2x64xf32>
      %c0_59 = arith.constant 0 : index
      %c0_60 = arith.constant 0 : index
      %151 = vector.load %arg4[%c0_59, %c0_60] : memref<64x7xbf16, #tpu.memory_space<vmem>>, vector<64x7xbf16>
      %152 = arith.truncf %150 : vector<2x64xf32> to vector<2x64xbf16>
      %cst_61 = arith.constant dense<0.000000e+00> : vector<2x7xf32>
      %153 = tpu.matmul %152, %151, %cst_61 {dimension_numbers = #tpu.dot_dimension_numbers<[1], [0], [0], [1], [0, 0, 1, 1], [], []>} : vector<2x64xbf16>, vector<64x7xbf16>, vector<2x7xf32> -> vector<2x7xf32>
      %c0_62 = arith.constant 0 : index
      %c0_63 = arith.constant 0 : index
      %154 = vector.load %arg5[%c0_62, %c0_63] : memref<1x7xf32, #tpu.memory_space<vmem>>, vector<1x7xf32>
      %155 = vector.broadcast %154 : vector<1x7xf32> to vector<2x7xf32>
      %156 = arith.addf %153, %155 : vector<2x7xf32>
      %c0_64 = arith.constant 0 : index
      %c0_65 = arith.constant 0 : index
      %157 = vector.load %arg18[%c0_64, %c0_65] : memref<2x7xf32, #tpu.memory_space<vmem>>, vector<2x7xf32>
      tpu.vector_store %arg18[%c0_64, %c0_65], %156 {strides = array<i32>} : memref<2x7xf32, #tpu.memory_space<vmem>>, vector<2x7xf32>,
    } else {
    }
    return
  }
  func.func @transform_0(%arg0: i32) -> (i32, i32) {
    %c0_i32 = arith.constant 0 : i32
    %c0_i32_0 = arith.constant 0 : i32
    %c0_i32_1 = arith.constant 0 : i32
    return %c0_i32, %c0_i32_0 : i32, i32
  }
  func.func @transform_1(%arg0: i32) -> (i32, i32) {
    %c0_i32 = arith.constant 0 : i32
    %c0_i32_0 = arith.constant 0 : i32
    %c0_i32_1 = arith.constant 0 : i32
    return %c0_i32, %c0_i32_0 : i32, i32
  }
  func.func @transform_2(%arg0: i32) -> (i32, i32) {
    %c0_i32 = arith.constant 0 : i32
    %c0_i32_0 = arith.constant 0 : i32
    %c0_i32_1 = arith.constant 0 : i32
    return %c0_i32, %c0_i32_0 : i32, i32
  }
  func.func @transform_3(%arg0: i32) -> (i32, i32) {
    %c0_i32 = arith.constant 0 : i32
    %c0_i32_0 = arith.constant 0 : i32
    %c0_i32_1 = arith.constant 0 : i32
    return %c0_i32, %c0_i32_0 : i32, i32
  }
  func.func @transform_4(%arg0: i32) -> (i32, i32) {
    %c0_i32 = arith.constant 0 : i32
    %c0_i32_0 = arith.constant 0 : i32
    %c0_i32_1 = arith.constant 0 : i32
    return %c0_i32, %c0_i32_0 : i32, i32
  }
  func.func @transform_5(%arg0: i32) -> (i32, i32, i32) {
    %c0_i32 = arith.constant 0 : i32
    %c0_i32_0 = arith.constant 0 : i32
    %c0_i32_1 = arith.constant 0 : i32
    return %arg0, %c0_i32, %c0_i32_0 : i32, i32, i32
  }
  func.func @transform_6(%arg0: i32) -> (i32, i32, i32) {
    %c0_i32 = arith.constant 0 : i32
    %c0_i32_0 = arith.constant 0 : i32
    %c0_i32_1 = arith.constant 0 : i32
    return %arg0, %c0_i32, %c0_i32_0 : i32, i32, i32
  }
  func.func @transform_7(%arg0: i32) -> (i32, i32, i32) {
    %c0_i32 = arith.constant 0 : i32
    %c0_i32_0 = arith.constant 0 : i32
    %c0_i32_1 = arith.constant 0 : i32
    return %arg0, %c0_i32, %c0_i32_0 : i32, i32, i32
  }
  func.func @transform_8(%arg0: i32) -> (i32, i32, i32) {
    %c0_i32 = arith.constant 0 : i32
    %c0_i32_0 = arith.constant 0 : i32
    %c0_i32_1 = arith.constant 0 : i32
    return %arg0, %c0_i32, %c0_i32_0 : i32, i32, i32
  }
  func.func @transform_9(%arg0: i32) -> (i32, i32, i32) {
    %c0_i32 = arith.constant 0 : i32
    %c0_i32_0 = arith.constant 0 : i32
    %c0_i32_1 = arith.constant 0 : i32
    return %arg0, %c0_i32, %c0_i32_0 : i32, i32, i32
  }
  func.func @transform_10(%arg0: i32) -> (i32, i32, i32) {
    %c0_i32 = arith.constant 0 : i32
    %c0_i32_0 = arith.constant 0 : i32
    %c0_i32_1 = arith.constant 0 : i32
    return %arg0, %c0_i32, %c0_i32_0 : i32, i32, i32
  }
  func.func @transform_11(%arg0: i32) -> (i32, i32, i32) {
    %c0_i32 = arith.constant 0 : i32
    %c0_i32_0 = arith.constant 0 : i32
    %c0_i32_1 = arith.constant 0 : i32
    return %arg0, %c0_i32, %c0_i32_0 : i32, i32, i32
  }
  func.func @transform_12(%arg0: i32) -> (i32, i32, i32) {
    %c0_i32 = arith.constant 0 : i32
    %c0_i32_0 = arith.constant 0 : i32
    %c0_i32_1 = arith.constant 0 : i32
    return %arg0, %c0_i32, %c0_i32_0 : i32, i32, i32
  }
  func.func @transform_13(%arg0: i32) -> (i32, i32, i32) {
    %c0_i32 = arith.constant 0 : i32
    %c0_i32_0 = arith.constant 0 : i32
    %c0_i32_1 = arith.constant 0 : i32
    return %arg0, %c0_i32, %c0_i32_0 : i32, i32, i32
  }
  func.func @transform_14(%arg0: i32) -> (i32, i32, i32) {
    %c0_i32 = arith.constant 0 : i32
    %c0_i32_0 = arith.constant 0 : i32
    %c0_i32_1 = arith.constant 0 : i32
    return %arg0, %c0_i32, %c0_i32_0 : i32, i32, i32
  }
  func.func @transform_15(%arg0: i32) -> (i32, i32, i32) {
    %c0_i32 = arith.constant 0 : i32
    %c0_i32_0 = arith.constant 0 : i32
    %c0_i32_1 = arith.constant 0 : i32
    return %arg0, %c0_i32, %c0_i32_0 : i32, i32, i32
  }
  func.func @transform_16(%arg0: i32) -> (i32, i32, i32) {
    %c0_i32 = arith.constant 0 : i32
    %c0_i32_0 = arith.constant 0 : i32
    %c0_i32_1 = arith.constant 0 : i32
    return %arg0, %c0_i32, %c0_i32_0 : i32, i32, i32
  }
  func.func @transform_17(%arg0: i32) -> (i32, i32) {
    %c0_i32 = arith.constant 0 : i32
    %c0_i32_0 = arith.constant 0 : i32
    %c0_i32_1 = arith.constant 0 : i32
    return %c0_i32, %c0_i32_0 : i32, i32
  }
}

</mosaic_0001>

<llo_original>
// kernel: transformer_forward.1
$region0: #{transformer_forward.1}
  #allocation0 [shape = 'u32[]', space=smem, size = 0x4, offset = 0x4, fixed_abs, tag = 'smem constant byte address 0x4 - core index']
  #allocation1 [shape = 'u32[72,128]{1,0:T(1,128)}', space=vmem, size = 0x9000, scoped, tag = 'internal scratch']
  #allocation2 [shape = 'f32[16,64]{1,0:T(8,128)}', space=vmem, size = 0x2000, scoped, tag = 'scratch operand']
  %s0 = inlined_call_operand.vmem [shape: f32[16,16], index: 0, kind: input, shape index: {}]
  %s1 = inlined_call_operand.vmem [shape: bf16[16,64], index: 1, kind: input, shape index: {}]
  %s2 = inlined_call_operand.vmem [shape: f32[1,64], index: 2, kind: input, shape index: {}]
  %s3 = inlined_call_operand.vmem [shape: bf16[64,7], index: 3, kind: input, shape index: {}]
  %s4 = inlined_call_operand.vmem [shape: f32[1,7], index: 4, kind: input, shape index: {}]
  %s5 = inlined_call_operand.vmem [shape: bf16[2,64,192], index: 5, kind: input, shape index: {}]
  %s6 = inlined_call_operand.vmem [shape: f32[2,1,192], index: 6, kind: input, shape index: {}]
  %s7 = inlined_call_operand.vmem [shape: bf16[2,64,64], index: 7, kind: input, shape index: {}]
  %s8 = inlined_call_operand.vmem [shape: f32[2,1,64], index: 8, kind: input, shape index: {}]
  %s9 = inlined_call_operand.vmem [shape: f32[2,1,64], index: 9, kind: input, shape index: {}]
  %s10 = inlined_call_operand.vmem [shape: f32[2,1,64], index: 10, kind: input, shape index: {}]
  %s11 = inlined_call_operand.vmem [shape: bf16[2,64,2048], index: 11, kind: input, shape index: {}]
  %s12 = inlined_call_operand.vmem [shape: f32[2,1,2048], index: 12, kind: input, shape index: {}]
  %s13 = inlined_call_operand.vmem [shape: bf16[2,2048,64], index: 13, kind: input, shape index: {}]
  %s14 = inlined_call_operand.vmem [shape: f32[2,1,64], index: 14, kind: input, shape index: {}]
  %s15 = inlined_call_operand.vmem [shape: f32[2,1,64], index: 15, kind: input, shape index: {}]
  %s16 = inlined_call_operand.vmem [shape: f32[2,1,64], index: 16, kind: input, shape index: {}]
  %s17 = inlined_call_operand.hbm [shape: f32[2,7], index: 17, kind: output, shape index: {}]
  %s18 = sld [smem:[#allocation0]]
  $region109: #{transformer_forward.1} parent=0
    _
  %s20 = ssub.s32 1, %s18
  %s21 = scalar_select 0, %s20, %s18
  $region1: #{transformer_forward.1} parent=0
    #allocation3 [shape = 'u8[1024]{0}', space=vmem, size = 0x400, scoped, tag = 'output window, operand 0, single buffered']
    #allocation4 [shape = 's32[2]{0}', space=sflag, size = 0x8, scoped, tag = 'scoped memory for transformer_forward.1']
    %22 = vsyncpa [#allocation4], 0
    loop: start=0, step=1, limit=4
    $region2: #{transformer_forward.1} parent=1 // loop_pre_header
      _
    $region3: #{transformer_forward.1} parent=1 // loop_header
      %s24 = sphi 0, %s28
      %p25 = scmp.ge.s32.totalorder %s24, 4
      %s32 = sphi 0, %s32
      %s34 = sphi 0, %s32
      %s35 = sphi 0, %s34
      %s49 = sphi 0, %s35
      %s53 = sphi 0, %s53
      %s55 = sphi 0, %s53
      %s56 = sphi 0, %s55
      %s70 = sphi 0, %s56
      %s74 = sphi 0, %s74
      %s76 = sphi 0, %s74
      %s77 = sphi 0, %s76
      %s91 = sphi 0, %s77
      %s95 = sphi 0, %s95
      %s97 = sphi 0, %s95
      %s98 = sphi 0, %s97
      %s112 = sphi 0, %s98
      %s116 = sphi 0, %s116
      %s118 = sphi 0, %s116
      %s119 = sphi 0, %s118
      %s133 = sphi 0, %s119
      %s139 = sphi 0, %s141
      %s142 = sphi 0, %s139
      %s143 = sphi 0, %s142
      %s159 = sphi 0, %s143
      %s165 = sphi 0, %s167
      %s168 = sphi 0, %s165
      %s169 = sphi 0, %s168
      %s185 = sphi 0, %s169
      %s191 = sphi 0, %s193
      %s194 = sphi 0, %s191
      %s195 = sphi 0, %s194
      %s211 = sphi 0, %s195
      %s217 = sphi 0, %s219
      %s220 = sphi 0, %s217
      %s221 = sphi 0, %s220
      %s237 = sphi 0, %s221
      %s243 = sphi 0, %s245
      %s246 = sphi 0, %s243
      %s247 = sphi 0, %s246
      %s263 = sphi 0, %s247
      %s269 = sphi 0, %s271
      %s272 = sphi 0, %s269
      %s273 = sphi 0, %s272
      %s289 = sphi 0, %s273
      %s295 = sphi 0, %s297
      %s298 = sphi 0, %s295
      %s299 = sphi 0, %s298
      %s315 = sphi 0, %s299
      %s321 = sphi 0, %s323
      %s324 = sphi 0, %s321
      %s325 = sphi 0, %s324
      %s341 = sphi 0, %s325
      %s347 = sphi 0, %s349
      %s350 = sphi 0, %s347
      %s351 = sphi 0, %s350
      %s367 = sphi 0, %s351
      %s373 = sphi 0, %s375
      %s376 = sphi 0, %s373
      %s377 = sphi 0, %s376
      %s393 = sphi 0, %s377
      %s399 = sphi 0, %s401
      %s402 = sphi 0, %s399
      %s403 = sphi 0, %s402
      %s419 = sphi 0, %s403
      %s425 = sphi 0, %s427
      %s428 = sphi 0, %s425
      %s429 = sphi 0, %s428
      %s445 = sphi 0, %s429
      %s449 = sphi 0, %s449
      %s451 = sphi 0, %s449
      %s452 = sphi 0, %s451
      %s466 = sphi 0, %s452
    $region4: #{transformer_forward.1} parent=1 // loop_header_branch
      %27 = sbr.rel (%p25) target = $region8
    $region5: #{transformer_forward.1} parent=1 // loop_body
      %s29 = ssub.s32 %s24, 1
      %s30 = ssub.s32 %s24, 2
      %s31 = sadd.s32 %s24, 1
      %s33 = sadd.s32 %s32, 1
      %p36 = scmp.eq.s32.totalorder %s24, 1
      %p37 = scmp.ne.s32.totalorder %s32, %s34
      %p38 = scmp.eq.s32.totalorder %s24, 0
      %p39 = por %p37, %p38
      %p40 = scmp.ne.s32.totalorder %s32, %s34
      %p41 = scmp.eq.s32.totalorder %s29, 1
      %p42 = por %p40, %p41
      %p43 = scmp.ne.s32.totalorder %s34, %s35
      %p44 = scmp.eq.s32.totalorder %s29, 0
      %p45 = por %p43, %p44
      %p46 = scmp.ne.s32.totalorder %s34, %s35
      %p47 = scmp.eq.s32.totalorder %s30, 1
      %p48 = por %p46, %p47
      %p50 = scmp.ne.s32.totalorder %s35, %s49
      %p51 = scmp.eq.s32.totalorder %s30, 0
      %p52 = por %p50, %p51
      %s54 = sadd.s32 %s53, 1
      %p57 = scmp.eq.s32.totalorder %s24, 1
      %p58 = scmp.ne.s32.totalorder %s53, %s55
      %p59 = scmp.eq.s32.totalorder %s24, 0
      %p60 = por %p58, %p59
      %p61 = scmp.ne.s32.totalorder %s53, %s55
      %p62 = scmp.eq.s32.totalorder %s29, 1
      %p63 = por %p61, %p62
      %p64 = scmp.ne.s32.totalorder %s55, %s56
      %p65 = scmp.eq.s32.totalorder %s29, 0
      %p66 = por %p64, %p65
      %p67 = scmp.ne.s32.totalorder %s55, %s56
      %p68 = scmp.eq.s32.totalorder %s30, 1
      %p69 = por %p67, %p68
      %p71 = scmp.ne.s32.totalorder %s56, %s70
      %p72 = scmp.eq.s32.totalorder %s30, 0
      %p73 = por %p71, %p72
      %s75 = sadd.s32 %s74, 1
      %p78 = scmp.eq.s32.totalorder %s24, 1
      %p79 = scmp.ne.s32.totalorder %s74, %s76
      %p80 = scmp.eq.s32.totalorder %s24, 0
      %p81 = por %p79, %p80
      %p82 = scmp.ne.s32.totalorder %s74, %s76
      %p83 = scmp.eq.s32.totalorder %s29, 1
      %p84 = por %p82, %p83
      %p85 = scmp.ne.s32.totalorder %s76, %s77
      %p86 = scmp.eq.s32.totalorder %s29, 0
      %p87 = por %p85, %p86
      %p88 = scmp.ne.s32.totalorder %s76, %s77
      %p89 = scmp.eq.s32.totalorder %s30, 1
      %p90 = por %p88, %p89
      %p92 = scmp.ne.s32.totalorder %s77, %s91
      %p93 = scmp.eq.s32.totalorder %s30, 0
      %p94 = por %p92, %p93
      %s96 = sadd.s32 %s95, 1
      %p99 = scmp.eq.s32.totalorder %s24, 1
      %p100 = scmp.ne.s32.totalorder %s95, %s97
      %p101 = scmp.eq.s32.totalorder %s24, 0
      %p102 = por %p100, %p101
      %p103 = scmp.ne.s32.totalorder %s95, %s97
      %p104 = scmp.eq.s32.totalorder %s29, 1
      %p105 = por %p103, %p104
      %p106 = scmp.ne.s32.totalorder %s97, %s98
      %p107 = scmp.eq.s32.totalorder %s29, 0
      %p108 = por %p106, %p107
      %p109 = scmp.ne.s32.totalorder %s97, %s98
      %p110 = scmp.eq.s32.totalorder %s30, 1
      %p111 = por %p109, %p110
      %p113 = scmp.ne.s32.totalorder %s98, %s112
      %p114 = scmp.eq.s32.totalorder %s30, 0
      %p115 = por %p113, %p114
      %s117 = sadd.s32 %s116, 1
      %p120 = scmp.eq.s32.totalorder %s24, 1
      %p121 = scmp.ne.s32.totalorder %s116, %s118
      %p122 = scmp.eq.s32.totalorder %s24, 0
      %p123 = por %p121, %p122
      %p124 = scmp.ne.s32.totalorder %s116, %s118
      %p125 = scmp.eq.s32.totalorder %s29, 1
      %p126 = por %p124, %p125
      %p127 = scmp.ne.s32.totalorder %s118, %s119
      %p128 = scmp.eq.s32.totalorder %s29, 0
      %p129 = por %p127, %p128
      %p130 = scmp.ne.s32.totalorder %s118, %s119
      %p131 = scmp.eq.s32.totalorder %s30, 1
      %p132 = por %p130, %p131
      %p134 = scmp.ne.s32.totalorder %s119, %s133
      %p135 = scmp.eq.s32.totalorder %s30, 0
      %p136 = por %p134, %p135
      %s137 = ssub.s32 %s24, %s31
      %p138 = scmp.eq.s32.totalorder %s137, 0
      %s140 = sadd.s32 %s139, 1
      %s141 = scalar_select %p138, %s139, %s140
      %p144 = pneg %p138
      %p145 = scmp.eq.s32.totalorder %s24, 1
      %p146 = por %p144, %p145
      %p147 = scmp.ne.s32.totalorder %s139, %s142
      %p148 = scmp.eq.s32.totalorder %s24, 0
      %p149 = por %p147, %p148
      %p150 = scmp.ne.s32.totalorder %s139, %s142
      %p151 = scmp.eq.s32.totalorder %s29, 1
      %p152 = por %p150, %p151
      %p153 = scmp.ne.s32.totalorder %s142, %s143
      %p154 = scmp.eq.s32.totalorder %s29, 0
      %p155 = por %p153, %p154
      %p156 = scmp.ne.s32.totalorder %s142, %s143
      %p157 = scmp.eq.s32.totalorder %s30, 1
      %p158 = por %p156, %p157
      %p160 = scmp.ne.s32.totalorder %s143, %s159
      %p161 = scmp.eq.s32.totalorder %s30, 0
      %p162 = por %p160, %p161
      %s163 = ssub.s32 %s24, %s31
      %p164 = scmp.eq.s32.totalorder %s163, 0
      %s166 = sadd.s32 %s165, 1
      %s167 = scalar_select %p164, %s165, %s166
      %p170 = pneg %p164
      %p171 = scmp.eq.s32.totalorder %s24, 1
      %p172 = por %p170, %p171
      %p173 = scmp.ne.s32.totalorder %s165, %s168
      %p174 = scmp.eq.s32.totalorder %s24, 0
      %p175 = por %p173, %p174
      %p176 = scmp.ne.s32.totalorder %s165, %s168
      %p177 = scmp.eq.s32.totalorder %s29, 1
      %p178 = por %p176, %p177
      %p179 = scmp.ne.s32.totalorder %s168, %s169
      %p180 = scmp.eq.s32.totalorder %s29, 0
      %p181 = por %p179, %p180
      %p182 = scmp.ne.s32.totalorder %s168, %s169
      %p183 = scmp.eq.s32.totalorder %s30, 1
      %p184 = por %p182, %p183
      %p186 = scmp.ne.s32.totalorder %s169, %s185
      %p187 = scmp.eq.s32.totalorder %s30, 0
      %p188 = por %p186, %p187
      %s189 = ssub.s32 %s24, %s31
      %p190 = scmp.eq.s32.totalorder %s189, 0
      %s192 = sadd.s32 %s191, 1
      %s193 = scalar_select %p190, %s191, %s192
      %p196 = pneg %p190
      %p197 = scmp.eq.s32.totalorder %s24, 1
      %p198 = por %p196, %p197
      %p199 = scmp.ne.s32.totalorder %s191, %s194
      %p200 = scmp.eq.s32.totalorder %s24, 0
      %p201 = por %p199, %p200
      %p202 = scmp.ne.s32.totalorder %s191, %s194
      %p203 = scmp.eq.s32.totalorder %s29, 1
      %p204 = por %p202, %p203
      %p205 = scmp.ne.s32.totalorder %s194, %s195
      %p206 = scmp.eq.s32.totalorder %s29, 0
      %p207 = por %p205, %p206
      %p208 = scmp.ne.s32.totalorder %s194, %s195
      %p209 = scmp.eq.s32.totalorder %s30, 1
      %p210 = por %p208, %p209
      %p212 = scmp.ne.s32.totalorder %s195, %s211
      %p213 = scmp.eq.s32.totalorder %s30, 0
      %p214 = por %p212, %p213
      %s215 = ssub.s32 %s24, %s31
      %p216 = scmp.eq.s32.totalorder %s215, 0
      %s218 = sadd.s32 %s217, 1
      %s219 = scalar_select %p216, %s217, %s218
      %p222 = pneg %p216
      %p223 = scmp.eq.s32.totalorder %s24, 1
      %p224 = por %p222, %p223
      %p225 = scmp.ne.s32.totalorder %s217, %s220
      %p226 = scmp.eq.s32.totalorder %s24, 0
      %p227 = por %p225, %p226
      %p228 = scmp.ne.s32.totalorder %s217, %s220
      %p229 = scmp.eq.s32.totalorder %s29, 1
      %p230 = por %p228, %p229
      %p231 = scmp.ne.s32.totalorder %s220, %s221
      %p232 = scmp.eq.s32.totalorder %s29, 0
      %p233 = por %p231, %p232
      %p234 = scmp.ne.s32.totalorder %s220, %s221
      %p235 = scmp.eq.s32.totalorder %s30, 1
      %p236 = por %p234, %p235
      %p238 = scmp.ne.s32.totalorder %s221, %s237
      %p239 = scmp.eq.s32.totalorder %s30, 0
      %p240 = por %p238, %p239
      %s241 = ssub.s32 %s24, %s31
      %p242 = scmp.eq.s32.totalorder %s241, 0
      %s244 = sadd.s32 %s243, 1
      %s245 = scalar_select %p242, %s243, %s244
      %p248 = pneg %p242
      %p249 = scmp.eq.s32.totalorder %s24, 1
      %p250 = por %p248, %p249
      %p251 = scmp.ne.s32.totalorder %s243, %s246
      %p252 = scmp.eq.s32.totalorder %s24, 0
      %p253 = por %p251, %p252
      %p254 = scmp.ne.s32.totalorder %s243, %s246
      %p255 = scmp.eq.s32.totalorder %s29, 1
      %p256 = por %p254, %p255
      %p257 = scmp.ne.s32.totalorder %s246, %s247
      %p258 = scmp.eq.s32.totalorder %s29, 0
      %p259 = por %p257, %p258
      %p260 = scmp.ne.s32.totalorder %s246, %s247
      %p261 = scmp.eq.s32.totalorder %s30, 1
      %p262 = por %p260, %p261
      %p264 = scmp.ne.s32.totalorder %s247, %s263
      %p265 = scmp.eq.s32.totalorder %s30, 0
      %p266 = por %p264, %p265
      %s267 = ssub.s32 %s24, %s31
      %p268 = scmp.eq.s32.totalorder %s267, 0
      %s270 = sadd.s32 %s269, 1
      %s271 = scalar_select %p268, %s269, %s270
      %p274 = pneg %p268
      %p275 = scmp.eq.s32.totalorder %s24, 1
      %p276 = por %p274, %p275
      %p277 = scmp.ne.s32.totalorder %s269, %s272
      %p278 = scmp.eq.s32.totalorder %s24, 0
      %p279 = por %p277, %p278
      %p280 = scmp.ne.s32.totalorder %s269, %s272
      %p281 = scmp.eq.s32.totalorder %s29, 1
      %p282 = por %p280, %p281
      %p283 = scmp.ne.s32.totalorder %s272, %s273
      %p284 = scmp.eq.s32.totalorder %s29, 0
      %p285 = por %p283, %p284
      %p286 = scmp.ne.s32.totalorder %s272, %s273
      %p287 = scmp.eq.s32.totalorder %s30, 1
      %p288 = por %p286, %p287
      %p290 = scmp.ne.s32.totalorder %s273, %s289
      %p291 = scmp.eq.s32.totalorder %s30, 0
      %p292 = por %p290, %p291
      %s293 = ssub.s32 %s24, %s31
      %p294 = scmp.eq.s32.totalorder %s293, 0
      %s296 = sadd.s32 %s295, 1
      %s297 = scalar_select %p294, %s295, %s296
      %p300 = pneg %p294
      %p301 = scmp.eq.s32.totalorder %s24, 1
      %p302 = por %p300, %p301
      %p303 = scmp.ne.s32.totalorder %s295, %s298
      %p304 = scmp.eq.s32.totalorder %s24, 0
      %p305 = por %p303, %p304
      %p306 = scmp.ne.s32.totalorder %s295, %s298
      %p307 = scmp.eq.s32.totalorder %s29, 1
      %p308 = por %p306, %p307
      %p309 = scmp.ne.s32.totalorder %s298, %s299
      %p310 = scmp.eq.s32.totalorder %s29, 0
      %p311 = por %p309, %p310
      %p312 = scmp.ne.s32.totalorder %s298, %s299
      %p313 = scmp.eq.s32.totalorder %s30, 1
      %p314 = por %p312, %p313
      %p316 = scmp.ne.s32.totalorder %s299, %s315
      %p317 = scmp.eq.s32.totalorder %s30, 0
      %p318 = por %p316, %p317
      %s319 = ssub.s32 %s24, %s31
      %p320 = scmp.eq.s32.totalorder %s319, 0
      %s322 = sadd.s32 %s321, 1
      %s323 = scalar_select %p320, %s321, %s322
      %p326 = pneg %p320
      %p327 = scmp.eq.s32.totalorder %s24, 1
      %p328 = por %p326, %p327
      %p329 = scmp.ne.s32.totalorder %s321, %s324
      %p330 = scmp.eq.s32.totalorder %s24, 0
      %p331 = por %p329, %p330
      %p332 = scmp.ne.s32.totalorder %s321, %s324
      %p333 = scmp.eq.s32.totalorder %s29, 1
      %p334 = por %p332, %p333
      %p335 = scmp.ne.s32.totalorder %s324, %s325
      %p336 = scmp.eq.s32.totalorder %s29, 0
      %p337 = por %p335, %p336
      %p338 = scmp.ne.s32.totalorder %s324, %s325
      %p339 = scmp.eq.s32.totalorder %s30, 1
      %p340 = por %p338, %p339
      %p342 = scmp.ne.s32.totalorder %s325, %s341
      %p343 = scmp.eq.s32.totalorder %s30, 0
      %p344 = por %p342, %p343
      %s345 = ssub.s32 %s24, %s31
      %p346 = scmp.eq.s32.totalorder %s345, 0
      %s348 = sadd.s32 %s347, 1
      %s349 = scalar_select %p346, %s347, %s348
      %p352 = pneg %p346
      %p353 = scmp.eq.s32.totalorder %s24, 1
      %p354 = por %p352, %p353
      %p355 = scmp.ne.s32.totalorder %s347, %s350
      %p356 = scmp.eq.s32.totalorder %s24, 0
      %p357 = por %p355, %p356
      %p358 = scmp.ne.s32.totalorder %s347, %s350
      %p359 = scmp.eq.s32.totalorder %s29, 1
      %p360 = por %p358, %p359
      %p361 = scmp.ne.s32.totalorder %s350, %s351
      %p362 = scmp.eq.s32.totalorder %s29, 0
      %p363 = por %p361, %p362
      %p364 = scmp.ne.s32.totalorder %s350, %s351
      %p365 = scmp.eq.s32.totalorder %s30, 1
      %p366 = por %p364, %p365
      %p368 = scmp.ne.s32.totalorder %s351, %s367
      %p369 = scmp.eq.s32.totalorder %s30, 0
      %p370 = por %p368, %p369
      %s371 = ssub.s32 %s24, %s31
      %p372 = scmp.eq.s32.totalorder %s371, 0
      %s374 = sadd.s32 %s373, 1
      %s375 = scalar_select %p372, %s373, %s374
      %p378 = pneg %p372
      %p379 = scmp.eq.s32.totalorder %s24, 1
      %p380 = por %p378, %p379
      %p381 = scmp.ne.s32.totalorder %s373, %s376
      %p382 = scmp.eq.s32.totalorder %s24, 0
      %p383 = por %p381, %p382
      %p384 = scmp.ne.s32.totalorder %s373, %s376
      %p385 = scmp.eq.s32.totalorder %s29, 1
      %p386 = por %p384, %p385
      %p387 = scmp.ne.s32.totalorder %s376, %s377
      %p388 = scmp.eq.s32.totalorder %s29, 0
      %p389 = por %p387, %p388
      %p390 = scmp.ne.s32.totalorder %s376, %s377
      %p391 = scmp.eq.s32.totalorder %s30, 1
      %p392 = por %p390, %p391
      %p394 = scmp.ne.s32.totalorder %s377, %s393
      %p395 = scmp.eq.s32.totalorder %s30, 0
      %p396 = por %p394, %p395
      %s397 = ssub.s32 %s24, %s31
      %p398 = scmp.eq.s32.totalorder %s397, 0
      %s400 = sadd.s32 %s399, 1
      %s401 = scalar_select %p398, %s399, %s400
      %p404 = pneg %p398
      %p405 = scmp.eq.s32.totalorder %s24, 1
      %p406 = por %p404, %p405
      %p407 = scmp.ne.s32.totalorder %s399, %s402
      %p408 = scmp.eq.s32.totalorder %s24, 0
      %p409 = por %p407, %p408
      %p410 = scmp.ne.s32.totalorder %s399, %s402
      %p411 = scmp.eq.s32.totalorder %s29, 1
      %p412 = por %p410, %p411
      %p413 = scmp.ne.s32.totalorder %s402, %s403
      %p414 = scmp.eq.s32.totalorder %s29, 0
      %p415 = por %p413, %p414
      %p416 = scmp.ne.s32.totalorder %s402, %s403
      %p417 = scmp.eq.s32.totalorder %s30, 1
      %p418 = por %p416, %p417
      %p420 = scmp.ne.s32.totalorder %s403, %s419
      %p421 = scmp.eq.s32.totalorder %s30, 0
      %p422 = por %p420, %p421
      %s423 = ssub.s32 %s24, %s31
      %p424 = scmp.eq.s32.totalorder %s423, 0
      %s426 = sadd.s32 %s425, 1
      %s427 = scalar_select %p424, %s425, %s426
      %p430 = pneg %p424
      %p431 = scmp.eq.s32.totalorder %s24, 1
      %p432 = por %p430, %p431
      %p433 = scmp.ne.s32.totalorder %s425, %s428
      %p434 = scmp.eq.s32.totalorder %s24, 0
      %p435 = por %p433, %p434
      %p436 = scmp.ne.s32.totalorder %s425, %s428
      %p437 = scmp.eq.s32.totalorder %s29, 1
      %p438 = por %p436, %p437
      %p439 = scmp.ne.s32.totalorder %s428, %s429
      %p440 = scmp.eq.s32.totalorder %s29, 0
      %p441 = por %p439, %p440
      %p442 = scmp.ne.s32.totalorder %s428, %s429
      %p443 = scmp.eq.s32.totalorder %s30, 1
      %p444 = por %p442, %p443
      %p446 = scmp.ne.s32.totalorder %s429, %s445
      %p447 = scmp.eq.s32.totalorder %s30, 0
      %p448 = por %p446, %p447
      %s450 = sadd.s32 %s449, 1
      %p453 = scmp.eq.s32.totalorder %s24, 1
      %p454 = scmp.ne.s32.totalorder %s449, %s451
      %p455 = scmp.eq.s32.totalorder %s24, 0
      %p456 = por %p454, %p455
      %p457 = scmp.ne.s32.totalorder %s449, %s451
      %p458 = scmp.eq.s32.totalorder %s29, 1
      %p459 = por %p457, %p458
      %p460 = scmp.ne.s32.totalorder %s451, %s452
      %p461 = scmp.eq.s32.totalorder %s29, 0
      %p462 = por %p460, %p461
      %p463 = scmp.ne.s32.totalorder %s451, %s452
      %p464 = scmp.eq.s32.totalorder %s30, 1
      %p465 = por %p463, %p464
      %p467 = scmp.ne.s32.totalorder %s452, %s466
      %p468 = scmp.eq.s32.totalorder %s30, 0
      %p469 = por %p467, %p468
      %p470 = scmp.le.s32.totalorder 1, %s24
      %p471 = scmp.lt.s32.totalorder %s24, 3
      %p472 = pnand %p470, %p471
      %p473 = pneg %p472
      // Predicated region
      $region9: #{transformer_forward.1} parent=5 // pred_check
        _
      $region10: #{transformer_forward.1} parent=5 // pred_check_branch
        %475 = sbr.rel (%p472) target = $region12
      $region11: #{transformer_forward.1} parent=5 // pred_region
        %s476 = ssub.s32 %s24, 1
        // Predicated region
        $region13: #{transformer_forward.1} parent=11 // pred_check
          %p477 = pneg %p45
        $region14: #{transformer_forward.1} parent=11 // pred_check_branch
          %479 = sbr.rel (%p477) target = $region16
        $region15: #{transformer_forward.1} parent=11 // pred_region
          _
        $region16: #{transformer_forward.1} parent=11 // pred_fallthru
          _
        // Predicated region
        $region17: #{transformer_forward.1} parent=11 // pred_check
          %p480 = pneg %p66
        $region18: #{transformer_forward.1} parent=11 // pred_check_branch
          %482 = sbr.rel (%p480) target = $region20
        $region19: #{transformer_forward.1} parent=11 // pred_region
          _
        $region20: #{transformer_forward.1} parent=11 // pred_fallthru
          _
        // Predicated region
        $region21: #{transformer_forward.1} parent=11 // pred_check
          %p483 = pneg %p87
        $region22: #{transformer_forward.1} parent=11 // pred_check_branch
          %485 = sbr.rel (%p483) target = $region24
        $region23: #{transformer_forward.1} parent=11 // pred_region
          _
        $region24: #{transformer_forward.1} parent=11 // pred_fallthru
          _
        // Predicated region
        $region25: #{transformer_forward.1} parent=11 // pred_check
          %p486 = pneg %p108
        $region26: #{transformer_forward.1} parent=11 // pred_check_branch
          %488 = sbr.rel (%p486) target = $region28
        $region27: #{transformer_forward.1} parent=11 // pred_region
          _
        $region28: #{transformer_forward.1} parent=11 // pred_fallthru
          _
        // Predicated region
        $region29: #{transformer_forward.1} parent=11 // pred_check
          %p489 = pneg %p129
        $region30: #{transformer_forward.1} parent=11 // pred_check_branch
          %491 = sbr.rel (%p489) target = $region32
        $region31: #{transformer_forward.1} parent=11 // pred_region
          _
        $region32: #{transformer_forward.1} parent=11 // pred_fallthru
          _
      $region12: #{transformer_forward.1} parent=5 // pred_fallthru
        _
      %p492 = scmp.lt.s32.totalorder %s24, 2
      // Predicated region
      $region33: #{transformer_forward.1} parent=5 // pred_check
        %p493 = pneg %p492
      $region34: #{transformer_forward.1} parent=5 // pred_check_branch
        %495 = sbr.rel (%p493) target = $region36
      $region35: #{transformer_forward.1} parent=5 // pred_region
        // Predicated region
        $region37: #{transformer_forward.1} parent=35 // pred_check
          %p496 = pneg %p149
        $region38: #{transformer_forward.1} parent=35 // pred_check_branch
          %498 = sbr.rel (%p496) target = $region40
        $region39: #{transformer_forward.1} parent=35 // pred_region
          %p499 = scmp.lt.s32.totalorder %s24, 1
          %s500 = scalar_select %p499, %s24, 1
          %s501 = smul.addr %s500, 16
          %s502 = smul.addr %s501, 4
          %s503 = scalar_lea.vmem %s5, %s502
        $region40: #{transformer_forward.1} parent=35 // pred_fallthru
          _
        // Predicated region
        $region41: #{transformer_forward.1} parent=35 // pred_check
          %p504 = pneg %p175
        $region42: #{transformer_forward.1} parent=35 // pred_check_branch
          %506 = sbr.rel (%p504) target = $region44
        $region43: #{transformer_forward.1} parent=35 // pred_region
          %p507 = scmp.lt.s32.totalorder %s24, 1
          %s508 = scalar_select %p507, %s24, 1
          %s509 = smul.addr %s508, 2
          %s510 = scalar_lea.vmem %s6, %s509
        $region44: #{transformer_forward.1} parent=35 // pred_fallthru
          _
        // Predicated region
        $region45: #{transformer_forward.1} parent=35 // pred_check
          %p511 = pneg %p201
        $region46: #{transformer_forward.1} parent=35 // pred_check_branch
          %513 = sbr.rel (%p511) target = $region48
        $region47: #{transformer_forward.1} parent=35 // pred_region
          %p514 = scmp.lt.s32.totalorder %s24, 1
          %s515 = scalar_select %p514, %s24, 1
          %s516 = smul.addr %s515, 8
          %s517 = smul.addr %s516, 4
          %s518 = scalar_lea.vmem %s7, %s517
        $region48: #{transformer_forward.1} parent=35 // pred_fallthru
          _
        // Predicated region
        $region49: #{transformer_forward.1} parent=35 // pred_check
          %p519 = pneg %p227
        $region50: #{transformer_forward.1} parent=35 // pred_check_branch
          %521 = sbr.rel (%p519) target = $region52
        $region51: #{transformer_forward.1} parent=35 // pred_region
          %p522 = scmp.lt.s32.totalorder %s24, 1
          %s523 = scalar_select %p522, %s24, 1
          %s524 = scalar_lea.vmem %s8, %s523
        $region52: #{transformer_forward.1} parent=35 // pred_fallthru
          _
        // Predicated region
        $region53: #{transformer_forward.1} parent=35 // pred_check
          %p525 = pneg %p253
        $region54: #{transformer_forward.1} parent=35 // pred_check_branch
          %527 = sbr.rel (%p525) target = $region56
        $region55: #{transformer_forward.1} parent=35 // pred_region
          %p528 = scmp.lt.s32.totalorder %s24, 1
          %s529 = scalar_select %p528, %s24, 1
          %s530 = scalar_lea.vmem %s9, %s529
        $region56: #{transformer_forward.1} parent=35 // pred_fallthru
          _
        // Predicated region
        $region57: #{transformer_forward.1} parent=35 // pred_check
          %p531 = pneg %p279
        $region58: #{transformer_forward.1} parent=35 // pred_check_branch
          %533 = sbr.rel (%p531) target = $region60
        $region59: #{transformer_forward.1} parent=35 // pred_region
          %p534 = scmp.lt.s32.totalorder %s24, 1
          %s535 = scalar_select %p534, %s24, 1
          %s536 = scalar_lea.vmem %s10, %s535
        $region60: #{transformer_forward.1} parent=35 // pred_fallthru
          _
        // Predicated region
        $region61: #{transformer_forward.1} parent=35 // pred_check
          %p537 = pneg %p305
        $region62: #{transformer_forward.1} parent=35 // pred_check_branch
          %539 = sbr.rel (%p537) target = $region64
        $region63: #{transformer_forward.1} parent=35 // pred_region
          %p540 = scmp.lt.s32.totalorder %s24, 1
          %s541 = scalar_select %p540, %s24, 1
          %s542 = smul.addr %s541, 128
          %s543 = smul.addr %s542, 4
          %s544 = scalar_lea.vmem %s11, %s543
        $region64: #{transformer_forward.1} parent=35 // pred_fallthru
          _
        // Predicated region
        $region65: #{transformer_forward.1} parent=35 // pred_check
          %p545 = pneg %p331
        $region66: #{transformer_forward.1} parent=35 // pred_check_branch
          %547 = sbr.rel (%p545) target = $region68
        $region67: #{transformer_forward.1} parent=35 // pred_region
          %p548 = scmp.lt.s32.totalorder %s24, 1
          %s549 = scalar_select %p548, %s24, 1
          %s550 = smul.addr %s549, 16
          %s551 = scalar_lea.vmem %s12, %s550
        $region68: #{transformer_forward.1} parent=35 // pred_fallthru
          _
        // Predicated region
        $region69: #{transformer_forward.1} parent=35 // pred_check
          %p552 = pneg %p357
        $region70: #{transformer_forward.1} parent=35 // pred_check_branch
          %554 = sbr.rel (%p552) target = $region72
        $region71: #{transformer_forward.1} parent=35 // pred_region
          %p555 = scmp.lt.s32.totalorder %s24, 1
          %s556 = scalar_select %p555, %s24, 1
          %s557 = smul.addr %s556, 256
          %s558 = smul.addr %s557, 4
          %s559 = scalar_lea.vmem %s13, %s558
        $region72: #{transformer_forward.1} parent=35 // pred_fallthru
          _
        // Predicated region
        $region73: #{transformer_forward.1} parent=35 // pred_check
          %p560 = pneg %p383
        $region74: #{transformer_forward.1} parent=35 // pred_check_branch
          %562 = sbr.rel (%p560) target = $region76
        $region75: #{transformer_forward.1} parent=35 // pred_region
          %p563 = scmp.lt.s32.totalorder %s24, 1
          %s564 = scalar_select %p563, %s24, 1
          %s565 = scalar_lea.vmem %s14, %s564
        $region76: #{transformer_forward.1} parent=35 // pred_fallthru
          _
        // Predicated region
        $region77: #{transformer_forward.1} parent=35 // pred_check
          %p566 = pneg %p409
        $region78: #{transformer_forward.1} parent=35 // pred_check_branch
          %568 = sbr.rel (%p566) target = $region80
        $region79: #{transformer_forward.1} parent=35 // pred_region
          %p569 = scmp.lt.s32.totalorder %s24, 1
          %s570 = scalar_select %p569, %s24, 1
          %s571 = scalar_lea.vmem %s15, %s570
        $region80: #{transformer_forward.1} parent=35 // pred_fallthru
          _
        // Predicated region
        $region81: #{transformer_forward.1} parent=35 // pred_check
          %p572 = pneg %p435
        $region82: #{transformer_forward.1} parent=35 // pred_check_branch
          %574 = sbr.rel (%p572) target = $region84
        $region83: #{transformer_forward.1} parent=35 // pred_region
          %p575 = scmp.lt.s32.totalorder %s24, 1
          %s576 = scalar_select %p575, %s24, 1
          %s577 = scalar_lea.vmem %s16, %s576
        $region84: #{transformer_forward.1} parent=35 // pred_fallthru
          _
      $region36: #{transformer_forward.1} parent=5 // pred_fallthru
        _
      %p578 = scmp.le.s32.totalorder 1, %s24
      %p579 = scmp.lt.s32.totalorder %s24, 3
      %p580 = pnand %p578, %p579
      %p581 = pneg %p580
      // Predicated region
      $region85: #{transformer_forward.1} parent=5 // pred_check
        _
      $region86: #{transformer_forward.1} parent=5 // pred_check_branch
        %583 = sbr.rel (%p580) target = $region88
      $region87: #{transformer_forward.1} parent=5 // pred_region
        %s584 = ssub.s32 %s24, 1
        %p585 = pneg %p45
        %p586 = pneg %p42
        %p587 = pneg %p66
        %p588 = pneg %p63
        %p589 = pneg %p87
        %p590 = pneg %p84
        %p591 = pneg %p108
        %p592 = pneg %p105
        %p593 = pneg %p129
        %p594 = pneg %p126
        %p595 = scmp.lt.s32.totalorder %s29, 1
        %s596 = scalar_select %p595, %s29, 1
        %s597 = smul.addr %s596, 16
        %s598 = smul.addr %s597, 4
        %s599 = scalar_lea.vmem %s5, %s598
        %p600 = pneg %p155
        %p601 = pneg %p152
        %p602 = scmp.lt.s32.totalorder %s29, 1
        %s603 = scalar_select %p602, %s29, 1
        %s604 = smul.addr %s603, 2
        %s605 = scalar_lea.vmem %s6, %s604
        %p606 = pneg %p181
        %p607 = pneg %p178
        %p608 = scmp.lt.s32.totalorder %s29, 1
        %s609 = scalar_select %p608, %s29, 1
        %s610 = smul.addr %s609, 8
        %s611 = smul.addr %s610, 4
        %s612 = scalar_lea.vmem %s7, %s611
        %p613 = pneg %p207
        %p614 = pneg %p204
        %p615 = scmp.lt.s32.totalorder %s29, 1
        %s616 = scalar_select %p615, %s29, 1
        %s617 = scalar_lea.vmem %s8, %s616
        %p618 = pneg %p233
        %p619 = pneg %p230
        %p620 = scmp.lt.s32.totalorder %s29, 1
        %s621 = scalar_select %p620, %s29, 1
        %s622 = scalar_lea.vmem %s9, %s621
        %p623 = pneg %p259
        %p624 = pneg %p256
        %p625 = scmp.lt.s32.totalorder %s29, 1
        %s626 = scalar_select %p625, %s29, 1
        %s627 = scalar_lea.vmem %s10, %s626
        %p628 = pneg %p285
        %p629 = pneg %p282
        %p630 = scmp.lt.s32.totalorder %s29, 1
        %s631 = scalar_select %p630, %s29, 1
        %s632 = smul.addr %s631, 128
        %s633 = smul.addr %s632, 4
        %s634 = scalar_lea.vmem %s11, %s633
        %p635 = pneg %p311
        %p636 = pneg %p308
        %p637 = scmp.lt.s32.totalorder %s29, 1
        %s638 = scalar_select %p637, %s29, 1
        %s639 = smul.addr %s638, 16
        %s640 = scalar_lea.vmem %s12, %s639
        %p641 = pneg %p337
        %p642 = pneg %p334
        %p643 = scmp.lt.s32.totalorder %s29, 1
        %s644 = scalar_select %p643, %s29, 1
        %s645 = smul.addr %s644, 256
        %s646 = smul.addr %s645, 4
        %s647 = scalar_lea.vmem %s13, %s646
        %p648 = pneg %p363
        %p649 = pneg %p360
        %p650 = scmp.lt.s32.totalorder %s29, 1
        %s651 = scalar_select %p650, %s29, 1
        %s652 = scalar_lea.vmem %s14, %s651
        %p653 = pneg %p389
        %p654 = pneg %p386
        %p655 = scmp.lt.s32.totalorder %s29, 1
        %s656 = scalar_select %p655, %s29, 1
        %s657 = scalar_lea.vmem %s15, %s656
        %p658 = pneg %p415
        %p659 = pneg %p412
        %p660 = scmp.lt.s32.totalorder %s29, 1
        %s661 = scalar_select %p660, %s29, 1
        %s662 = scalar_lea.vmem %s16, %s661
        %p663 = pneg %p441
        %p664 = pneg %p438
        %p665 = pneg %p462
        %p666 = pneg %p459
        %p667 = scmp.lt.s32.totalorder %s29, 1
        %s668 = scalar_select %p667, %s29, 1
        %s669 = smul.addr %s668, 16
        %s670 = smul.addr %s669, 4
        %s671 = scalar_lea.vmem %s5, %s670
        %p672 = scmp.lt.s32.totalorder %s29, 1
        %s673 = scalar_select %p672, %s29, 1
        %s674 = smul.addr %s673, 2
        %s675 = scalar_lea.vmem %s6, %s674
        %p676 = scmp.lt.s32.totalorder %s29, 1
        %s677 = scalar_select %p676, %s29, 1
        %s678 = smul.addr %s677, 8
        %s679 = smul.addr %s678, 4
        %s680 = scalar_lea.vmem %s7, %s679
        %p681 = scmp.lt.s32.totalorder %s29, 1
        %s682 = scalar_select %p681, %s29, 1
        %s683 = scalar_lea.vmem %s8, %s682
        %p684 = scmp.lt.s32.totalorder %s29, 1
        %s685 = scalar_select %p684, %s29, 1
        %s686 = scalar_lea.vmem %s9, %s685
        %p687 = scmp.lt.s32.totalorder %s29, 1
        %s688 = scalar_select %p687, %s29, 1
        %s689 = scalar_lea.vmem %s10, %s688
        %p690 = scmp.lt.s32.totalorder %s29, 1
        %s691 = scalar_select %p690, %s29, 1
        %s692 = smul.addr %s691, 128
        %s693 = smul.addr %s692, 4
        %s694 = scalar_lea.vmem %s11, %s693
        %p695 = scmp.lt.s32.totalorder %s29, 1
        %s696 = scalar_select %p695, %s29, 1
        %s697 = smul.addr %s696, 16
        %s698 = scalar_lea.vmem %s12, %s697
        %p699 = scmp.lt.s32.totalorder %s29, 1
        %s700 = scalar_select %p699, %s29, 1
        %s701 = smul.addr %s700, 256
        %s702 = smul.addr %s701, 4
        %s703 = scalar_lea.vmem %s13, %s702
        %p704 = scmp.lt.s32.totalorder %s29, 1
        %s705 = scalar_select %p704, %s29, 1
        %s706 = scalar_lea.vmem %s14, %s705
        %p707 = scmp.lt.s32.totalorder %s29, 1
        %s708 = scalar_select %p707, %s29, 1
        %s709 = scalar_lea.vmem %s15, %s708
        %p710 = scmp.lt.s32.totalorder %s29, 1
        %s711 = scalar_select %p710, %s29, 1
        %s712 = scalar_lea.vmem %s16, %s711
        %p714 = scmp.eq.s32.totalorder %s29, 0
        // Predicated region
        $region89: #{transformer_forward.1} parent=87 // pred_check
          %p715 = pneg %p714
        $region90: #{transformer_forward.1} parent=87 // pred_check_branch
          %717 = sbr.rel (%p715) target = $region92
        $region91: #{transformer_forward.1} parent=87 // pred_region
          %v718 = vld [vmem:[%s0] sm:$0xff]
          %v719 = vld [vmem:[%s0 + $0x8] sm:$0xff]
          %v720 = vld [vmem:[%s1] sm:$0xf]
          %v721 = vld [vmem:[%s1 + $0x4] sm:$0xf]
          %v722 = vpack.c.bf16 %v719, %v718
          %v723 = vld [vmem:[%s2] sm:$0x1]
          %v725 = vperm.slane %v723, 0
          %v729 = vunpack.c.l.b16 %v720
          %v730 = vunpack.c.l.b16 %v721
          %v731 = vpack.c.b16 %v730, %v729
          %vm733 = vcmask 130048
          %v735 = vsel %vm733, %v722, 0
          %737 = vmatpush.bf16.msra.mxu0 0
          %738 = vmatpush.bf16.msra.mxu0 0
          %739 = vmatpush.bf16.msra.mxu0 0
          %740 = vmatpush.bf16.msra.mxu0 0
          %741 = vmatpush.bf16.msra.mxu0 0
          %742 = vmatpush.bf16.msra.mxu0 0
          %743 = vmatpush.bf16.msra.mxu0 0
          %744 = vmatpush.bf16.msra.mxu0 %v731
          %745 = vmatmul.bf16.gmra.mxu0 %v735
          %v746 = vpop.f32.mrf.mxu0
          %v747 = vadd.f32 %v725, %v746
          %v748 = vpop.f32.mrf.mxu0
          %v749 = vadd.f32 %v725, %v748
          %750 = vdwg.mxu0
          %vm751 = vcmask 523264
          %752 = vst.msk [vmem:[#allocation2] sm:$0xff] %vm751, %v747
          %753 = vst.msk [vmem:[#allocation2 + $0x8] sm:$0xff] %vm751, %v749
        $region92: #{transformer_forward.1} parent=87 // pred_fallthru
          _
        %v754 = vld [vmem:[#allocation2] sm:$0xff]
        %v755 = vld [vmem:[#allocation2 + $0x8] sm:$0xff]
        %v756 = vld [vmem:[%s671] sm:$0xff]
        %v757 = vld [vmem:[%s671 + $0x8] sm:$0xff]
        %v758 = vld [vmem:[%s671 + $0x10] sm:$0xff]
        %v759 = vld [vmem:[%s671 + $0x18] sm:$0xff]
        %v760 = vld [vmem:[%s671 + $0x20] sm:$0xff]
        %v761 = vld [vmem:[%s671 + $0x28] sm:$0xff]
        %v762 = vld [vmem:[%s671 + $0x30] sm:$0xff]
        %v763 = vld [vmem:[%s671 + $0x38] sm:$0xff]
        %v764 = vpack.c.bf16 %v755, %v754
        %v765 = vld [vmem:[%s675] sm:$0x3]
        %v767 = vperm.slane %v765, 0
        %v768 = vperm.slane %v765, 1
        %v779 = vunpack.c.l.b16 %v756
        %v780 = vunpack.c.h.b16 %v756
        %v781 = vunpack.c.l.b16 %v757
        %v782 = vunpack.c.h.b16 %v757
        %v783 = vunpack.c.l.b16 %v758
        %v784 = vunpack.c.h.b16 %v758
        %v785 = vunpack.c.l.b16 %v759
        %v786 = vunpack.c.h.b16 %v759
        %v787 = vunpack.c.l.b16 %v760
        %v788 = vunpack.c.h.b16 %v760
        %v789 = vunpack.c.l.b16 %v761
        %v790 = vunpack.c.h.b16 %v761
        %v791 = vunpack.c.l.b16 %v762
        %v792 = vunpack.c.h.b16 %v762
        %v793 = vunpack.c.l.b16 %v763
        %v794 = vunpack.c.h.b16 %v763
        %v795 = vpack.c.b16 %v781, %v779
        %v796 = vpack.c.b16 %v782, %v780
        %v797 = vpack.c.b16 %v785, %v783
        %v798 = vpack.c.b16 %v786, %v784
        %v799 = vpack.c.b16 %v789, %v787
        %v800 = vpack.c.b16 %v790, %v788
        %v801 = vpack.c.b16 %v793, %v791
        %v802 = vpack.c.b16 %v794, %v792
        %vm811 = vcmask 523264
        %v813 = vsel %vm811, %v764, 0
        %815 = vmatpush.bf16.msra.mxu0 0
        %816 = vmatpush.bf16.msra.mxu0 0
        %817 = vmatpush.bf16.msra.mxu0 0
        %818 = vmatpush.bf16.msra.mxu0 0
        %819 = vmatpush.bf16.msra.mxu0 %v801
        %820 = vmatpush.bf16.msra.mxu0 %v799
        %821 = vmatpush.bf16.msra.mxu0 %v797
        %822 = vmatpush.bf16.msra.mxu0 %v795
        %823 = vmatmul.bf16.gmra.mxu0 %v813
        %v824 = vpop.f32.mrf.mxu0
        %v825 = vadd.f32 %v767, %v824
        %v826 = vpop.f32.mrf.mxu0
        %v827 = vadd.f32 %v767, %v826
        %828 = vdwg.mxu0
        %829 = vmatpush.bf16.msra.mxu0 0
        %830 = vmatpush.bf16.msra.mxu0 0
        %831 = vmatpush.bf16.msra.mxu0 0
        %832 = vmatpush.bf16.msra.mxu0 0
        %833 = vmatpush.bf16.msra.mxu0 %v802
        %834 = vmatpush.bf16.msra.mxu0 %v800
        %835 = vmatpush.bf16.msra.mxu0 %v798
        %836 = vmatpush.bf16.msra.mxu0 %v796
        %837 = vmatmul.bf16.gmra.mxu0 %v813
        %v838 = vpop.f32.mrf.mxu0
        %v839 = vadd.f32 %v768, %v838
        %v840 = vpop.f32.mrf.mxu0
        %v841 = vadd.f32 %v768, %v840
        %842 = vdwg.mxu0
        %845 = vrot.lane.b32.xlu0 %v825, 112
        %v846 = vpop.permute.xlu0 %845
        %847 = vrot.lane.b32.xlu0 %v827, 112
        %v848 = vpop.permute.xlu0 %847
        %851 = vrot.lane.b32.xlu0 %v825, 96
        %v852 = vpop.permute.xlu0 %851
        %853 = vrot.lane.b32.xlu0 %v827, 96
        %v854 = vpop.permute.xlu0 %853
        %857 = vrot.lane.b32.xlu0 %v825, 80
        %v858 = vpop.permute.xlu0 %857
        %859 = vrot.lane.b32.xlu0 %v827, 80
        %v860 = vpop.permute.xlu0 %859
        %865 = vrot.lane.b32.xlu0 %v839, 112
        %v866 = vpop.permute.xlu0 %865
        %867 = vrot.lane.b32.xlu0 %v841, 112
        %v868 = vpop.permute.xlu0 %867
        %871 = vrot.lane.b32.xlu0 %v839, 96
        %v872 = vpop.permute.xlu0 %871
        %873 = vrot.lane.b32.xlu0 %v841, 96
        %v874 = vpop.permute.xlu0 %873
        %877 = vrot.lane.b32.xlu0 %v839, 80
        %v878 = vpop.permute.xlu0 %877
        %879 = vrot.lane.b32.xlu0 %v841, 80
        %v880 = vpop.permute.xlu0 %879
        %v883 = vpack.c.bf16 %v825, %v825
        %v884 = vpack.c.bf16 %v827, %v827
        %v885 = vpack.c.bf16 %v846, %v846
        %v886 = vpack.c.bf16 %v848, %v848
        %v887 = vpack.c.bf16 %v852, %v852
        %v888 = vpack.c.bf16 %v854, %v854
        %v889 = vpack.c.bf16 %v858, %v858
        %v890 = vpack.c.bf16 %v860, %v860
        %v892 = vunpack.c.l.b16 %v883
        %v893 = vpack.c.b16 %v892, %v892
        %894 = vrot.lane.b32.xlu0 %v893, 64
        %v895 = vpop.permute.xlu0 %894
        %vm896 = vcmask 130048
        %v898 = vsel %vm896, %v883, 0
        %v901 = vsel %vm896, %v895, 0
        %903 = vmatpush.bf16.xpose.msra.mxu0 0
        %904 = vmatpush.bf16.xpose.msra.mxu0 0
        %905 = vmatpush.bf16.xpose.msra.mxu0 0
        %906 = vmatpush.bf16.xpose.msra.mxu0 0
        %907 = vmatpush.bf16.xpose.msra.mxu0 0
        %908 = vmatpush.bf16.xpose.msra.mxu0 0
        %909 = vmatpush.bf16.xpose.msra.mxu0 0
        %910 = vmatpush.bf16.xpose.msra.mxu0 %v901
        %911 = vmatmul.bf16.gmra.mxu0 %v898
        %v912 = vpop.f32.mrf.mxu0
        %v913 = vadd.f32 0.0, %v912
        %v914 = vpop.f32.mrf.mxu0
        %915 = vdwg.mxu0
        %v917 = vunpack.c.l.b16 %v884
        %v918 = vpack.c.b16 %v917, %v917
        %919 = vrot.lane.b32.xlu0 %v918, 64
        %v920 = vpop.permute.xlu0 %919
        %v922 = vsel %vm896, %v884, 0
        %v925 = vsel %vm896, %v920, 0
        %927 = vmatpush.bf16.xpose.msra.mxu0 0
        %928 = vmatpush.bf16.xpose.msra.mxu0 0
        %929 = vmatpush.bf16.xpose.msra.mxu0 0
        %930 = vmatpush.bf16.xpose.msra.mxu0 0
        %931 = vmatpush.bf16.xpose.msra.mxu0 0
        %932 = vmatpush.bf16.xpose.msra.mxu0 0
        %933 = vmatpush.bf16.xpose.msra.mxu0 0
        %934 = vmatpush.bf16.xpose.msra.mxu0 %v925
        %935 = vmatmul.bf16.gmra.mxu0 %v922
        %v936 = vpop.f32.mrf.mxu0
        %v937 = vadd.f32 0.0, %v936
        %v938 = vpop.f32.mrf.mxu0
        %939 = vdwg.mxu0
        %v941 = vunpack.c.l.b16 %v885
        %v942 = vpack.c.b16 %v941, %v941
        %943 = vrot.lane.b32.xlu0 %v942, 64
        %v944 = vpop.permute.xlu0 %943
        %v946 = vsel %vm896, %v885, 0
        %v949 = vsel %vm896, %v944, 0
        %951 = vmatpush.bf16.xpose.msra.mxu0 0
        %952 = vmatpush.bf16.xpose.msra.mxu0 0
        %953 = vmatpush.bf16.xpose.msra.mxu0 0
        %954 = vmatpush.bf16.xpose.msra.mxu0 0
        %955 = vmatpush.bf16.xpose.msra.mxu0 0
        %956 = vmatpush.bf16.xpose.msra.mxu0 0
        %957 = vmatpush.bf16.xpose.msra.mxu0 0
        %958 = vmatpush.bf16.xpose.msra.mxu0 %v949
        %959 = vmatmul.bf16.gmra.mxu0 %v946
        %v960 = vpop.f32.mrf.mxu0
        %v961 = vadd.f32 0.0, %v960
        %v962 = vpop.f32.mrf.mxu0
        %963 = vdwg.mxu0
        %v965 = vunpack.c.l.b16 %v886
        %v966 = vpack.c.b16 %v965, %v965
        %967 = vrot.lane.b32.xlu0 %v966, 64
        %v968 = vpop.permute.xlu0 %967
        %v970 = vsel %vm896, %v886, 0
        %v973 = vsel %vm896, %v968, 0
        %975 = vmatpush.bf16.xpose.msra.mxu0 0
        %976 = vmatpush.bf16.xpose.msra.mxu0 0
        %977 = vmatpush.bf16.xpose.msra.mxu0 0
        %978 = vmatpush.bf16.xpose.msra.mxu0 0
        %979 = vmatpush.bf16.xpose.msra.mxu0 0
        %980 = vmatpush.bf16.xpose.msra.mxu0 0
        %981 = vmatpush.bf16.xpose.msra.mxu0 0
        %982 = vmatpush.bf16.xpose.msra.mxu0 %v973
        %983 = vmatmul.bf16.gmra.mxu0 %v970
        %v984 = vpop.f32.mrf.mxu0
        %v985 = vadd.f32 0.0, %v984
        %v986 = vpop.f32.mrf.mxu0
        %987 = vdwg.mxu0
        %v989 = vunpack.c.l.b16 %v887
        %v990 = vpack.c.b16 %v989, %v989
        %991 = vrot.lane.b32.xlu0 %v990, 64
        %v992 = vpop.permute.xlu0 %991
        %v994 = vsel %vm896, %v887, 0
        %v997 = vsel %vm896, %v992, 0
        %999 = vmatpush.bf16.xpose.msra.mxu0 0
        %1000 = vmatpush.bf16.xpose.msra.mxu0 0
        %1001 = vmatpush.bf16.xpose.msra.mxu0 0
        %1002 = vmatpush.bf16.xpose.msra.mxu0 0
        %1003 = vmatpush.bf16.xpose.msra.mxu0 0
        %1004 = vmatpush.bf16.xpose.msra.mxu0 0
        %1005 = vmatpush.bf16.xpose.msra.mxu0 0
        %1006 = vmatpush.bf16.xpose.msra.mxu0 %v997
        %1007 = vmatmul.bf16.gmra.mxu0 %v994
        %v1008 = vpop.f32.mrf.mxu0
        %v1009 = vadd.f32 0.0, %v1008
        %v1010 = vpop.f32.mrf.mxu0
        %1011 = vdwg.mxu0
        %v1013 = vunpack.c.l.b16 %v888
        %v1014 = vpack.c.b16 %v1013, %v1013
        %1015 = vrot.lane.b32.xlu0 %v1014, 64
        %v1016 = vpop.permute.xlu0 %1015
        %v1018 = vsel %vm896, %v888, 0
        %v1021 = vsel %vm896, %v1016, 0
        %1023 = vmatpush.bf16.xpose.msra.mxu0 0
        %1024 = vmatpush.bf16.xpose.msra.mxu0 0
        %1025 = vmatpush.bf16.xpose.msra.mxu0 0
        %1026 = vmatpush.bf16.xpose.msra.mxu0 0
        %1027 = vmatpush.bf16.xpose.msra.mxu0 0
        %1028 = vmatpush.bf16.xpose.msra.mxu0 0
        %1029 = vmatpush.bf16.xpose.msra.mxu0 0
        %1030 = vmatpush.bf16.xpose.msra.mxu0 %v1021
        %1031 = vmatmul.bf16.gmra.mxu0 %v1018
        %v1032 = vpop.f32.mrf.mxu0
        %v1033 = vadd.f32 0.0, %v1032
        %v1034 = vpop.f32.mrf.mxu0
        %1035 = vdwg.mxu0
        %v1037 = vunpack.c.l.b16 %v889
        %v1038 = vpack.c.b16 %v1037, %v1037
        %1039 = vrot.lane.b32.xlu0 %v1038, 64
        %v1040 = vpop.permute.xlu0 %1039
        %v1042 = vsel %vm896, %v889, 0
        %v1045 = vsel %vm896, %v1040, 0
        %1047 = vmatpush.bf16.xpose.msra.mxu0 0
        %1048 = vmatpush.bf16.xpose.msra.mxu0 0
        %1049 = vmatpush.bf16.xpose.msra.mxu0 0
        %1050 = vmatpush.bf16.xpose.msra.mxu0 0
        %1051 = vmatpush.bf16.xpose.msra.mxu0 0
        %1052 = vmatpush.bf16.xpose.msra.mxu0 0
        %1053 = vmatpush.bf16.xpose.msra.mxu0 0
        %1054 = vmatpush.bf16.xpose.msra.mxu0 %v1045
        %1055 = vmatmul.bf16.gmra.mxu0 %v1042
        %v1056 = vpop.f32.mrf.mxu0
        %v1057 = vadd.f32 0.0, %v1056
        %v1058 = vpop.f32.mrf.mxu0
        %1059 = vdwg.mxu0
        %v1061 = vunpack.c.l.b16 %v890
        %v1062 = vpack.c.b16 %v1061, %v1061
        %1063 = vrot.lane.b32.xlu0 %v1062, 64
        %v1064 = vpop.permute.xlu0 %1063
        %v1066 = vsel %vm896, %v890, 0
        %v1069 = vsel %vm896, %v1064, 0
        %1071 = vmatpush.bf16.xpose.msra.mxu0 0
        %1072 = vmatpush.bf16.xpose.msra.mxu0 0
        %1073 = vmatpush.bf16.xpose.msra.mxu0 0
        %1074 = vmatpush.bf16.xpose.msra.mxu0 0
        %1075 = vmatpush.bf16.xpose.msra.mxu0 0
        %1076 = vmatpush.bf16.xpose.msra.mxu0 0
        %1077 = vmatpush.bf16.xpose.msra.mxu0 0
        %1078 = vmatpush.bf16.xpose.msra.mxu0 %v1069
        %1079 = vmatmul.bf16.gmra.mxu0 %v1066
        %v1080 = vpop.f32.mrf.mxu0
        %v1081 = vadd.f32 0.0, %v1080
        %v1082 = vpop.f32.mrf.mxu0
        %1083 = vdwg.mxu0
        %vm1084 = vcmask 64512
        %v1085 = vsel %vm1084, %v913, -inf
        %1086 = vmax.xlane.f32.xlu0 %v1085
        %v1087 = vpop.xlane.xlu0 %1086
        %v1088 = vsel %vm1084, %v937, -inf
        %1089 = vmax.xlane.f32.xlu0 %v1088
        %v1090 = vpop.xlane.xlu0 %1089
        %v1091 = vsel %vm1084, %v961, -inf
        %1092 = vmax.xlane.f32.xlu0 %v1091
        %v1093 = vpop.xlane.xlu0 %1092
        %v1094 = vsel %vm1084, %v985, -inf
        %1095 = vmax.xlane.f32.xlu0 %v1094
        %v1096 = vpop.xlane.xlu0 %1095
        %v1097 = vsel %vm1084, %v1009, -inf
        %1098 = vmax.xlane.f32.xlu0 %v1097
        %v1099 = vpop.xlane.xlu0 %1098
        %v1100 = vsel %vm1084, %v1033, -inf
        %1101 = vmax.xlane.f32.xlu0 %v1100
        %v1102 = vpop.xlane.xlu0 %1101
        %v1103 = vsel %vm1084, %v1057, -inf
        %1104 = vmax.xlane.f32.xlu0 %v1103
        %v1105 = vpop.xlane.xlu0 %1104
        %v1106 = vsel %vm1084, %v1081, -inf
        %1107 = vmax.xlane.f32.xlu0 %v1106
        %v1108 = vpop.xlane.xlu0 %1107
        %v1109 = vsub.f32 %v913, %v1087
        %v1110 = vsub.f32 %v937, %v1090
        %v1111 = vsub.f32 %v961, %v1093
        %v1112 = vsub.f32 %v985, %v1096
        %v1113 = vsub.f32 %v1009, %v1099
        %v1114 = vsub.f32 %v1033, %v1102
        %v1115 = vsub.f32 %v1057, %v1105
        %v1116 = vsub.f32 %v1081, %v1108
        %v1117 = vmul.f32 %v1109, 1.442695
        %v1118 = vpow.pop %v1117
        %v1119 = vmul.f32 %v1110, 1.442695
        %v1120 = vpow.pop %v1119
        %v1121 = vmul.f32 %v1111, 1.442695
        %v1122 = vpow.pop %v1121
        %v1123 = vmul.f32 %v1112, 1.442695
        %v1124 = vpow.pop %v1123
        %v1125 = vmul.f32 %v1113, 1.442695
        %v1126 = vpow.pop %v1125
        %v1127 = vmul.f32 %v1114, 1.442695
        %v1128 = vpow.pop %v1127
        %v1129 = vmul.f32 %v1115, 1.442695
        %v1130 = vpow.pop %v1129
        %v1131 = vmul.f32 %v1116, 1.442695
        %v1132 = vpow.pop %v1131
        %v1133 = vsel %vm1084, %v1118, 0.0
        %1134 = vadd.xlane.f32.xlu0 %v1133
        %v1135 = vpop.xlane.xlu0 %1134
        %v1136 = vsel %vm1084, %v1120, 0.0
        %1137 = vadd.xlane.f32.xlu0 %v1136
        %v1138 = vpop.xlane.xlu0 %1137
        %v1139 = vsel %vm1084, %v1122, 0.0
        %1140 = vadd.xlane.f32.xlu0 %v1139
        %v1141 = vpop.xlane.xlu0 %1140
        %v1142 = vsel %vm1084, %v1124, 0.0
        %1143 = vadd.xlane.f32.xlu0 %v1142
        %v1144 = vpop.xlane.xlu0 %1143
        %v1145 = vsel %vm1084, %v1126, 0.0
        %1146 = vadd.xlane.f32.xlu0 %v1145
        %v1147 = vpop.xlane.xlu0 %1146
        %v1148 = vsel %vm1084, %v1128, 0.0
        %1149 = vadd.xlane.f32.xlu0 %v1148
        %v1150 = vpop.xlane.xlu0 %1149
        %v1151 = vsel %vm1084, %v1130, 0.0
        %1152 = vadd.xlane.f32.xlu0 %v1151
        %v1153 = vpop.xlane.xlu0 %1152
        %v1154 = vsel %vm1084, %v1132, 0.0
        %1155 = vadd.xlane.f32.xlu0 %v1154
        %v1156 = vpop.xlane.xlu0 %1155
        %v1157 = vrcp.pop %v1135
        %v1158 = vrcp.pop %v1138
        %v1159 = vrcp.pop %v1141
        %v1160 = vrcp.pop %v1144
        %v1161 = vrcp.pop %v1147
        %v1162 = vrcp.pop %v1150
        %v1163 = vrcp.pop %v1153
        %v1164 = vrcp.pop %v1156
        %v1165 = vmul.f32 %v1118, %v1157
        %v1166 = vmul.f32 %v1120, %v1158
        %v1167 = vmul.f32 %v1122, %v1159
        %v1168 = vmul.f32 %v1124, %v1160
        %v1169 = vmul.f32 %v1126, %v1161
        %v1170 = vmul.f32 %v1128, %v1162
        %v1171 = vmul.f32 %v1130, %v1163
        %v1172 = vmul.f32 %v1132, %v1164
        %v1173 = vpack.c.bf16 %v1165, %v1165
        %v1174 = vpack.c.bf16 %v1166, %v1166
        %v1175 = vpack.c.bf16 %v1167, %v1167
        %v1176 = vpack.c.bf16 %v1168, %v1168
        %v1177 = vpack.c.bf16 %v1169, %v1169
        %v1178 = vpack.c.bf16 %v1170, %v1170
        %v1179 = vpack.c.bf16 %v1171, %v1171
        %v1180 = vpack.c.bf16 %v1172, %v1172
        %v1181 = vpack.c.bf16 %v839, %v839
        %v1182 = vpack.c.bf16 %v841, %v841
        %v1183 = vpack.c.bf16 %v866, %v866
        %v1184 = vpack.c.bf16 %v868, %v868
        %v1185 = vpack.c.bf16 %v872, %v872
        %v1186 = vpack.c.bf16 %v874, %v874
        %v1187 = vpack.c.bf16 %v878, %v878
        %v1188 = vpack.c.bf16 %v880, %v880
        %v1190 = vsel %vm1084, %v1173, 0
        %vm1192 = vcmask 1043456
        %v1194 = vsel %vm1192, %v1181, 0
        %1196 = vmatpush.bf16.msra.mxu0 0
        %1197 = vmatpush.bf16.msra.mxu0 0
        %1198 = vmatpush.bf16.msra.mxu0 0
        %1199 = vmatpush.bf16.msra.mxu0 0
        %1200 = vmatpush.bf16.msra.mxu0 0
        %1201 = vmatpush.bf16.msra.mxu0 0
        %1202 = vmatpush.bf16.msra.mxu0 0
        %1203 = vmatpush.bf16.msra.mxu0 %v1194
        %1204 = vmatmul.bf16.gmra.mxu0 %v1190
        %v1205 = vpop.f32.mrf.mxu0
        %v1206 = vadd.f32 0.0, %v1205
        %v1207 = vpop.f32.mrf.mxu0
        %1208 = vdwg.mxu0
        %v1210 = vsel %vm1084, %v1174, 0
        %v1213 = vsel %vm1192, %v1182, 0
        %1215 = vmatpush.bf16.msra.mxu0 0
        %1216 = vmatpush.bf16.msra.mxu0 0
        %1217 = vmatpush.bf16.msra.mxu0 0
        %1218 = vmatpush.bf16.msra.mxu0 0
        %1219 = vmatpush.bf16.msra.mxu0 0
        %1220 = vmatpush.bf16.msra.mxu0 0
        %1221 = vmatpush.bf16.msra.mxu0 0
        %1222 = vmatpush.bf16.msra.mxu0 %v1213
        %1223 = vmatmul.bf16.gmra.mxu0 %v1210
        %v1224 = vpop.f32.mrf.mxu0
        %v1225 = vadd.f32 0.0, %v1224
        %v1226 = vpop.f32.mrf.mxu0
        %1227 = vdwg.mxu0
        %v1229 = vsel %vm1084, %v1175, 0
        %v1232 = vsel %vm1192, %v1183, 0
        %1234 = vmatpush.bf16.msra.mxu0 0
        %1235 = vmatpush.bf16.msra.mxu0 0
        %1236 = vmatpush.bf16.msra.mxu0 0
        %1237 = vmatpush.bf16.msra.mxu0 0
        %1238 = vmatpush.bf16.msra.mxu0 0
        %1239 = vmatpush.bf16.msra.mxu0 0
        %1240 = vmatpush.bf16.msra.mxu0 0
        %1241 = vmatpush.bf16.msra.mxu0 %v1232
        %1242 = vmatmul.bf16.gmra.mxu0 %v1229
        %v1243 = vpop.f32.mrf.mxu0
        %v1244 = vadd.f32 0.0, %v1243
        %v1245 = vpop.f32.mrf.mxu0
        %1246 = vdwg.mxu0
        %v1248 = vsel %vm1084, %v1176, 0
        %v1251 = vsel %vm1192, %v1184, 0
        %1253 = vmatpush.bf16.msra.mxu0 0
        %1254 = vmatpush.bf16.msra.mxu0 0
        %1255 = vmatpush.bf16.msra.mxu0 0
        %1256 = vmatpush.bf16.msra.mxu0 0
        %1257 = vmatpush.bf16.msra.mxu0 0
        %1258 = vmatpush.bf16.msra.mxu0 0
        %1259 = vmatpush.bf16.msra.mxu0 0
        %1260 = vmatpush.bf16.msra.mxu0 %v1251
        %1261 = vmatmul.bf16.gmra.mxu0 %v1248
        %v1262 = vpop.f32.mrf.mxu0
        %v1263 = vadd.f32 0.0, %v1262
        %v1264 = vpop.f32.mrf.mxu0
        %1265 = vdwg.mxu0
        %v1267 = vsel %vm1084, %v1177, 0
        %v1270 = vsel %vm1192, %v1185, 0
        %1272 = vmatpush.bf16.msra.mxu0 0
        %1273 = vmatpush.bf16.msra.mxu0 0
        %1274 = vmatpush.bf16.msra.mxu0 0
        %1275 = vmatpush.bf16.msra.mxu0 0
        %1276 = vmatpush.bf16.msra.mxu0 0
        %1277 = vmatpush.bf16.msra.mxu0 0
        %1278 = vmatpush.bf16.msra.mxu0 0
        %1279 = vmatpush.bf16.msra.mxu0 %v1270
        %1280 = vmatmul.bf16.gmra.mxu0 %v1267
        %v1281 = vpop.f32.mrf.mxu0
        %v1282 = vadd.f32 0.0, %v1281
        %v1283 = vpop.f32.mrf.mxu0
        %1284 = vdwg.mxu0
        %v1286 = vsel %vm1084, %v1178, 0
        %v1289 = vsel %vm1192, %v1186, 0
        %1291 = vmatpush.bf16.msra.mxu0 0
        %1292 = vmatpush.bf16.msra.mxu0 0
        %1293 = vmatpush.bf16.msra.mxu0 0
        %1294 = vmatpush.bf16.msra.mxu0 0
        %1295 = vmatpush.bf16.msra.mxu0 0
        %1296 = vmatpush.bf16.msra.mxu0 0
        %1297 = vmatpush.bf16.msra.mxu0 0
        %1298 = vmatpush.bf16.msra.mxu0 %v1289
        %1299 = vmatmul.bf16.gmra.mxu0 %v1286
        %v1300 = vpop.f32.mrf.mxu0
        %v1301 = vadd.f32 0.0, %v1300
        %v1302 = vpop.f32.mrf.mxu0
        %1303 = vdwg.mxu0
        %v1305 = vsel %vm1084, %v1179, 0
        %v1308 = vsel %vm1192, %v1187, 0
        %1310 = vmatpush.bf16.msra.mxu0 0
        %1311 = vmatpush.bf16.msra.mxu0 0
        %1312 = vmatpush.bf16.msra.mxu0 0
        %1313 = vmatpush.bf16.msra.mxu0 0
        %1314 = vmatpush.bf16.msra.mxu0 0
        %1315 = vmatpush.bf16.msra.mxu0 0
        %1316 = vmatpush.bf16.msra.mxu0 0
        %1317 = vmatpush.bf16.msra.mxu0 %v1308
        %1318 = vmatmul.bf16.gmra.mxu0 %v1305
        %v1319 = vpop.f32.mrf.mxu0
        %v1320 = vadd.f32 0.0, %v1319
        %v1321 = vpop.f32.mrf.mxu0
        %1322 = vdwg.mxu0
        %v1324 = vsel %vm1084, %v1180, 0
        %v1327 = vsel %vm1192, %v1188, 0
        %1329 = vmatpush.bf16.msra.mxu0 0
        %1330 = vmatpush.bf16.msra.mxu0 0
        %1331 = vmatpush.bf16.msra.mxu0 0
        %1332 = vmatpush.bf16.msra.mxu0 0
        %1333 = vmatpush.bf16.msra.mxu0 0
        %1334 = vmatpush.bf16.msra.mxu0 0
        %1335 = vmatpush.bf16.msra.mxu0 0
        %1336 = vmatpush.bf16.msra.mxu0 %v1327
        %1337 = vmatmul.bf16.gmra.mxu0 %v1324
        %v1338 = vpop.f32.mrf.mxu0
        %v1339 = vadd.f32 0.0, %v1338
        %v1340 = vpop.f32.mrf.mxu0
        %1341 = vdwg.mxu0
        %1344 = vrot.lane.b32.xlu0 %v1244, 16
        %v1345 = vpop.permute.xlu0 %1344
        %1346 = vrot.lane.b32.xlu0 %v1263, 16
        %v1347 = vpop.permute.xlu0 %1346
        %1352 = vrot.lane.b32.xlu0 %v1282, 32
        %v1353 = vpop.permute.xlu0 %1352
        %1354 = vrot.lane.b32.xlu0 %v1301, 32
        %v1355 = vpop.permute.xlu0 %1354
        %1360 = vrot.lane.b32.xlu0 %v1320, 48
        %v1361 = vpop.permute.xlu0 %1360
        %1362 = vrot.lane.b32.xlu0 %v1339, 48
        %v1363 = vpop.permute.xlu0 %1362
        %v1366 = vsel %vm896, %v1206, %v1345
        %v1367 = vsel %vm896, %v1225, %v1347
        %vm1368 = vcmask 261120
        %v1369 = vsel %vm1368, %v1366, %v1353
        %v1370 = vsel %vm1368, %v1367, %v1355
        %vm1371 = vcmask 392192
        %v1372 = vsel %vm1371, %v1369, %v1361
        %v1373 = vsel %vm1371, %v1370, %v1363
        %v1374 = vld [vmem:[%s680] sm:$0xf]
        %v1375 = vld [vmem:[%s680 + $0x4] sm:$0xf]
        %v1376 = vld [vmem:[%s680 + $0x8] sm:$0xf]
        %v1377 = vld [vmem:[%s680 + $0xc] sm:$0xf]
        %v1378 = vld [vmem:[%s680 + $0x10] sm:$0xf]
        %v1379 = vld [vmem:[%s680 + $0x14] sm:$0xf]
        %v1380 = vld [vmem:[%s680 + $0x18] sm:$0xf]
        %v1381 = vld [vmem:[%s680 + $0x1c] sm:$0xf]
        %v1382 = vpack.c.bf16 %v1373, %v1372
        %v1383 = vld [vmem:[%s683] sm:$0x1]
        %v1385 = vperm.slane %v1383, 0
        %v1395 = vunpack.c.l.b16 %v1374
        %v1396 = vunpack.c.l.b16 %v1375
        %v1397 = vunpack.c.l.b16 %v1376
        %v1398 = vunpack.c.l.b16 %v1377
        %v1399 = vunpack.c.l.b16 %v1378
        %v1400 = vunpack.c.l.b16 %v1379
        %v1401 = vunpack.c.l.b16 %v1380
        %v1402 = vunpack.c.l.b16 %v1381
        %v1403 = vpack.c.b16 %v1396, %v1395
        %v1404 = vpack.c.b16 %v1398, %v1397
        %v1405 = vpack.c.b16 %v1400, %v1399
        %v1406 = vpack.c.b16 %v1402, %v1401
        %v1412 = vsel %vm811, %v1382, 0
        %1414 = vmatpush.bf16.msra.mxu0 0
        %1415 = vmatpush.bf16.msra.mxu0 0
        %1416 = vmatpush.bf16.msra.mxu0 0
        %1417 = vmatpush.bf16.msra.mxu0 0
        %1418 = vmatpush.bf16.msra.mxu0 %v1406
        %1419 = vmatpush.bf16.msra.mxu0 %v1405
        %1420 = vmatpush.bf16.msra.mxu0 %v1404
        %1421 = vmatpush.bf16.msra.mxu0 %v1403
        %1422 = vmatmul.bf16.gmra.mxu0 %v1412
        %v1423 = vpop.f32.mrf.mxu0
        %v1424 = vadd.f32 %v1385, %v1423
        %v1425 = vpop.f32.mrf.mxu0
        %v1426 = vadd.f32 %v1385, %v1425
        %1427 = vdwg.mxu0
        %v1428 = vadd.f32 %v754, %v1424
        %v1429 = vadd.f32 %v755, %v1426
        %v1430 = vld [vmem:[%s686] sm:$0x1]
        %v1431 = vld [vmem:[%s689] sm:$0x1]
        %v1432 = vsel %vm811, %v1428, 0.0
        %1433 = vadd.xlane.f32.xlu0 %v1432
        %v1434 = vpop.xlane.xlu0 %1433
        %v1435 = vsel %vm811, %v1429, 0.0
        %1436 = vadd.xlane.f32.xlu0 %v1435
        %v1437 = vpop.xlane.xlu0 %1436
        %v1438 = vrcp.pop 64.0
        %v1439 = vmul.f32 64.0, %v1438
        %v1440 = vsub.f32 1.0, %v1439
        %v1441 = vmul.f32 %v1438, %v1440
        %v1442 = vadd.f32 %v1438, %v1441
        %vm1443 = vweird.f32 %v1438
        %v1444 = vsel %vm1443, %v1438, %v1442
        %v1445 = vmul.f32 %v1434, %v1444
        %v1446 = vmul.f32 %v1437, %v1444
        %v1447 = vsub.f32 %v1428, %v1445
        %v1448 = vsub.f32 %v1429, %v1446
        %v1449 = vmul.f32 %v1447, %v1447
        %v1450 = vmul.f32 %v1448, %v1448
        %v1451 = vsel %vm811, %v1449, 0.0
        %1452 = vadd.xlane.f32.xlu0 %v1451
        %v1453 = vpop.xlane.xlu0 %1452
        %v1454 = vsel %vm811, %v1450, 0.0
        %1455 = vadd.xlane.f32.xlu0 %v1454
        %v1456 = vpop.xlane.xlu0 %1455
        %v1457 = vmul.f32 %v1453, %v1444
        %v1458 = vmul.f32 %v1456, %v1444
        %v1459 = vadd.f32 %v1457, 1e-05
        %v1460 = vadd.f32 %v1458, 1e-05
        %v1461 = vrsqrt.pop %v1459
        %v1462 = vmul.f32 %v1461, %v1459
        %v1463 = vmul.f32 %v1462, %v1461
        %v1464 = vmul.f32 0.5, %v1463
        %v1465 = vsub.f32 1.5, %v1464
        %v1466 = vmul.f32 %v1461, %v1465
        %vm1467 = vweird.f32 %v1459
        %vm1468 = vweird.f32 %v1461
        %vm1469 = vmor %vm1467, %vm1468
        %v1470 = vsel %vm1469, %v1461, %v1466
        %v1471 = vrsqrt.pop %v1460
        %v1472 = vmul.f32 %v1471, %v1460
        %v1473 = vmul.f32 %v1472, %v1471
        %v1474 = vmul.f32 0.5, %v1473
        %v1475 = vsub.f32 1.5, %v1474
        %v1476 = vmul.f32 %v1471, %v1475
        %vm1477 = vweird.f32 %v1460
        %vm1478 = vweird.f32 %v1471
        %vm1479 = vmor %vm1477, %vm1478
        %v1480 = vsel %vm1479, %v1471, %v1476
        %v1481 = vmul.f32 %v1447, %v1470
        %v1482 = vmul.f32 %v1448, %v1480
        %v1484 = vperm.slane %v1430, 0
        %v1486 = vmul.f32 %v1481, %v1484
        %v1487 = vmul.f32 %v1482, %v1484
        %v1489 = vperm.slane %v1431, 0
        %v1491 = vadd.f32 %v1486, %v1489
        %v1492 = vadd.f32 %v1487, %v1489
        %v1493 = vld [vmem:[%s694] sm:$0xff]
        %v1494 = vld [vmem:[%s694 + $0x8] sm:$0xff]
        %v1495 = vld [vmem:[%s694 + $0x10] sm:$0xff]
        %v1496 = vld [vmem:[%s694 + $0x18] sm:$0xff]
        %v1497 = vld [vmem:[%s694 + $0x20] sm:$0xff]
        %v1498 = vld [vmem:[%s694 + $0x28] sm:$0xff]
        %v1499 = vld [vmem:[%s694 + $0x30] sm:$0xff]
        %v1500 = vld [vmem:[%s694 + $0x38] sm:$0xff]
        %v1501 = vld [vmem:[%s694 + $0x40] sm:$0xff]
        %v1502 = vld [vmem:[%s694 + $0x48] sm:$0xff]
        %v1503 = vld [vmem:[%s694 + $0x50] sm:$0xff]
        %v1504 = vld [vmem:[%s694 + $0x58] sm:$0xff]
        %v1505 = vld [vmem:[%s694 + $0x60] sm:$0xff]
        %v1506 = vld [vmem:[%s694 + $0x68] sm:$0xff]
        %v1507 = vld [vmem:[%s694 + $0x70] sm:$0xff]
        %v1508 = vld [vmem:[%s694 + $0x78] sm:$0xff]
        %v1509 = vld [vmem:[%s694 + $0x80] sm:$0xff]
        %v1510 = vld [vmem:[%s694 + $0x88] sm:$0xff]
        %v1511 = vld [vmem:[%s694 + $0x90] sm:$0xff]
        %v1512 = vld [vmem:[%s694 + $0x98] sm:$0xff]
        %v1513 = vld [vmem:[%s694 + $0xa0] sm:$0xff]
        %v1514 = vld [vmem:[%s694 + $0xa8] sm:$0xff]
        %v1515 = vld [vmem:[%s694 + $0xb0] sm:$0xff]
        %v1516 = vld [vmem:[%s694 + $0xb8] sm:$0xff]
        %v1517 = vld [vmem:[%s694 + $0xc0] sm:$0xff]
        %v1518 = vld [vmem:[%s694 + $0xc8] sm:$0xff]
        %v1519 = vld [vmem:[%s694 + $0xd0] sm:$0xff]
        %v1520 = vld [vmem:[%s694 + $0xd8] sm:$0xff]
        %v1521 = vld [vmem:[%s694 + $0xe0] sm:$0xff]
        %v1522 = vld [vmem:[%s694 + $0xe8] sm:$0xff]
        %v1523 = vld [vmem:[%s694 + $0xf0] sm:$0xff]
        %v1524 = vld [vmem:[%s694 + $0xf8] sm:$0xff]
        %v1525 = vld [vmem:[%s694 + $0x100] sm:$0xff]
        %v1526 = vld [vmem:[%s694 + $0x108] sm:$0xff]
        %v1527 = vld [vmem:[%s694 + $0x110] sm:$0xff]
        %v1528 = vld [vmem:[%s694 + $0x118] sm:$0xff]
        %v1529 = vld [vmem:[%s694 + $0x120] sm:$0xff]
        %v1530 = vld [vmem:[%s694 + $0x128] sm:$0xff]
        %v1531 = vld [vmem:[%s694 + $0x130] sm:$0xff]
        %v1532 = vld [vmem:[%s694 + $0x138] sm:$0xff]
        %v1533 = vld [vmem:[%s694 + $0x140] sm:$0xff]
        %v1534 = vld [vmem:[%s694 + $0x148] sm:$0xff]
        %v1535 = vld [vmem:[%s694 + $0x150] sm:$0xff]
        %v1536 = vld [vmem:[%s694 + $0x158] sm:$0xff]
        %v1537 = vld [vmem:[%s694 + $0x160] sm:$0xff]
        %v1538 = vld [vmem:[%s694 + $0x168] sm:$0xff]
        %v1539 = vld [vmem:[%s694 + $0x170] sm:$0xff]
        %v1540 = vld [vmem:[%s694 + $0x178] sm:$0xff]
        %v1541 = vld [vmem:[%s694 + $0x180] sm:$0xff]
        %v1542 = vld [vmem:[%s694 + $0x188] sm:$0xff]
        %v1543 = vld [vmem:[%s694 + $0x190] sm:$0xff]
        %v1544 = vld [vmem:[%s694 + $0x198] sm:$0xff]
        %v1545 = vld [vmem:[%s694 + $0x1a0] sm:$0xff]
        %v1546 = vld [vmem:[%s694 + $0x1a8] sm:$0xff]
        %v1547 = vld [vmem:[%s694 + $0x1b0] sm:$0xff]
        %v1548 = vld [vmem:[%s694 + $0x1b8] sm:$0xff]
        %v1549 = vld [vmem:[%s694 + $0x1c0] sm:$0xff]
        %v1550 = vld [vmem:[%s694 + $0x1c8] sm:$0xff]
        %v1551 = vld [vmem:[%s694 + $0x1d0] sm:$0xff]
        %v1552 = vld [vmem:[%s694 + $0x1d8] sm:$0xff]
        %v1553 = vld [vmem:[%s694 + $0x1e0] sm:$0xff]
        %v1554 = vld [vmem:[%s694 + $0x1e8] sm:$0xff]
        %v1555 = vld [vmem:[%s694 + $0x1f0] sm:$0xff]
        %v1556 = vld [vmem:[%s694 + $0x1f8] sm:$0xff]
        %v1557 = vpack.c.bf16 %v1492, %v1491
        %v1558 = vld [vmem:[%s698] sm:$0xff]
        %v1559 = vld [vmem:[%s698 + $0x8] sm:$0xff]
        %v1562 = vperm.slane %v1558, 0
        %v1563 = vperm.slane %v1558, 1
        %v1564 = vperm.slane %v1558, 2
        %v1565 = vperm.slane %v1558, 3
        %v1566 = vperm.slane %v1558, 4
        %v1567 = vperm.slane %v1558, 5
        %v1568 = vperm.slane %v1558, 6
        %v1569 = vperm.slane %v1558, 7
        %v1570 = vperm.slane %v1559, 0
        %v1571 = vperm.slane %v1559, 1
        %v1572 = vperm.slane %v1559, 2
        %v1573 = vperm.slane %v1559, 3
        %v1574 = vperm.slane %v1559, 4
        %v1575 = vperm.slane %v1559, 5
        %v1576 = vperm.slane %v1559, 6
        %v1577 = vperm.slane %v1559, 7
        %v1658 = vunpack.c.l.b16 %v1493
        %v1659 = vunpack.c.h.b16 %v1493
        %v1660 = vunpack.c.l.b16 %v1494
        %v1661 = vunpack.c.h.b16 %v1494
        %v1662 = vunpack.c.l.b16 %v1495
        %v1663 = vunpack.c.h.b16 %v1495
        %v1664 = vunpack.c.l.b16 %v1496
        %v1665 = vunpack.c.h.b16 %v1496
        %v1666 = vunpack.c.l.b16 %v1497
        %v1667 = vunpack.c.h.b16 %v1497
        %v1668 = vunpack.c.l.b16 %v1498
        %v1669 = vunpack.c.h.b16 %v1498
        %v1670 = vunpack.c.l.b16 %v1499
        %v1671 = vunpack.c.h.b16 %v1499
        %v1672 = vunpack.c.l.b16 %v1500
        %v1673 = vunpack.c.h.b16 %v1500
        %v1674 = vunpack.c.l.b16 %v1501
        %v1675 = vunpack.c.h.b16 %v1501
        %v1676 = vunpack.c.l.b16 %v1502
        %v1677 = vunpack.c.h.b16 %v1502
        %v1678 = vunpack.c.l.b16 %v1503
        %v1679 = vunpack.c.h.b16 %v1503
        %v1680 = vunpack.c.l.b16 %v1504
        %v1681 = vunpack.c.h.b16 %v1504
        %v1682 = vunpack.c.l.b16 %v1505
        %v1683 = vunpack.c.h.b16 %v1505
        %v1684 = vunpack.c.l.b16 %v1506
        %v1685 = vunpack.c.h.b16 %v1506
        %v1686 = vunpack.c.l.b16 %v1507
        %v1687 = vunpack.c.h.b16 %v1507
        %v1688 = vunpack.c.l.b16 %v1508
        %v1689 = vunpack.c.h.b16 %v1508
        %v1690 = vunpack.c.l.b16 %v1509
        %v1691 = vunpack.c.h.b16 %v1509
        %v1692 = vunpack.c.l.b16 %v1510
        %v1693 = vunpack.c.h.b16 %v1510
        %v1694 = vunpack.c.l.b16 %v1511
        %v1695 = vunpack.c.h.b16 %v1511
        %v1696 = vunpack.c.l.b16 %v1512
        %v1697 = vunpack.c.h.b16 %v1512
        %v1698 = vunpack.c.l.b16 %v1513
        %v1699 = vunpack.c.h.b16 %v1513
        %v1700 = vunpack.c.l.b16 %v1514
        %v1701 = vunpack.c.h.b16 %v1514
        %v1702 = vunpack.c.l.b16 %v1515
        %v1703 = vunpack.c.h.b16 %v1515
        %v1704 = vunpack.c.l.b16 %v1516
        %v1705 = vunpack.c.h.b16 %v1516
        %v1706 = vunpack.c.l.b16 %v1517
        %v1707 = vunpack.c.h.b16 %v1517
        %v1708 = vunpack.c.l.b16 %v1518
        %v1709 = vunpack.c.h.b16 %v1518
        %v1710 = vunpack.c.l.b16 %v1519
        %v1711 = vunpack.c.h.b16 %v1519
        %v1712 = vunpack.c.l.b16 %v1520
        %v1713 = vunpack.c.h.b16 %v1520
        %v1714 = vunpack.c.l.b16 %v1521
        %v1715 = vunpack.c.h.b16 %v1521
        %v1716 = vunpack.c.l.b16 %v1522
        %v1717 = vunpack.c.h.b16 %v1522
        %v1718 = vunpack.c.l.b16 %v1523
        %v1719 = vunpack.c.h.b16 %v1523
        %v1720 = vunpack.c.l.b16 %v1524
        %v1721 = vunpack.c.h.b16 %v1524
        %v1722 = vunpack.c.l.b16 %v1525
        %v1723 = vunpack.c.h.b16 %v1525
        %v1724 = vunpack.c.l.b16 %v1526
        %v1725 = vunpack.c.h.b16 %v1526
        %v1726 = vunpack.c.l.b16 %v1527
        %v1727 = vunpack.c.h.b16 %v1527
        %v1728 = vunpack.c.l.b16 %v1528
        %v1729 = vunpack.c.h.b16 %v1528
        %v1730 = vunpack.c.l.b16 %v1529
        %v1731 = vunpack.c.h.b16 %v1529
        %v1732 = vunpack.c.l.b16 %v1530
        %v1733 = vunpack.c.h.b16 %v1530
        %v1734 = vunpack.c.l.b16 %v1531
        %v1735 = vunpack.c.h.b16 %v1531
        %v1736 = vunpack.c.l.b16 %v1532
        %v1737 = vunpack.c.h.b16 %v1532
        %v1738 = vunpack.c.l.b16 %v1533
        %v1739 = vunpack.c.h.b16 %v1533
        %v1740 = vunpack.c.l.b16 %v1534
        %v1741 = vunpack.c.h.b16 %v1534
        %v1742 = vunpack.c.l.b16 %v1535
        %v1743 = vunpack.c.h.b16 %v1535
        %v1744 = vunpack.c.l.b16 %v1536
        %v1745 = vunpack.c.h.b16 %v1536
        %v1746 = vunpack.c.l.b16 %v1537
        %v1747 = vunpack.c.h.b16 %v1537
        %v1748 = vunpack.c.l.b16 %v1538
        %v1749 = vunpack.c.h.b16 %v1538
        %v1750 = vunpack.c.l.b16 %v1539
        %v1751 = vunpack.c.h.b16 %v1539
        %v1752 = vunpack.c.l.b16 %v1540
        %v1753 = vunpack.c.h.b16 %v1540
        %v1754 = vunpack.c.l.b16 %v1541
        %v1755 = vunpack.c.h.b16 %v1541
        %v1756 = vunpack.c.l.b16 %v1542
        %v1757 = vunpack.c.h.b16 %v1542
        %v1758 = vunpack.c.l.b16 %v1543
        %v1759 = vunpack.c.h.b16 %v1543
        %v1760 = vunpack.c.l.b16 %v1544
        %v1761 = vunpack.c.h.b16 %v1544
        %v1762 = vunpack.c.l.b16 %v1545
        %v1763 = vunpack.c.h.b16 %v1545
        %v1764 = vunpack.c.l.b16 %v1546
        %v1765 = vunpack.c.h.b16 %v1546
        %v1766 = vunpack.c.l.b16 %v1547
        %v1767 = vunpack.c.h.b16 %v1547
        %v1768 = vunpack.c.l.b16 %v1548
        %v1769 = vunpack.c.h.b16 %v1548
        %v1770 = vunpack.c.l.b16 %v1549
        %v1771 = vunpack.c.h.b16 %v1549
        %v1772 = vunpack.c.l.b16 %v1550
        %v1773 = vunpack.c.h.b16 %v1550
        %v1774 = vunpack.c.l.b16 %v1551
        %v1775 = vunpack.c.h.b16 %v1551
        %v1776 = vunpack.c.l.b16 %v1552
        %v1777 = vunpack.c.h.b16 %v1552
        %v1778 = vunpack.c.l.b16 %v1553
        %v1779 = vunpack.c.h.b16 %v1553
        %v1780 = vunpack.c.l.b16 %v1554
        %v1781 = vunpack.c.h.b16 %v1554
        %v1782 = vunpack.c.l.b16 %v1555
        %v1783 = vunpack.c.h.b16 %v1555
        %v1784 = vunpack.c.l.b16 %v1556
        %v1785 = vunpack.c.h.b16 %v1556
        %v1786 = vpack.c.b16 %v1674, %v1658
        %v1787 = vpack.c.b16 %v1675, %v1659
        %v1788 = vpack.c.b16 %v1676, %v1660
        %v1789 = vpack.c.b16 %v1677, %v1661
        %v1790 = vpack.c.b16 %v1678, %v1662
        %v1791 = vpack.c.b16 %v1679, %v1663
        %v1792 = vpack.c.b16 %v1680, %v1664
        %v1793 = vpack.c.b16 %v1681, %v1665
        %v1794 = vpack.c.b16 %v1682, %v1666
        %v1795 = vpack.c.b16 %v1683, %v1667
        %v1796 = vpack.c.b16 %v1684, %v1668
        %v1797 = vpack.c.b16 %v1685, %v1669
        %v1798 = vpack.c.b16 %v1686, %v1670
        %v1799 = vpack.c.b16 %v1687, %v1671
        %v1800 = vpack.c.b16 %v1688, %v1672
        %v1801 = vpack.c.b16 %v1689, %v1673
        %v1802 = vpack.c.b16 %v1706, %v1690
        %v1803 = vpack.c.b16 %v1707, %v1691
        %v1804 = vpack.c.b16 %v1708, %v1692
        %v1805 = vpack.c.b16 %v1709, %v1693
        %v1806 = vpack.c.b16 %v1710, %v1694
        %v1807 = vpack.c.b16 %v1711, %v1695
        %v1808 = vpack.c.b16 %v1712, %v1696
        %v1809 = vpack.c.b16 %v1713, %v1697
        %v1810 = vpack.c.b16 %v1714, %v1698
        %v1811 = vpack.c.b16 %v1715, %v1699
        %v1812 = vpack.c.b16 %v1716, %v1700
        %v1813 = vpack.c.b16 %v1717, %v1701
        %v1814 = vpack.c.b16 %v1718, %v1702
        %v1815 = vpack.c.b16 %v1719, %v1703
        %v1816 = vpack.c.b16 %v1720, %v1704
        %v1817 = vpack.c.b16 %v1721, %v1705
        %v1818 = vpack.c.b16 %v1738, %v1722
        %v1819 = vpack.c.b16 %v1739, %v1723
        %v1820 = vpack.c.b16 %v1740, %v1724
        %v1821 = vpack.c.b16 %v1741, %v1725
        %v1822 = vpack.c.b16 %v1742, %v1726
        %v1823 = vpack.c.b16 %v1743, %v1727
        %v1824 = vpack.c.b16 %v1744, %v1728
        %v1825 = vpack.c.b16 %v1745, %v1729
        %v1826 = vpack.c.b16 %v1746, %v1730
        %v1827 = vpack.c.b16 %v1747, %v1731
        %v1828 = vpack.c.b16 %v1748, %v1732
        %v1829 = vpack.c.b16 %v1749, %v1733
        %v1830 = vpack.c.b16 %v1750, %v1734
        %v1831 = vpack.c.b16 %v1751, %v1735
        %v1832 = vpack.c.b16 %v1752, %v1736
        %v1833 = vpack.c.b16 %v1753, %v1737
        %v1834 = vpack.c.b16 %v1770, %v1754
        %v1835 = vpack.c.b16 %v1771, %v1755
        %v1836 = vpack.c.b16 %v1772, %v1756
        %v1837 = vpack.c.b16 %v1773, %v1757
        %v1838 = vpack.c.b16 %v1774, %v1758
        %v1839 = vpack.c.b16 %v1775, %v1759
        %v1840 = vpack.c.b16 %v1776, %v1760
        %v1841 = vpack.c.b16 %v1777, %v1761
        %v1842 = vpack.c.b16 %v1778, %v1762
        %v1843 = vpack.c.b16 %v1779, %v1763
        %v1844 = vpack.c.b16 %v1780, %v1764
        %v1845 = vpack.c.b16 %v1781, %v1765
        %v1846 = vpack.c.b16 %v1782, %v1766
        %v1847 = vpack.c.b16 %v1783, %v1767
        %v1848 = vpack.c.b16 %v1784, %v1768
        %v1849 = vpack.c.b16 %v1785, %v1769
        %v1915 = vsel %vm811, %v1557, 0
        %1917 = vmatpush.bf16.msra.mxu0 0
        %1918 = vmatpush.bf16.msra.mxu0 0
        %1919 = vmatpush.bf16.msra.mxu0 0
        %1920 = vmatpush.bf16.msra.mxu0 0
        %1921 = vmatpush.bf16.msra.mxu0 %v1834
        %1922 = vmatpush.bf16.msra.mxu0 %v1818
        %1923 = vmatpush.bf16.msra.mxu0 %v1802
        %1924 = vmatpush.bf16.msra.mxu0 %v1786
        %1925 = vmatmul.bf16.gmra.mxu0 %v1915
        %v1926 = vpop.f32.mrf.mxu0
        %v1927 = vadd.f32 %v1562, %v1926
        %v1928 = vpop.f32.mrf.mxu0
        %v1929 = vadd.f32 %v1562, %v1928
        %1930 = vdwg.mxu0
        %1931 = vmatpush.bf16.msra.mxu0 0
        %1932 = vmatpush.bf16.msra.mxu0 0
        %1933 = vmatpush.bf16.msra.mxu0 0
        %1934 = vmatpush.bf16.msra.mxu0 0
        %1935 = vmatpush.bf16.msra.mxu0 %v1835
        %1936 = vmatpush.bf16.msra.mxu0 %v1819
        %1937 = vmatpush.bf16.msra.mxu0 %v1803
        %1938 = vmatpush.bf16.msra.mxu0 %v1787
        %1939 = vmatmul.bf16.gmra.mxu0 %v1915
        %v1940 = vpop.f32.mrf.mxu0
        %v1941 = vadd.f32 %v1563, %v1940
        %v1942 = vpop.f32.mrf.mxu0
        %v1943 = vadd.f32 %v1563, %v1942
        %1944 = vdwg.mxu0
        %1945 = vmatpush.bf16.msra.mxu0 0
        %1946 = vmatpush.bf16.msra.mxu0 0
        %1947 = vmatpush.bf16.msra.mxu0 0
        %1948 = vmatpush.bf16.msra.mxu0 0
        %1949 = vmatpush.bf16.msra.mxu0 %v1836
        %1950 = vmatpush.bf16.msra.mxu0 %v1820
        %1951 = vmatpush.bf16.msra.mxu0 %v1804
        %1952 = vmatpush.bf16.msra.mxu0 %v1788
        %1953 = vmatmul.bf16.gmra.mxu0 %v1915
        %v1954 = vpop.f32.mrf.mxu0
        %v1955 = vadd.f32 %v1564, %v1954
        %v1956 = vpop.f32.mrf.mxu0
        %v1957 = vadd.f32 %v1564, %v1956
        %1958 = vdwg.mxu0
        %1959 = vmatpush.bf16.msra.mxu0 0
        %1960 = vmatpush.bf16.msra.mxu0 0
        %1961 = vmatpush.bf16.msra.mxu0 0
        %1962 = vmatpush.bf16.msra.mxu0 0
        %1963 = vmatpush.bf16.msra.mxu0 %v1837
        %1964 = vmatpush.bf16.msra.mxu0 %v1821
        %1965 = vmatpush.bf16.msra.mxu0 %v1805
        %1966 = vmatpush.bf16.msra.mxu0 %v1789
        %1967 = vmatmul.bf16.gmra.mxu0 %v1915
        %v1968 = vpop.f32.mrf.mxu0
        %v1969 = vadd.f32 %v1565, %v1968
        %v1970 = vpop.f32.mrf.mxu0
        %v1971 = vadd.f32 %v1565, %v1970
        %1972 = vdwg.mxu0
        %1973 = vmatpush.bf16.msra.mxu0 0
        %1974 = vmatpush.bf16.msra.mxu0 0
        %1975 = vmatpush.bf16.msra.mxu0 0
        %1976 = vmatpush.bf16.msra.mxu0 0
        %1977 = vmatpush.bf16.msra.mxu0 %v1838
        %1978 = vmatpush.bf16.msra.mxu0 %v1822
        %1979 = vmatpush.bf16.msra.mxu0 %v1806
        %1980 = vmatpush.bf16.msra.mxu0 %v1790
        %1981 = vmatmul.bf16.gmra.mxu0 %v1915
        %v1982 = vpop.f32.mrf.mxu0
        %v1983 = vadd.f32 %v1566, %v1982
        %v1984 = vpop.f32.mrf.mxu0
        %v1985 = vadd.f32 %v1566, %v1984
        %1986 = vdwg.mxu0
        %1987 = vmatpush.bf16.msra.mxu0 0
        %1988 = vmatpush.bf16.msra.mxu0 0
        %1989 = vmatpush.bf16.msra.mxu0 0
        %1990 = vmatpush.bf16.msra.mxu0 0
        %1991 = vmatpush.bf16.msra.mxu0 %v1839
        %1992 = vmatpush.bf16.msra.mxu0 %v1823
        %1993 = vmatpush.bf16.msra.mxu0 %v1807
        %1994 = vmatpush.bf16.msra.mxu0 %v1791
        %1995 = vmatmul.bf16.gmra.mxu0 %v1915
        %v1996 = vpop.f32.mrf.mxu0
        %v1997 = vadd.f32 %v1567, %v1996
        %v1998 = vpop.f32.mrf.mxu0
        %v1999 = vadd.f32 %v1567, %v1998
        %2000 = vdwg.mxu0
        %2001 = vmatpush.bf16.msra.mxu0 0
        %2002 = vmatpush.bf16.msra.mxu0 0
        %2003 = vmatpush.bf16.msra.mxu0 0
        %2004 = vmatpush.bf16.msra.mxu0 0
        %2005 = vmatpush.bf16.msra.mxu0 %v1840
        %2006 = vmatpush.bf16.msra.mxu0 %v1824
        %2007 = vmatpush.bf16.msra.mxu0 %v1808
        %2008 = vmatpush.bf16.msra.mxu0 %v1792
        %2009 = vmatmul.bf16.gmra.mxu0 %v1915
        %v2010 = vpop.f32.mrf.mxu0
        %v2011 = vadd.f32 %v1568, %v2010
        %v2012 = vpop.f32.mrf.mxu0
        %v2013 = vadd.f32 %v1568, %v2012
        %2014 = vdwg.mxu0
        %2015 = vmatpush.bf16.msra.mxu0 0
        %2016 = vmatpush.bf16.msra.mxu0 0
        %2017 = vmatpush.bf16.msra.mxu0 0
        %2018 = vmatpush.bf16.msra.mxu0 0
        %2019 = vmatpush.bf16.msra.mxu0 %v1841
        %2020 = vmatpush.bf16.msra.mxu0 %v1825
        %2021 = vmatpush.bf16.msra.mxu0 %v1809
        %2022 = vmatpush.bf16.msra.mxu0 %v1793
        %2023 = vmatmul.bf16.gmra.mxu0 %v1915
        %v2024 = vpop.f32.mrf.mxu0
        %v2025 = vadd.f32 %v1569, %v2024
        %v2026 = vpop.f32.mrf.mxu0
        %v2027 = vadd.f32 %v1569, %v2026
        %2028 = vdwg.mxu0
        %2029 = vmatpush.bf16.msra.mxu0 0
        %2030 = vmatpush.bf16.msra.mxu0 0
        %2031 = vmatpush.bf16.msra.mxu0 0
        %2032 = vmatpush.bf16.msra.mxu0 0
        %2033 = vmatpush.bf16.msra.mxu0 %v1842
        %2034 = vmatpush.bf16.msra.mxu0 %v1826
        %2035 = vmatpush.bf16.msra.mxu0 %v1810
        %2036 = vmatpush.bf16.msra.mxu0 %v1794
        %2037 = vmatmul.bf16.gmra.mxu0 %v1915
        %v2038 = vpop.f32.mrf.mxu0
        %v2039 = vadd.f32 %v1570, %v2038
        %v2040 = vpop.f32.mrf.mxu0
        %v2041 = vadd.f32 %v1570, %v2040
        %2042 = vdwg.mxu0
        %2043 = vmatpush.bf16.msra.mxu0 0
        %2044 = vmatpush.bf16.msra.mxu0 0
        %2045 = vmatpush.bf16.msra.mxu0 0
        %2046 = vmatpush.bf16.msra.mxu0 0
        %2047 = vmatpush.bf16.msra.mxu0 %v1843
        %2048 = vmatpush.bf16.msra.mxu0 %v1827
        %2049 = vmatpush.bf16.msra.mxu0 %v1811
        %2050 = vmatpush.bf16.msra.mxu0 %v1795
        %2051 = vmatmul.bf16.gmra.mxu0 %v1915
        %v2052 = vpop.f32.mrf.mxu0
        %v2053 = vadd.f32 %v1571, %v2052
        %v2054 = vpop.f32.mrf.mxu0
        %v2055 = vadd.f32 %v1571, %v2054
        %2056 = vdwg.mxu0
        %2057 = vmatpush.bf16.msra.mxu0 0
        %2058 = vmatpush.bf16.msra.mxu0 0
        %2059 = vmatpush.bf16.msra.mxu0 0
        %2060 = vmatpush.bf16.msra.mxu0 0
        %2061 = vmatpush.bf16.msra.mxu0 %v1844
        %2062 = vmatpush.bf16.msra.mxu0 %v1828
        %2063 = vmatpush.bf16.msra.mxu0 %v1812
        %2064 = vmatpush.bf16.msra.mxu0 %v1796
        %2065 = vmatmul.bf16.gmra.mxu0 %v1915
        %v2066 = vpop.f32.mrf.mxu0
        %v2067 = vadd.f32 %v1572, %v2066
        %v2068 = vpop.f32.mrf.mxu0
        %v2069 = vadd.f32 %v1572, %v2068
        %2070 = vdwg.mxu0
        %2071 = vmatpush.bf16.msra.mxu0 0
        %2072 = vmatpush.bf16.msra.mxu0 0
        %2073 = vmatpush.bf16.msra.mxu0 0
        %2074 = vmatpush.bf16.msra.mxu0 0
        %2075 = vmatpush.bf16.msra.mxu0 %v1845
        %2076 = vmatpush.bf16.msra.mxu0 %v1829
        %2077 = vmatpush.bf16.msra.mxu0 %v1813
        %2078 = vmatpush.bf16.msra.mxu0 %v1797
        %2079 = vmatmul.bf16.gmra.mxu0 %v1915
        %v2080 = vpop.f32.mrf.mxu0
        %v2081 = vadd.f32 %v1573, %v2080
        %v2082 = vpop.f32.mrf.mxu0
        %v2083 = vadd.f32 %v1573, %v2082
        %2084 = vdwg.mxu0
        %2085 = vmatpush.bf16.msra.mxu0 0
        %2086 = vmatpush.bf16.msra.mxu0 0
        %2087 = vmatpush.bf16.msra.mxu0 0
        %2088 = vmatpush.bf16.msra.mxu0 0
        %2089 = vmatpush.bf16.msra.mxu0 %v1846
        %2090 = vmatpush.bf16.msra.mxu0 %v1830
        %2091 = vmatpush.bf16.msra.mxu0 %v1814
        %2092 = vmatpush.bf16.msra.mxu0 %v1798
        %2093 = vmatmul.bf16.gmra.mxu0 %v1915
        %v2094 = vpop.f32.mrf.mxu0
        %v2095 = vadd.f32 %v1574, %v2094
        %v2096 = vpop.f32.mrf.mxu0
        %v2097 = vadd.f32 %v1574, %v2096
        %2098 = vdwg.mxu0
        %2099 = vmatpush.bf16.msra.mxu0 0
        %2100 = vmatpush.bf16.msra.mxu0 0
        %2101 = vmatpush.bf16.msra.mxu0 0
        %2102 = vmatpush.bf16.msra.mxu0 0
        %2103 = vmatpush.bf16.msra.mxu0 %v1847
        %2104 = vmatpush.bf16.msra.mxu0 %v1831
        %2105 = vmatpush.bf16.msra.mxu0 %v1815
        %2106 = vmatpush.bf16.msra.mxu0 %v1799
        %2107 = vmatmul.bf16.gmra.mxu0 %v1915
        %v2108 = vpop.f32.mrf.mxu0
        %v2109 = vadd.f32 %v1575, %v2108
        %v2110 = vpop.f32.mrf.mxu0
        %v2111 = vadd.f32 %v1575, %v2110
        %2112 = vdwg.mxu0
        %2113 = vmatpush.bf16.msra.mxu0 0
        %2114 = vmatpush.bf16.msra.mxu0 0
        %2115 = vmatpush.bf16.msra.mxu0 0
        %2116 = vmatpush.bf16.msra.mxu0 0
        %2117 = vmatpush.bf16.msra.mxu0 %v1848
        %2118 = vmatpush.bf16.msra.mxu0 %v1832
        %2119 = vmatpush.bf16.msra.mxu0 %v1816
        %2120 = vmatpush.bf16.msra.mxu0 %v1800
        %2121 = vmatmul.bf16.gmra.mxu0 %v1915
        %v2122 = vpop.f32.mrf.mxu0
        %v2123 = vadd.f32 %v1576, %v2122
        %v2124 = vpop.f32.mrf.mxu0
        %v2125 = vadd.f32 %v1576, %v2124
        %2126 = vdwg.mxu0
        %2127 = vmatpush.bf16.msra.mxu0 0
        %2128 = vmatpush.bf16.msra.mxu0 0
        %2129 = vmatpush.bf16.msra.mxu0 0
        %2130 = vmatpush.bf16.msra.mxu0 0
        %2131 = vmatpush.bf16.msra.mxu0 %v1849
        %2132 = vmatpush.bf16.msra.mxu0 %v1833
        %2133 = vmatpush.bf16.msra.mxu0 %v1817
        %2134 = vmatpush.bf16.msra.mxu0 %v1801
        %2135 = vmatmul.bf16.gmra.mxu0 %v1915
        %v2136 = vpop.f32.mrf.mxu0
        %v2137 = vadd.f32 %v1577, %v2136
        %v2138 = vpop.f32.mrf.mxu0
        %v2139 = vadd.f32 %v1577, %v2138
        %2140 = vdwg.mxu0
        %v2141 = vmax.f32 %v1927, 0.0
        %v2142 = vmax.f32 %v1941, 0.0
        %v2143 = vmax.f32 %v1955, 0.0
        %v2144 = vmax.f32 %v1969, 0.0
        %v2145 = vmax.f32 %v1983, 0.0
        %v2146 = vmax.f32 %v1997, 0.0
        %v2147 = vmax.f32 %v2011, 0.0
        %v2148 = vmax.f32 %v2025, 0.0
        %v2149 = vmax.f32 %v2039, 0.0
        %v2150 = vmax.f32 %v2053, 0.0
        %v2151 = vmax.f32 %v2067, 0.0
        %v2152 = vmax.f32 %v2081, 0.0
        %v2153 = vmax.f32 %v2095, 0.0
        %v2154 = vmax.f32 %v2109, 0.0
        %v2155 = vmax.f32 %v2123, 0.0
        %v2156 = vmax.f32 %v2137, 0.0
        %v2157 = vmax.f32 %v1929, 0.0
        %v2158 = vmax.f32 %v1943, 0.0
        %v2159 = vmax.f32 %v1957, 0.0
        %v2160 = vmax.f32 %v1971, 0.0
        %v2161 = vmax.f32 %v1985, 0.0
        %v2162 = vmax.f32 %v1999, 0.0
        %v2163 = vmax.f32 %v2013, 0.0
        %v2164 = vmax.f32 %v2027, 0.0
        %v2165 = vmax.f32 %v2041, 0.0
        %v2166 = vmax.f32 %v2055, 0.0
        %v2167 = vmax.f32 %v2069, 0.0
        %v2168 = vmax.f32 %v2083, 0.0
        %v2169 = vmax.f32 %v2097, 0.0
        %v2170 = vmax.f32 %v2111, 0.0
        %v2171 = vmax.f32 %v2125, 0.0
        %v2172 = vmax.f32 %v2139, 0.0
        %v2173 = vld [vmem:[%s703] sm:$0xf]
        %v2174 = vld [vmem:[%s703 + $0x4] sm:$0xf]
        %v2175 = vld [vmem:[%s703 + $0x8] sm:$0xf]
        %v2176 = vld [vmem:[%s703 + $0xc] sm:$0xf]
        %v2177 = vld [vmem:[%s703 + $0x10] sm:$0xf]
        %v2178 = vld [vmem:[%s703 + $0x14] sm:$0xf]
        %v2179 = vld [vmem:[%s703 + $0x18] sm:$0xf]
        %v2180 = vld [vmem:[%s703 + $0x1c] sm:$0xf]
        %v2181 = vld [vmem:[%s703 + $0x20] sm:$0xf]
        %v2182 = vld [vmem:[%s703 + $0x24] sm:$0xf]
        %v2183 = vld [vmem:[%s703 + $0x28] sm:$0xf]
        %v2184 = vld [vmem:[%s703 + $0x2c] sm:$0xf]
        %v2185 = vld [vmem:[%s703 + $0x30] sm:$0xf]
        %v2186 = vld [vmem:[%s703 + $0x34] sm:$0xf]
        %v2187 = vld [vmem:[%s703 + $0x38] sm:$0xf]
        %v2188 = vld [vmem:[%s703 + $0x3c] sm:$0xf]
        %v2189 = vld [vmem:[%s703 + $0x40] sm:$0xf]
        %v2190 = vld [vmem:[%s703 + $0x44] sm:$0xf]
        %v2191 = vld [vmem:[%s703 + $0x48] sm:$0xf]
        %v2192 = vld [vmem:[%s703 + $0x4c] sm:$0xf]
        %v2193 = vld [vmem:[%s703 + $0x50] sm:$0xf]
        %v2194 = vld [vmem:[%s703 + $0x54] sm:$0xf]
        %v2195 = vld [vmem:[%s703 + $0x58] sm:$0xf]
        %v2196 = vld [vmem:[%s703 + $0x5c] sm:$0xf]
        %v2197 = vld [vmem:[%s703 + $0x60] sm:$0xf]
        %v2198 = vld [vmem:[%s703 + $0x64] sm:$0xf]
        %v2199 = vld [vmem:[%s703 + $0x68] sm:$0xf]
        %v2200 = vld [vmem:[%s703 + $0x6c] sm:$0xf]
        %v2201 = vld [vmem:[%s703 + $0x70] sm:$0xf]
        %v2202 = vld [vmem:[%s703 + $0x74] sm:$0xf]
        %v2203 = vld [vmem:[%s703 + $0x78] sm:$0xf]
        %v2204 = vld [vmem:[%s703 + $0x7c] sm:$0xf]
        %v2205 = vld [vmem:[%s703 + $0x80] sm:$0xf]
        %v2206 = vld [vmem:[%s703 + $0x84] sm:$0xf]
        %v2207 = vld [vmem:[%s703 + $0x88] sm:$0xf]
        %v2208 = vld [vmem:[%s703 + $0x8c] sm:$0xf]
        %v2209 = vld [vmem:[%s703 + $0x90] sm:$0xf]
        %v2210 = vld [vmem:[%s703 + $0x94] sm:$0xf]
        %v2211 = vld [vmem:[%s703 + $0x98] sm:$0xf]
        %v2212 = vld [vmem:[%s703 + $0x9c] sm:$0xf]
        %v2213 = vld [vmem:[%s703 + $0xa0] sm:$0xf]
        %v2214 = vld [vmem:[%s703 + $0xa4] sm:$0xf]
        %v2215 = vld [vmem:[%s703 + $0xa8] sm:$0xf]
        %v2216 = vld [vmem:[%s703 + $0xac] sm:$0xf]
        %v2217 = vld [vmem:[%s703 + $0xb0] sm:$0xf]
        %v2218 = vld [vmem:[%s703 + $0xb4] sm:$0xf]
        %v2219 = vld [vmem:[%s703 + $0xb8] sm:$0xf]
        %v2220 = vld [vmem:[%s703 + $0xbc] sm:$0xf]
        %v2221 = vld [vmem:[%s703 + $0xc0] sm:$0xf]
        %v2222 = vld [vmem:[%s703 + $0xc4] sm:$0xf]
        %v2223 = vld [vmem:[%s703 + $0xc8] sm:$0xf]
        %v2224 = vld [vmem:[%s703 + $0xcc] sm:$0xf]
        %v2225 = vld [vmem:[%s703 + $0xd0] sm:$0xf]
        %v2226 = vld [vmem:[%s703 + $0xd4] sm:$0xf]
        %v2227 = vld [vmem:[%s703 + $0xd8] sm:$0xf]
        %v2228 = vld [vmem:[%s703 + $0xdc] sm:$0xf]
        %v2229 = vld [vmem:[%s703 + $0xe0] sm:$0xf]
        %v2230 = vld [vmem:[%s703 + $0xe4] sm:$0xf]
        %v2231 = vld [vmem:[%s703 + $0xe8] sm:$0xf]
        %v2232 = vld [vmem:[%s703 + $0xec] sm:$0xf]
        %v2233 = vld [vmem:[%s703 + $0xf0] sm:$0xf]
        %v2234 = vld [vmem:[%s703 + $0xf4] sm:$0xf]
        %v2235 = vld [vmem:[%s703 + $0xf8] sm:$0xf]
        %v2236 = vld [vmem:[%s703 + $0xfc] sm:$0xf]
        %v2237 = vld [vmem:[%s703 + $0x100] sm:$0xf]
        %v2238 = vld [vmem:[%s703 + $0x104] sm:$0xf]
        %v2239 = vld [vmem:[%s703 + $0x108] sm:$0xf]
        %v2240 = vld [vmem:[%s703 + $0x10c] sm:$0xf]
        %v2241 = vld [vmem:[%s703 + $0x110] sm:$0xf]
        %v2242 = vld [vmem:[%s703 + $0x114] sm:$0xf]
        %v2243 = vld [vmem:[%s703 + $0x118] sm:$0xf]
        %v2244 = vld [vmem:[%s703 + $0x11c] sm:$0xf]
        %v2245 = vld [vmem:[%s703 + $0x120] sm:$0xf]
        %v2246 = vld [vmem:[%s703 + $0x124] sm:$0xf]
        %v2247 = vld [vmem:[%s703 + $0x128] sm:$0xf]
        %v2248 = vld [vmem:[%s703 + $0x12c] sm:$0xf]
        %v2249 = vld [vmem:[%s703 + $0x130] sm:$0xf]
        %v2250 = vld [vmem:[%s703 + $0x134] sm:$0xf]
        %v2251 = vld [vmem:[%s703 + $0x138] sm:$0xf]
        %v2252 = vld [vmem:[%s703 + $0x13c] sm:$0xf]
        %v2253 = vld [vmem:[%s703 + $0x140] sm:$0xf]
        %v2254 = vld [vmem:[%s703 + $0x144] sm:$0xf]
        %v2255 = vld [vmem:[%s703 + $0x148] sm:$0xf]
        %v2256 = vld [vmem:[%s703 + $0x14c] sm:$0xf]
        %v2257 = vld [vmem:[%s703 + $0x150] sm:$0xf]
        %v2258 = vld [vmem:[%s703 + $0x154] sm:$0xf]
        %v2259 = vld [vmem:[%s703 + $0x158] sm:$0xf]
        %v2260 = vld [vmem:[%s703 + $0x15c] sm:$0xf]
        %v2261 = vld [vmem:[%s703 + $0x160] sm:$0xf]
        %v2262 = vld [vmem:[%s703 + $0x164] sm:$0xf]
        %v2263 = vld [vmem:[%s703 + $0x168] sm:$0xf]
        %v2264 = vld [vmem:[%s703 + $0x16c] sm:$0xf]
        %v2265 = vld [vmem:[%s703 + $0x170] sm:$0xf]
        %v2266 = vld [vmem:[%s703 + $0x174] sm:$0xf]
        %v2267 = vld [vmem:[%s703 + $0x178] sm:$0xf]
        %v2268 = vld [vmem:[%s703 + $0x17c] sm:$0xf]
        %v2269 = vld [vmem:[%s703 + $0x180] sm:$0xf]
        %v2270 = vld [vmem:[%s703 + $0x184] sm:$0xf]
        %v2271 = vld [vmem:[%s703 + $0x188] sm:$0xf]
        %v2272 = vld [vmem:[%s703 + $0x18c] sm:$0xf]
        %v2273 = vld [vmem:[%s703 + $0x190] sm:$0xf]
        %v2274 = vld [vmem:[%s703 + $0x194] sm:$0xf]
        %v2275 = vld [vmem:[%s703 + $0x198] sm:$0xf]
        %v2276 = vld [vmem:[%s703 + $0x19c] sm:$0xf]
        %v2277 = vld [vmem:[%s703 + $0x1a0] sm:$0xf]
        %v2278 = vld [vmem:[%s703 + $0x1a4] sm:$0xf]
        %v2279 = vld [vmem:[%s703 + $0x1a8] sm:$0xf]
        %v2280 = vld [vmem:[%s703 + $0x1ac] sm:$0xf]
        %v2281 = vld [vmem:[%s703 + $0x1b0] sm:$0xf]
        %v2282 = vld [vmem:[%s703 + $0x1b4] sm:$0xf]
        %v2283 = vld [vmem:[%s703 + $0x1b8] sm:$0xf]
        %v2284 = vld [vmem:[%s703 + $0x1bc] sm:$0xf]
        %v2285 = vld [vmem:[%s703 + $0x1c0] sm:$0xf]
        %v2286 = vld [vmem:[%s703 + $0x1c4] sm:$0xf]
        %v2287 = vld [vmem:[%s703 + $0x1c8] sm:$0xf]
        %v2288 = vld [vmem:[%s703 + $0x1cc] sm:$0xf]
        %v2289 = vld [vmem:[%s703 + $0x1d0] sm:$0xf]
        %v2290 = vld [vmem:[%s703 + $0x1d4] sm:$0xf]
        %v2291 = vld [vmem:[%s703 + $0x1d8] sm:$0xf]
        %v2292 = vld [vmem:[%s703 + $0x1dc] sm:$0xf]
        %v2293 = vld [vmem:[%s703 + $0x1e0] sm:$0xf]
        %v2294 = vld [vmem:[%s703 + $0x1e4] sm:$0xf]
        %v2295 = vld [vmem:[%s703 + $0x1e8] sm:$0xf]
        %v2296 = vld [vmem:[%s703 + $0x1ec] sm:$0xf]
        %v2297 = vld [vmem:[%s703 + $0x1f0] sm:$0xf]
        %v2298 = vld [vmem:[%s703 + $0x1f4] sm:$0xf]
        %v2299 = vld [vmem:[%s703 + $0x1f8] sm:$0xf]
        %v2300 = vld [vmem:[%s703 + $0x1fc] sm:$0xf]
        %v2301 = vld [vmem:[%s703 + $0x200] sm:$0xf]
        %v2302 = vld [vmem:[%s703 + $0x204] sm:$0xf]
        %v2303 = vld [vmem:[%s703 + $0x208] sm:$0xf]
        %v2304 = vld [vmem:[%s703 + $0x20c] sm:$0xf]
        %v2305 = vld [vmem:[%s703 + $0x210] sm:$0xf]
        %v2306 = vld [vmem:[%s703 + $0x214] sm:$0xf]
        %v2307 = vld [vmem:[%s703 + $0x218] sm:$0xf]
        %v2308 = vld [vmem:[%s703 + $0x21c] sm:$0xf]
        %v2309 = vld [vmem:[%s703 + $0x220] sm:$0xf]
        %v2310 = vld [vmem:[%s703 + $0x224] sm:$0xf]
        %v2311 = vld [vmem:[%s703 + $0x228] sm:$0xf]
        %v2312 = vld [vmem:[%s703 + $0x22c] sm:$0xf]
        %v2313 = vld [vmem:[%s703 + $0x230] sm:$0xf]
        %v2314 = vld [vmem:[%s703 + $0x234] sm:$0xf]
        %v2315 = vld [vmem:[%s703 + $0x238] sm:$0xf]
        %v2316 = vld [vmem:[%s703 + $0x23c] sm:$0xf]
        %v2317 = vld [vmem:[%s703 + $0x240] sm:$0xf]
        %v2318 = vld [vmem:[%s703 + $0x244] sm:$0xf]
        %v2319 = vld [vmem:[%s703 + $0x248] sm:$0xf]
        %v2320 = vld [vmem:[%s703 + $0x24c] sm:$0xf]
        %v2321 = vld [vmem:[%s703 + $0x250] sm:$0xf]
        %v2322 = vld [vmem:[%s703 + $0x254] sm:$0xf]
        %v2323 = vld [vmem:[%s703 + $0x258] sm:$0xf]
        %v2324 = vld [vmem:[%s703 + $0x25c] sm:$0xf]
        %v2325 = vld [vmem:[%s703 + $0x260] sm:$0xf]
        %v2326 = vld [vmem:[%s703 + $0x264] sm:$0xf]
        %v2327 = vld [vmem:[%s703 + $0x268] sm:$0xf]
        %v2328 = vld [vmem:[%s703 + $0x26c] sm:$0xf]
        %v2329 = vld [vmem:[%s703 + $0x270] sm:$0xf]
        %v2330 = vld [vmem:[%s703 + $0x274] sm:$0xf]
        %v2331 = vld [vmem:[%s703 + $0x278] sm:$0xf]
        %v2332 = vld [vmem:[%s703 + $0x27c] sm:$0xf]
        %v2333 = vld [vmem:[%s703 + $0x280] sm:$0xf]
        %v2334 = vld [vmem:[%s703 + $0x284] sm:$0xf]
        %v2335 = vld [vmem:[%s703 + $0x288] sm:$0xf]
        %v2336 = vld [vmem:[%s703 + $0x28c] sm:$0xf]
        %v2337 = vld [vmem:[%s703 + $0x290] sm:$0xf]
        %v2338 = vld [vmem:[%s703 + $0x294] sm:$0xf]
        %v2339 = vld [vmem:[%s703 + $0x298] sm:$0xf]
        %v2340 = vld [vmem:[%s703 + $0x29c] sm:$0xf]
        %v2341 = vld [vmem:[%s703 + $0x2a0] sm:$0xf]
        %v2342 = vld [vmem:[%s703 + $0x2a4] sm:$0xf]
        %v2343 = vld [vmem:[%s703 + $0x2a8] sm:$0xf]
        %v2344 = vld [vmem:[%s703 + $0x2ac] sm:$0xf]
        %v2345 = vld [vmem:[%s703 + $0x2b0] sm:$0xf]
        %v2346 = vld [vmem:[%s703 + $0x2b4] sm:$0xf]
        %v2347 = vld [vmem:[%s703 + $0x2b8] sm:$0xf]
        %v2348 = vld [vmem:[%s703 + $0x2bc] sm:$0xf]
        %v2349 = vld [vmem:[%s703 + $0x2c0] sm:$0xf]
        %v2350 = vld [vmem:[%s703 + $0x2c4] sm:$0xf]
        %v2351 = vld [vmem:[%s703 + $0x2c8] sm:$0xf]
        %v2352 = vld [vmem:[%s703 + $0x2cc] sm:$0xf]
        %v2353 = vld [vmem:[%s703 + $0x2d0] sm:$0xf]
        %v2354 = vld [vmem:[%s703 + $0x2d4] sm:$0xf]
        %v2355 = vld [vmem:[%s703 + $0x2d8] sm:$0xf]
        %v2356 = vld [vmem:[%s703 + $0x2dc] sm:$0xf]
        %v2357 = vld [vmem:[%s703 + $0x2e0] sm:$0xf]
        %v2358 = vld [vmem:[%s703 + $0x2e4] sm:$0xf]
        %v2359 = vld [vmem:[%s703 + $0x2e8] sm:$0xf]
        %v2360 = vld [vmem:[%s703 + $0x2ec] sm:$0xf]
        %v2361 = vld [vmem:[%s703 + $0x2f0] sm:$0xf]
        %v2362 = vld [vmem:[%s703 + $0x2f4] sm:$0xf]
        %v2363 = vld [vmem:[%s703 + $0x2f8] sm:$0xf]
        %v2364 = vld [vmem:[%s703 + $0x2fc] sm:$0xf]
        %v2365 = vld [vmem:[%s703 + $0x300] sm:$0xf]
        %v2366 = vld [vmem:[%s703 + $0x304] sm:$0xf]
        %v2367 = vld [vmem:[%s703 + $0x308] sm:$0xf]
        %v2368 = vld [vmem:[%s703 + $0x30c] sm:$0xf]
        %v2369 = vld [vmem:[%s703 + $0x310] sm:$0xf]
        %v2370 = vld [vmem:[%s703 + $0x314] sm:$0xf]
        %v2371 = vld [vmem:[%s703 + $0x318] sm:$0xf]
        %v2372 = vld [vmem:[%s703 + $0x31c] sm:$0xf]
        %v2373 = vld [vmem:[%s703 + $0x320] sm:$0xf]
        %v2374 = vld [vmem:[%s703 + $0x324] sm:$0xf]
        %v2375 = vld [vmem:[%s703 + $0x328] sm:$0xf]
        %v2376 = vld [vmem:[%s703 + $0x32c] sm:$0xf]
        %v2377 = vld [vmem:[%s703 + $0x330] sm:$0xf]
        %v2378 = vld [vmem:[%s703 + $0x334] sm:$0xf]
        %v2379 = vld [vmem:[%s703 + $0x338] sm:$0xf]
        %v2380 = vld [vmem:[%s703 + $0x33c] sm:$0xf]
        %v2381 = vld [vmem:[%s703 + $0x340] sm:$0xf]
        %v2382 = vld [vmem:[%s703 + $0x344] sm:$0xf]
        %v2383 = vld [vmem:[%s703 + $0x348] sm:$0xf]
        %v2384 = vld [vmem:[%s703 + $0x34c] sm:$0xf]
        %v2385 = vld [vmem:[%s703 + $0x350] sm:$0xf]
        %v2386 = vld [vmem:[%s703 + $0x354] sm:$0xf]
        %v2387 = vld [vmem:[%s703 + $0x358] sm:$0xf]
        %v2388 = vld [vmem:[%s703 + $0x35c] sm:$0xf]
        %v2389 = vld [vmem:[%s703 + $0x360] sm:$0xf]
        %v2390 = vld [vmem:[%s703 + $0x364] sm:$0xf]
        %v2391 = vld [vmem:[%s703 + $0x368] sm:$0xf]
        %v2392 = vld [vmem:[%s703 + $0x36c] sm:$0xf]
        %v2393 = vld [vmem:[%s703 + $0x370] sm:$0xf]
        %v2394 = vld [vmem:[%s703 + $0x374] sm:$0xf]
        %v2395 = vld [vmem:[%s703 + $0x378] sm:$0xf]
        %v2396 = vld [vmem:[%s703 + $0x37c] sm:$0xf]
        %v2397 = vld [vmem:[%s703 + $0x380] sm:$0xf]
        %v2398 = vld [vmem:[%s703 + $0x384] sm:$0xf]
        %v2399 = vld [vmem:[%s703 + $0x388] sm:$0xf]
        %v2400 = vld [vmem:[%s703 + $0x38c] sm:$0xf]
        %v2401 = vld [vmem:[%s703 + $0x390] sm:$0xf]
        %v2402 = vld [vmem:[%s703 + $0x394] sm:$0xf]
        %v2403 = vld [vmem:[%s703 + $0x398] sm:$0xf]
        %v2404 = vld [vmem:[%s703 + $0x39c] sm:$0xf]
        %v2405 = vld [vmem:[%s703 + $0x3a0] sm:$0xf]
        %v2406 = vld [vmem:[%s703 + $0x3a4] sm:$0xf]
        %v2407 = vld [vmem:[%s703 + $0x3a8] sm:$0xf]
        %v2408 = vld [vmem:[%s703 + $0x3ac] sm:$0xf]
        %v2409 = vld [vmem:[%s703 + $0x3b0] sm:$0xf]
        %v2410 = vld [vmem:[%s703 + $0x3b4] sm:$0xf]
        %v2411 = vld [vmem:[%s703 + $0x3b8] sm:$0xf]
        %v2412 = vld [vmem:[%s703 + $0x3bc] sm:$0xf]
        %v2413 = vld [vmem:[%s703 + $0x3c0] sm:$0xf]
        %v2414 = vld [vmem:[%s703 + $0x3c4] sm:$0xf]
        %v2415 = vld [vmem:[%s703 + $0x3c8] sm:$0xf]
        %v2416 = vld [vmem:[%s703 + $0x3cc] sm:$0xf]
        %v2417 = vld [vmem:[%s703 + $0x3d0] sm:$0xf]
        %v2418 = vld [vmem:[%s703 + $0x3d4] sm:$0xf]
        %v2419 = vld [vmem:[%s703 + $0x3d8] sm:$0xf]
        %v2420 = vld [vmem:[%s703 + $0x3dc] sm:$0xf]
        %v2421 = vld [vmem:[%s703 + $0x3e0] sm:$0xf]
        %v2422 = vld [vmem:[%s703 + $0x3e4] sm:$0xf]
        %v2423 = vld [vmem:[%s703 + $0x3e8] sm:$0xf]
        %v2424 = vld [vmem:[%s703 + $0x3ec] sm:$0xf]
        %v2425 = vld [vmem:[%s703 + $0x3f0] sm:$0xf]
        %v2426 = vld [vmem:[%s703 + $0x3f4] sm:$0xf]
        %v2427 = vld [vmem:[%s703 + $0x3f8] sm:$0xf]
        %v2428 = vld [vmem:[%s703 + $0x3fc] sm:$0xf]
        %v2429 = vpack.c.bf16 %v2157, %v2141
        %v2430 = vpack.c.bf16 %v2158, %v2142
        %v2431 = vpack.c.bf16 %v2159, %v2143
        %v2432 = vpack.c.bf16 %v2160, %v2144
        %v2433 = vpack.c.bf16 %v2161, %v2145
        %v2434 = vpack.c.bf16 %v2162, %v2146
        %v2435 = vpack.c.bf16 %v2163, %v2147
        %v2436 = vpack.c.bf16 %v2164, %v2148
        %v2437 = vpack.c.bf16 %v2165, %v2149
        %v2438 = vpack.c.bf16 %v2166, %v2150
        %v2439 = vpack.c.bf16 %v2167, %v2151
        %v2440 = vpack.c.bf16 %v2168, %v2152
        %v2441 = vpack.c.bf16 %v2169, %v2153
        %v2442 = vpack.c.bf16 %v2170, %v2154
        %v2443 = vpack.c.bf16 %v2171, %v2155
        %v2444 = vpack.c.bf16 %v2172, %v2156
        %v2445 = vld [vmem:[%s706] sm:$0x1]
        %v2447 = vperm.slane %v2445, 0
        %v2705 = vunpack.c.l.b16 %v2173
        %v2706 = vunpack.c.l.b16 %v2174
        %v2707 = vunpack.c.l.b16 %v2175
        %v2708 = vunpack.c.l.b16 %v2176
        %v2709 = vunpack.c.l.b16 %v2177
        %v2710 = vunpack.c.l.b16 %v2178
        %v2711 = vunpack.c.l.b16 %v2179
        %v2712 = vunpack.c.l.b16 %v2180
        %v2713 = vunpack.c.l.b16 %v2181
        %v2714 = vunpack.c.l.b16 %v2182
        %v2715 = vunpack.c.l.b16 %v2183
        %v2716 = vunpack.c.l.b16 %v2184
        %v2717 = vunpack.c.l.b16 %v2185
        %v2718 = vunpack.c.l.b16 %v2186
        %v2719 = vunpack.c.l.b16 %v2187
        %v2720 = vunpack.c.l.b16 %v2188
        %v2721 = vunpack.c.l.b16 %v2189
        %v2722 = vunpack.c.l.b16 %v2190
        %v2723 = vunpack.c.l.b16 %v2191
        %v2724 = vunpack.c.l.b16 %v2192
        %v2725 = vunpack.c.l.b16 %v2193
        %v2726 = vunpack.c.l.b16 %v2194
        %v2727 = vunpack.c.l.b16 %v2195
        %v2728 = vunpack.c.l.b16 %v2196
        %v2729 = vunpack.c.l.b16 %v2197
        %v2730 = vunpack.c.l.b16 %v2198
        %v2731 = vunpack.c.l.b16 %v2199
        %v2732 = vunpack.c.l.b16 %v2200
        %v2733 = vunpack.c.l.b16 %v2201
        %v2734 = vunpack.c.l.b16 %v2202
        %v2735 = vunpack.c.l.b16 %v2203
        %v2736 = vunpack.c.l.b16 %v2204
        %v2737 = vunpack.c.l.b16 %v2205
        %v2738 = vunpack.c.l.b16 %v2206
        %v2739 = vunpack.c.l.b16 %v2207
        %v2740 = vunpack.c.l.b16 %v2208
        %v2741 = vunpack.c.l.b16 %v2209
        %v2742 = vunpack.c.l.b16 %v2210
        %v2743 = vunpack.c.l.b16 %v2211
        %v2744 = vunpack.c.l.b16 %v2212
        %v2745 = vunpack.c.l.b16 %v2213
        %v2746 = vunpack.c.l.b16 %v2214
        %v2747 = vunpack.c.l.b16 %v2215
        %v2748 = vunpack.c.l.b16 %v2216
        %v2749 = vunpack.c.l.b16 %v2217
        %v2750 = vunpack.c.l.b16 %v2218
        %v2751 = vunpack.c.l.b16 %v2219
        %v2752 = vunpack.c.l.b16 %v2220
        %v2753 = vunpack.c.l.b16 %v2221
        %v2754 = vunpack.c.l.b16 %v2222
        %v2755 = vunpack.c.l.b16 %v2223
        %v2756 = vunpack.c.l.b16 %v2224
        %v2757 = vunpack.c.l.b16 %v2225
        %v2758 = vunpack.c.l.b16 %v2226
        %v2759 = vunpack.c.l.b16 %v2227
        %v2760 = vunpack.c.l.b16 %v2228
        %v2761 = vunpack.c.l.b16 %v2229
        %v2762 = vunpack.c.l.b16 %v2230
        %v2763 = vunpack.c.l.b16 %v2231
        %v2764 = vunpack.c.l.b16 %v2232
        %v2765 = vunpack.c.l.b16 %v2233
        %v2766 = vunpack.c.l.b16 %v2234
        %v2767 = vunpack.c.l.b16 %v2235
        %v2768 = vunpack.c.l.b16 %v2236
        %v2769 = vunpack.c.l.b16 %v2237
        %v2770 = vunpack.c.l.b16 %v2238
        %v2771 = vunpack.c.l.b16 %v2239
        %v2772 = vunpack.c.l.b16 %v2240
        %v2773 = vunpack.c.l.b16 %v2241
        %v2774 = vunpack.c.l.b16 %v2242
        %v2775 = vunpack.c.l.b16 %v2243
        %v2776 = vunpack.c.l.b16 %v2244
        %v2777 = vunpack.c.l.b16 %v2245
        %v2778 = vunpack.c.l.b16 %v2246
        %v2779 = vunpack.c.l.b16 %v2247
        %v2780 = vunpack.c.l.b16 %v2248
        %v2781 = vunpack.c.l.b16 %v2249
        %v2782 = vunpack.c.l.b16 %v2250
        %v2783 = vunpack.c.l.b16 %v2251
        %v2784 = vunpack.c.l.b16 %v2252
        %v2785 = vunpack.c.l.b16 %v2253
        %v2786 = vunpack.c.l.b16 %v2254
        %v2787 = vunpack.c.l.b16 %v2255
        %v2788 = vunpack.c.l.b16 %v2256
        %v2789 = vunpack.c.l.b16 %v2257
        %v2790 = vunpack.c.l.b16 %v2258
        %v2791 = vunpack.c.l.b16 %v2259
        %v2792 = vunpack.c.l.b16 %v2260
        %v2793 = vunpack.c.l.b16 %v2261
        %v2794 = vunpack.c.l.b16 %v2262
        %v2795 = vunpack.c.l.b16 %v2263
        %v2796 = vunpack.c.l.b16 %v2264
        %v2797 = vunpack.c.l.b16 %v2265
        %v2798 = vunpack.c.l.b16 %v2266
        %v2799 = vunpack.c.l.b16 %v2267
        %v2800 = vunpack.c.l.b16 %v2268
        %v2801 = vunpack.c.l.b16 %v2269
        %v2802 = vunpack.c.l.b16 %v2270
        %v2803 = vunpack.c.l.b16 %v2271
        %v2804 = vunpack.c.l.b16 %v2272
        %v2805 = vunpack.c.l.b16 %v2273
        %v2806 = vunpack.c.l.b16 %v2274
        %v2807 = vunpack.c.l.b16 %v2275
        %v2808 = vunpack.c.l.b16 %v2276
        %v2809 = vunpack.c.l.b16 %v2277
        %v2810 = vunpack.c.l.b16 %v2278
        %v2811 = vunpack.c.l.b16 %v2279
        %v2812 = vunpack.c.l.b16 %v2280
        %v2813 = vunpack.c.l.b16 %v2281
        %v2814 = vunpack.c.l.b16 %v2282
        %v2815 = vunpack.c.l.b16 %v2283
        %v2816 = vunpack.c.l.b16 %v2284
        %v2817 = vunpack.c.l.b16 %v2285
        %v2818 = vunpack.c.l.b16 %v2286
        %v2819 = vunpack.c.l.b16 %v2287
        %v2820 = vunpack.c.l.b16 %v2288
        %v2821 = vunpack.c.l.b16 %v2289
        %v2822 = vunpack.c.l.b16 %v2290
        %v2823 = vunpack.c.l.b16 %v2291
        %v2824 = vunpack.c.l.b16 %v2292
        %v2825 = vunpack.c.l.b16 %v2293
        %v2826 = vunpack.c.l.b16 %v2294
        %v2827 = vunpack.c.l.b16 %v2295
        %v2828 = vunpack.c.l.b16 %v2296
        %v2829 = vunpack.c.l.b16 %v2297
        %v2830 = vunpack.c.l.b16 %v2298
        %v2831 = vunpack.c.l.b16 %v2299
        %v2832 = vunpack.c.l.b16 %v2300
        %v2833 = vunpack.c.l.b16 %v2301
        %v2834 = vunpack.c.l.b16 %v2302
        %v2835 = vunpack.c.l.b16 %v2303
        %v2836 = vunpack.c.l.b16 %v2304
        %v2837 = vunpack.c.l.b16 %v2305
        %v2838 = vunpack.c.l.b16 %v2306
        %v2839 = vunpack.c.l.b16 %v2307
        %v2840 = vunpack.c.l.b16 %v2308
        %v2841 = vunpack.c.l.b16 %v2309
        %v2842 = vunpack.c.l.b16 %v2310
        %v2843 = vunpack.c.l.b16 %v2311
        %v2844 = vunpack.c.l.b16 %v2312
        %v2845 = vunpack.c.l.b16 %v2313
        %v2846 = vunpack.c.l.b16 %v2314
        %v2847 = vunpack.c.l.b16 %v2315
        %v2848 = vunpack.c.l.b16 %v2316
        %v2849 = vunpack.c.l.b16 %v2317
        %v2850 = vunpack.c.l.b16 %v2318
        %v2851 = vunpack.c.l.b16 %v2319
        %v2852 = vunpack.c.l.b16 %v2320
        %v2853 = vunpack.c.l.b16 %v2321
        %v2854 = vunpack.c.l.b16 %v2322
        %v2855 = vunpack.c.l.b16 %v2323
        %v2856 = vunpack.c.l.b16 %v2324
        %v2857 = vunpack.c.l.b16 %v2325
        %v2858 = vunpack.c.l.b16 %v2326
        %v2859 = vunpack.c.l.b16 %v2327
        %v2860 = vunpack.c.l.b16 %v2328
        %v2861 = vunpack.c.l.b16 %v2329
        %v2862 = vunpack.c.l.b16 %v2330
        %v2863 = vunpack.c.l.b16 %v2331
        %v2864 = vunpack.c.l.b16 %v2332
        %v2865 = vunpack.c.l.b16 %v2333
        %v2866 = vunpack.c.l.b16 %v2334
        %v2867 = vunpack.c.l.b16 %v2335
        %v2868 = vunpack.c.l.b16 %v2336
        %v2869 = vunpack.c.l.b16 %v2337
        %v2870 = vunpack.c.l.b16 %v2338
        %v2871 = vunpack.c.l.b16 %v2339
        %v2872 = vunpack.c.l.b16 %v2340
        %v2873 = vunpack.c.l.b16 %v2341
        %v2874 = vunpack.c.l.b16 %v2342
        %v2875 = vunpack.c.l.b16 %v2343
        %v2876 = vunpack.c.l.b16 %v2344
        %v2877 = vunpack.c.l.b16 %v2345
        %v2878 = vunpack.c.l.b16 %v2346
        %v2879 = vunpack.c.l.b16 %v2347
        %v2880 = vunpack.c.l.b16 %v2348
        %v2881 = vunpack.c.l.b16 %v2349
        %v2882 = vunpack.c.l.b16 %v2350
        %v2883 = vunpack.c.l.b16 %v2351
        %v2884 = vunpack.c.l.b16 %v2352
        %v2885 = vunpack.c.l.b16 %v2353
        %v2886 = vunpack.c.l.b16 %v2354
        %v2887 = vunpack.c.l.b16 %v2355
        %v2888 = vunpack.c.l.b16 %v2356
        %v2889 = vunpack.c.l.b16 %v2357
        %v2890 = vunpack.c.l.b16 %v2358
        %v2891 = vunpack.c.l.b16 %v2359
        %v2892 = vunpack.c.l.b16 %v2360
        %v2893 = vunpack.c.l.b16 %v2361
        %v2894 = vunpack.c.l.b16 %v2362
        %v2895 = vunpack.c.l.b16 %v2363
        %v2896 = vunpack.c.l.b16 %v2364
        %v2897 = vunpack.c.l.b16 %v2365
        %v2898 = vunpack.c.l.b16 %v2366
        %v2899 = vunpack.c.l.b16 %v2367
        %v2900 = vunpack.c.l.b16 %v2368
        %v2901 = vunpack.c.l.b16 %v2369
        %v2902 = vunpack.c.l.b16 %v2370
        %v2903 = vunpack.c.l.b16 %v2371
        %v2904 = vunpack.c.l.b16 %v2372
        %v2905 = vunpack.c.l.b16 %v2373
        %v2906 = vunpack.c.l.b16 %v2374
        %v2907 = vunpack.c.l.b16 %v2375
        %v2908 = vunpack.c.l.b16 %v2376
        %v2909 = vunpack.c.l.b16 %v2377
        %v2910 = vunpack.c.l.b16 %v2378
        %v2911 = vunpack.c.l.b16 %v2379
        %v2912 = vunpack.c.l.b16 %v2380
        %v2913 = vunpack.c.l.b16 %v2381
        %v2914 = vunpack.c.l.b16 %v2382
        %v2915 = vunpack.c.l.b16 %v2383
        %v2916 = vunpack.c.l.b16 %v2384
        %v2917 = vunpack.c.l.b16 %v2385
        %v2918 = vunpack.c.l.b16 %v2386
        %v2919 = vunpack.c.l.b16 %v2387
        %v2920 = vunpack.c.l.b16 %v2388
        %v2921 = vunpack.c.l.b16 %v2389
        %v2922 = vunpack.c.l.b16 %v2390
        %v2923 = vunpack.c.l.b16 %v2391
        %v2924 = vunpack.c.l.b16 %v2392
        %v2925 = vunpack.c.l.b16 %v2393
        %v2926 = vunpack.c.l.b16 %v2394
        %v2927 = vunpack.c.l.b16 %v2395
        %v2928 = vunpack.c.l.b16 %v2396
        %v2929 = vunpack.c.l.b16 %v2397
        %v2930 = vunpack.c.l.b16 %v2398
        %v2931 = vunpack.c.l.b16 %v2399
        %v2932 = vunpack.c.l.b16 %v2400
        %v2933 = vunpack.c.l.b16 %v2401
        %v2934 = vunpack.c.l.b16 %v2402
        %v2935 = vunpack.c.l.b16 %v2403
        %v2936 = vunpack.c.l.b16 %v2404
        %v2937 = vunpack.c.l.b16 %v2405
        %v2938 = vunpack.c.l.b16 %v2406
        %v2939 = vunpack.c.l.b16 %v2407
        %v2940 = vunpack.c.l.b16 %v2408
        %v2941 = vunpack.c.l.b16 %v2409
        %v2942 = vunpack.c.l.b16 %v2410
        %v2943 = vunpack.c.l.b16 %v2411
        %v2944 = vunpack.c.l.b16 %v2412
        %v2945 = vunpack.c.l.b16 %v2413
        %v2946 = vunpack.c.l.b16 %v2414
        %v2947 = vunpack.c.l.b16 %v2415
        %v2948 = vunpack.c.l.b16 %v2416
        %v2949 = vunpack.c.l.b16 %v2417
        %v2950 = vunpack.c.l.b16 %v2418
        %v2951 = vunpack.c.l.b16 %v2419
        %v2952 = vunpack.c.l.b16 %v2420
        %v2953 = vunpack.c.l.b16 %v2421
        %v2954 = vunpack.c.l.b16 %v2422
        %v2955 = vunpack.c.l.b16 %v2423
        %v2956 = vunpack.c.l.b16 %v2424
        %v2957 = vunpack.c.l.b16 %v2425
        %v2958 = vunpack.c.l.b16 %v2426
        %v2959 = vunpack.c.l.b16 %v2427
        %v2960 = vunpack.c.l.b16 %v2428
        %v2961 = vpack.c.b16 %v2706, %v2705
        %v2962 = vpack.c.b16 %v2708, %v2707
        %v2963 = vpack.c.b16 %v2710, %v2709
        %v2964 = vpack.c.b16 %v2712, %v2711
        %v2965 = vpack.c.b16 %v2714, %v2713
        %v2966 = vpack.c.b16 %v2716, %v2715
        %v2967 = vpack.c.b16 %v2718, %v2717
        %v2968 = vpack.c.b16 %v2720, %v2719
        %v2969 = vpack.c.b16 %v2722, %v2721
        %v2970 = vpack.c.b16 %v2724, %v2723
        %v2971 = vpack.c.b16 %v2726, %v2725
        %v2972 = vpack.c.b16 %v2728, %v2727
        %v2973 = vpack.c.b16 %v2730, %v2729
        %v2974 = vpack.c.b16 %v2732, %v2731
        %v2975 = vpack.c.b16 %v2734, %v2733
        %v2976 = vpack.c.b16 %v2736, %v2735
        %v2977 = vpack.c.b16 %v2738, %v2737
        %v2978 = vpack.c.b16 %v2740, %v2739
        %v2979 = vpack.c.b16 %v2742, %v2741
        %v2980 = vpack.c.b16 %v2744, %v2743
        %v2981 = vpack.c.b16 %v2746, %v2745
        %v2982 = vpack.c.b16 %v2748, %v2747
        %v2983 = vpack.c.b16 %v2750, %v2749
        %v2984 = vpack.c.b16 %v2752, %v2751
        %v2985 = vpack.c.b16 %v2754, %v2753
        %v2986 = vpack.c.b16 %v2756, %v2755
        %v2987 = vpack.c.b16 %v2758, %v2757
        %v2988 = vpack.c.b16 %v2760, %v2759
        %v2989 = vpack.c.b16 %v2762, %v2761
        %v2990 = vpack.c.b16 %v2764, %v2763
        %v2991 = vpack.c.b16 %v2766, %v2765
        %v2992 = vpack.c.b16 %v2768, %v2767
        %v2993 = vpack.c.b16 %v2770, %v2769
        %v2994 = vpack.c.b16 %v2772, %v2771
        %v2995 = vpack.c.b16 %v2774, %v2773
        %v2996 = vpack.c.b16 %v2776, %v2775
        %v2997 = vpack.c.b16 %v2778, %v2777
        %v2998 = vpack.c.b16 %v2780, %v2779
        %v2999 = vpack.c.b16 %v2782, %v2781
        %v3000 = vpack.c.b16 %v2784, %v2783
        %v3001 = vpack.c.b16 %v2786, %v2785
        %v3002 = vpack.c.b16 %v2788, %v2787
        %v3003 = vpack.c.b16 %v2790, %v2789
        %v3004 = vpack.c.b16 %v2792, %v2791
        %v3005 = vpack.c.b16 %v2794, %v2793
        %v3006 = vpack.c.b16 %v2796, %v2795
        %v3007 = vpack.c.b16 %v2798, %v2797
        %v3008 = vpack.c.b16 %v2800, %v2799
        %v3009 = vpack.c.b16 %v2802, %v2801
        %v3010 = vpack.c.b16 %v2804, %v2803
        %v3011 = vpack.c.b16 %v2806, %v2805
        %v3012 = vpack.c.b16 %v2808, %v2807
        %v3013 = vpack.c.b16 %v2810, %v2809
        %v3014 = vpack.c.b16 %v2812, %v2811
        %v3015 = vpack.c.b16 %v2814, %v2813
        %v3016 = vpack.c.b16 %v2816, %v2815
        %v3017 = vpack.c.b16 %v2818, %v2817
        %v3018 = vpack.c.b16 %v2820, %v2819
        %v3019 = vpack.c.b16 %v2822, %v2821
        %v3020 = vpack.c.b16 %v2824, %v2823
        %v3021 = vpack.c.b16 %v2826, %v2825
        %v3022 = vpack.c.b16 %v2828, %v2827
        %v3023 = vpack.c.b16 %v2830, %v2829
        %v3024 = vpack.c.b16 %v2832, %v2831
        %v3025 = vpack.c.b16 %v2834, %v2833
        %v3026 = vpack.c.b16 %v2836, %v2835
        %v3027 = vpack.c.b16 %v2838, %v2837
        %v3028 = vpack.c.b16 %v2840, %v2839
        %v3029 = vpack.c.b16 %v2842, %v2841
        %v3030 = vpack.c.b16 %v2844, %v2843
        %v3031 = vpack.c.b16 %v2846, %v2845
        %v3032 = vpack.c.b16 %v2848, %v2847
        %v3033 = vpack.c.b16 %v2850, %v2849
        %v3034 = vpack.c.b16 %v2852, %v2851
        %v3035 = vpack.c.b16 %v2854, %v2853
        %v3036 = vpack.c.b16 %v2856, %v2855
        %v3037 = vpack.c.b16 %v2858, %v2857
        %v3038 = vpack.c.b16 %v2860, %v2859
        %v3039 = vpack.c.b16 %v2862, %v2861
        %v3040 = vpack.c.b16 %v2864, %v2863
        %v3041 = vpack.c.b16 %v2866, %v2865
        %v3042 = vpack.c.b16 %v2868, %v2867
        %v3043 = vpack.c.b16 %v2870, %v2869
        %v3044 = vpack.c.b16 %v2872, %v2871
        %v3045 = vpack.c.b16 %v2874, %v2873
        %v3046 = vpack.c.b16 %v2876, %v2875
        %v3047 = vpack.c.b16 %v2878, %v2877
        %v3048 = vpack.c.b16 %v2880, %v2879
        %v3049 = vpack.c.b16 %v2882, %v2881
        %v3050 = vpack.c.b16 %v2884, %v2883
        %v3051 = vpack.c.b16 %v2886, %v2885
        %v3052 = vpack.c.b16 %v2888, %v2887
        %v3053 = vpack.c.b16 %v2890, %v2889
        %v3054 = vpack.c.b16 %v2892, %v2891
        %v3055 = vpack.c.b16 %v2894, %v2893
        %v3056 = vpack.c.b16 %v2896, %v2895
        %v3057 = vpack.c.b16 %v2898, %v2897
        %v3058 = vpack.c.b16 %v2900, %v2899
        %v3059 = vpack.c.b16 %v2902, %v2901
        %v3060 = vpack.c.b16 %v2904, %v2903
        %v3061 = vpack.c.b16 %v2906, %v2905
        %v3062 = vpack.c.b16 %v2908, %v2907
        %v3063 = vpack.c.b16 %v2910, %v2909
        %v3064 = vpack.c.b16 %v2912, %v2911
        %v3065 = vpack.c.b16 %v2914, %v2913
        %v3066 = vpack.c.b16 %v2916, %v2915
        %v3067 = vpack.c.b16 %v2918, %v2917
        %v3068 = vpack.c.b16 %v2920, %v2919
        %v3069 = vpack.c.b16 %v2922, %v2921
        %v3070 = vpack.c.b16 %v2924, %v2923
        %v3071 = vpack.c.b16 %v2926, %v2925
        %v3072 = vpack.c.b16 %v2928, %v2927
        %v3073 = vpack.c.b16 %v2930, %v2929
        %v3074 = vpack.c.b16 %v2932, %v2931
        %v3075 = vpack.c.b16 %v2934, %v2933
        %v3076 = vpack.c.b16 %v2936, %v2935
        %v3077 = vpack.c.b16 %v2938, %v2937
        %v3078 = vpack.c.b16 %v2940, %v2939
        %v3079 = vpack.c.b16 %v2942, %v2941
        %v3080 = vpack.c.b16 %v2944, %v2943
        %v3081 = vpack.c.b16 %v2946, %v2945
        %v3082 = vpack.c.b16 %v2948, %v2947
        %v3083 = vpack.c.b16 %v2950, %v2949
        %v3084 = vpack.c.b16 %v2952, %v2951
        %v3085 = vpack.c.b16 %v2954, %v2953
        %v3086 = vpack.c.b16 %v2956, %v2955
        %v3087 = vpack.c.b16 %v2958, %v2957
        %v3088 = vpack.c.b16 %v2960, %v2959
        %3217 = vmatpush.bf16.msra.mxu0 %v2968
        %3218 = vmatpush.bf16.msra.mxu0 %v2967
        %3219 = vmatpush.bf16.msra.mxu0 %v2966
        %3220 = vmatpush.bf16.msra.mxu0 %v2965
        %3221 = vmatpush.bf16.msra.mxu0 %v2964
        %3222 = vmatpush.bf16.msra.mxu0 %v2963
        %3223 = vmatpush.bf16.msra.mxu0 %v2962
        %3224 = vmatpush.bf16.msra.mxu0 %v2961
        %3225 = vmatmul.bf16.gmra.mxu0 %v2429
        %v3226 = vpop.f32.mrf.mxu0
        %v3227 = vadd.f32 %v2447, %v3226
        %v3228 = vpop.f32.mrf.mxu0
        %v3229 = vadd.f32 %v2447, %v3228
        %3230 = vdwg.mxu0
        %3231 = vmatpush.bf16.msra.mxu0 %v2976
        %3232 = vmatpush.bf16.msra.mxu0 %v2975
        %3233 = vmatpush.bf16.msra.mxu0 %v2974
        %3234 = vmatpush.bf16.msra.mxu0 %v2973
        %3235 = vmatpush.bf16.msra.mxu0 %v2972
        %3236 = vmatpush.bf16.msra.mxu0 %v2971
        %3237 = vmatpush.bf16.msra.mxu0 %v2970
        %3238 = vmatpush.bf16.msra.mxu0 %v2969
        %3239 = vmatmul.bf16.gmra.mxu0 %v2430
        %v3240 = vpop.f32.mrf.mxu0
        %v3241 = vadd.f32 %v3227, %v3240
        %v3242 = vpop.f32.mrf.mxu0
        %v3243 = vadd.f32 %v3229, %v3242
        %3244 = vdwg.mxu0
        %3245 = vmatpush.bf16.msra.mxu0 %v2984
        %3246 = vmatpush.bf16.msra.mxu0 %v2983
        %3247 = vmatpush.bf16.msra.mxu0 %v2982
        %3248 = vmatpush.bf16.msra.mxu0 %v2981
        %3249 = vmatpush.bf16.msra.mxu0 %v2980
        %3250 = vmatpush.bf16.msra.mxu0 %v2979
        %3251 = vmatpush.bf16.msra.mxu0 %v2978
        %3252 = vmatpush.bf16.msra.mxu0 %v2977
        %3253 = vmatmul.bf16.gmra.mxu0 %v2431
        %v3254 = vpop.f32.mrf.mxu0
        %v3255 = vadd.f32 %v3241, %v3254
        %v3256 = vpop.f32.mrf.mxu0
        %v3257 = vadd.f32 %v3243, %v3256
        %3258 = vdwg.mxu0
        %3259 = vmatpush.bf16.msra.mxu0 %v2992
        %3260 = vmatpush.bf16.msra.mxu0 %v2991
        %3261 = vmatpush.bf16.msra.mxu0 %v2990
        %3262 = vmatpush.bf16.msra.mxu0 %v2989
        %3263 = vmatpush.bf16.msra.mxu0 %v2988
        %3264 = vmatpush.bf16.msra.mxu0 %v2987
        %3265 = vmatpush.bf16.msra.mxu0 %v2986
        %3266 = vmatpush.bf16.msra.mxu0 %v2985
        %3267 = vmatmul.bf16.gmra.mxu0 %v2432
        %v3268 = vpop.f32.mrf.mxu0
        %v3269 = vadd.f32 %v3255, %v3268
        %v3270 = vpop.f32.mrf.mxu0
        %v3271 = vadd.f32 %v3257, %v3270
        %3272 = vdwg.mxu0
        %3273 = vmatpush.bf16.msra.mxu0 %v3000
        %3274 = vmatpush.bf16.msra.mxu0 %v2999
        %3275 = vmatpush.bf16.msra.mxu0 %v2998
        %3276 = vmatpush.bf16.msra.mxu0 %v2997
        %3277 = vmatpush.bf16.msra.mxu0 %v2996
        %3278 = vmatpush.bf16.msra.mxu0 %v2995
        %3279 = vmatpush.bf16.msra.mxu0 %v2994
        %3280 = vmatpush.bf16.msra.mxu0 %v2993
        %3281 = vmatmul.bf16.gmra.mxu0 %v2433
        %v3282 = vpop.f32.mrf.mxu0
        %v3283 = vadd.f32 %v3269, %v3282
        %v3284 = vpop.f32.mrf.mxu0
        %v3285 = vadd.f32 %v3271, %v3284
        %3286 = vdwg.mxu0
        %3287 = vmatpush.bf16.msra.mxu0 %v3008
        %3288 = vmatpush.bf16.msra.mxu0 %v3007
        %3289 = vmatpush.bf16.msra.mxu0 %v3006
        %3290 = vmatpush.bf16.msra.mxu0 %v3005
        %3291 = vmatpush.bf16.msra.mxu0 %v3004
        %3292 = vmatpush.bf16.msra.mxu0 %v3003
        %3293 = vmatpush.bf16.msra.mxu0 %v3002
        %3294 = vmatpush.bf16.msra.mxu0 %v3001
        %3295 = vmatmul.bf16.gmra.mxu0 %v2434
        %v3296 = vpop.f32.mrf.mxu0
        %v3297 = vadd.f32 %v3283, %v3296
        %v3298 = vpop.f32.mrf.mxu0
        %v3299 = vadd.f32 %v3285, %v3298
        %3300 = vdwg.mxu0
        %3301 = vmatpush.bf16.msra.mxu0 %v3016
        %3302 = vmatpush.bf16.msra.mxu0 %v3015
        %3303 = vmatpush.bf16.msra.mxu0 %v3014
        %3304 = vmatpush.bf16.msra.mxu0 %v3013
        %3305 = vmatpush.bf16.msra.mxu0 %v3012
        %3306 = vmatpush.bf16.msra.mxu0 %v3011
        %3307 = vmatpush.bf16.msra.mxu0 %v3010
        %3308 = vmatpush.bf16.msra.mxu0 %v3009
        %3309 = vmatmul.bf16.gmra.mxu0 %v2435
        %v3310 = vpop.f32.mrf.mxu0
        %v3311 = vadd.f32 %v3297, %v3310
        %v3312 = vpop.f32.mrf.mxu0
        %v3313 = vadd.f32 %v3299, %v3312
        %3314 = vdwg.mxu0
        %3315 = vmatpush.bf16.msra.mxu0 %v3024
        %3316 = vmatpush.bf16.msra.mxu0 %v3023
        %3317 = vmatpush.bf16.msra.mxu0 %v3022
        %3318 = vmatpush.bf16.msra.mxu0 %v3021
        %3319 = vmatpush.bf16.msra.mxu0 %v3020
        %3320 = vmatpush.bf16.msra.mxu0 %v3019
        %3321 = vmatpush.bf16.msra.mxu0 %v3018
        %3322 = vmatpush.bf16.msra.mxu0 %v3017
        %3323 = vmatmul.bf16.gmra.mxu0 %v2436
        %v3324 = vpop.f32.mrf.mxu0
        %v3325 = vadd.f32 %v3311, %v3324
        %v3326 = vpop.f32.mrf.mxu0
        %v3327 = vadd.f32 %v3313, %v3326
        %3328 = vdwg.mxu0
        %3329 = vmatpush.bf16.msra.mxu0 %v3032
        %3330 = vmatpush.bf16.msra.mxu0 %v3031
        %3331 = vmatpush.bf16.msra.mxu0 %v3030
        %3332 = vmatpush.bf16.msra.mxu0 %v3029
        %3333 = vmatpush.bf16.msra.mxu0 %v3028
        %3334 = vmatpush.bf16.msra.mxu0 %v3027
        %3335 = vmatpush.bf16.msra.mxu0 %v3026
        %3336 = vmatpush.bf16.msra.mxu0 %v3025
        %3337 = vmatmul.bf16.gmra.mxu0 %v2437
        %v3338 = vpop.f32.mrf.mxu0
        %v3339 = vadd.f32 %v3325, %v3338
        %v3340 = vpop.f32.mrf.mxu0
        %v3341 = vadd.f32 %v3327, %v3340
        %3342 = vdwg.mxu0
        %3343 = vmatpush.bf16.msra.mxu0 %v3040
        %3344 = vmatpush.bf16.msra.mxu0 %v3039
        %3345 = vmatpush.bf16.msra.mxu0 %v3038
        %3346 = vmatpush.bf16.msra.mxu0 %v3037
        %3347 = vmatpush.bf16.msra.mxu0 %v3036
        %3348 = vmatpush.bf16.msra.mxu0 %v3035
        %3349 = vmatpush.bf16.msra.mxu0 %v3034
        %3350 = vmatpush.bf16.msra.mxu0 %v3033
        %3351 = vmatmul.bf16.gmra.mxu0 %v2438
        %v3352 = vpop.f32.mrf.mxu0
        %v3353 = vadd.f32 %v3339, %v3352
        %v3354 = vpop.f32.mrf.mxu0
        %v3355 = vadd.f32 %v3341, %v3354
        %3356 = vdwg.mxu0
        %3357 = vmatpush.bf16.msra.mxu0 %v3048
        %3358 = vmatpush.bf16.msra.mxu0 %v3047
        %3359 = vmatpush.bf16.msra.mxu0 %v3046
        %3360 = vmatpush.bf16.msra.mxu0 %v3045
        %3361 = vmatpush.bf16.msra.mxu0 %v3044
        %3362 = vmatpush.bf16.msra.mxu0 %v3043
        %3363 = vmatpush.bf16.msra.mxu0 %v3042
        %3364 = vmatpush.bf16.msra.mxu0 %v3041
        %3365 = vmatmul.bf16.gmra.mxu0 %v2439
        %v3366 = vpop.f32.mrf.mxu0
        %v3367 = vadd.f32 %v3353, %v3366
        %v3368 = vpop.f32.mrf.mxu0
        %v3369 = vadd.f32 %v3355, %v3368
        %3370 = vdwg.mxu0
        %3371 = vmatpush.bf16.msra.mxu0 %v3056
        %3372 = vmatpush.bf16.msra.mxu0 %v3055
        %3373 = vmatpush.bf16.msra.mxu0 %v3054
        %3374 = vmatpush.bf16.msra.mxu0 %v3053
        %3375 = vmatpush.bf16.msra.mxu0 %v3052
        %3376 = vmatpush.bf16.msra.mxu0 %v3051
        %3377 = vmatpush.bf16.msra.mxu0 %v3050
        %3378 = vmatpush.bf16.msra.mxu0 %v3049
        %3379 = vmatmul.bf16.gmra.mxu0 %v2440
        %v3380 = vpop.f32.mrf.mxu0
        %v3381 = vadd.f32 %v3367, %v3380
        %v3382 = vpop.f32.mrf.mxu0
        %v3383 = vadd.f32 %v3369, %v3382
        %3384 = vdwg.mxu0
        %3385 = vmatpush.bf16.msra.mxu0 %v3064
        %3386 = vmatpush.bf16.msra.mxu0 %v3063
        %3387 = vmatpush.bf16.msra.mxu0 %v3062
        %3388 = vmatpush.bf16.msra.mxu0 %v3061
        %3389 = vmatpush.bf16.msra.mxu0 %v3060
        %3390 = vmatpush.bf16.msra.mxu0 %v3059
        %3391 = vmatpush.bf16.msra.mxu0 %v3058
        %3392 = vmatpush.bf16.msra.mxu0 %v3057
        %3393 = vmatmul.bf16.gmra.mxu0 %v2441
        %v3394 = vpop.f32.mrf.mxu0
        %v3395 = vadd.f32 %v3381, %v3394
        %v3396 = vpop.f32.mrf.mxu0
        %v3397 = vadd.f32 %v3383, %v3396
        %3398 = vdwg.mxu0
        %3399 = vmatpush.bf16.msra.mxu0 %v3072
        %3400 = vmatpush.bf16.msra.mxu0 %v3071
        %3401 = vmatpush.bf16.msra.mxu0 %v3070
        %3402 = vmatpush.bf16.msra.mxu0 %v3069
        %3403 = vmatpush.bf16.msra.mxu0 %v3068
        %3404 = vmatpush.bf16.msra.mxu0 %v3067
        %3405 = vmatpush.bf16.msra.mxu0 %v3066
        %3406 = vmatpush.bf16.msra.mxu0 %v3065
        %3407 = vmatmul.bf16.gmra.mxu0 %v2442
        %v3408 = vpop.f32.mrf.mxu0
        %v3409 = vadd.f32 %v3395, %v3408
        %v3410 = vpop.f32.mrf.mxu0
        %v3411 = vadd.f32 %v3397, %v3410
        %3412 = vdwg.mxu0
        %3413 = vmatpush.bf16.msra.mxu0 %v3080
        %3414 = vmatpush.bf16.msra.mxu0 %v3079
        %3415 = vmatpush.bf16.msra.mxu0 %v3078
        %3416 = vmatpush.bf16.msra.mxu0 %v3077
        %3417 = vmatpush.bf16.msra.mxu0 %v3076
        %3418 = vmatpush.bf16.msra.mxu0 %v3075
        %3419 = vmatpush.bf16.msra.mxu0 %v3074
        %3420 = vmatpush.bf16.msra.mxu0 %v3073
        %3421 = vmatmul.bf16.gmra.mxu0 %v2443
        %v3422 = vpop.f32.mrf.mxu0
        %v3423 = vadd.f32 %v3409, %v3422
        %v3424 = vpop.f32.mrf.mxu0
        %v3425 = vadd.f32 %v3411, %v3424
        %3426 = vdwg.mxu0
        %3427 = vmatpush.bf16.msra.mxu0 %v3088
        %3428 = vmatpush.bf16.msra.mxu0 %v3087
        %3429 = vmatpush.bf16.msra.mxu0 %v3086
        %3430 = vmatpush.bf16.msra.mxu0 %v3085
        %3431 = vmatpush.bf16.msra.mxu0 %v3084
        %3432 = vmatpush.bf16.msra.mxu0 %v3083
        %3433 = vmatpush.bf16.msra.mxu0 %v3082
        %3434 = vmatpush.bf16.msra.mxu0 %v3081
        %3435 = vmatmul.bf16.gmra.mxu0 %v2444
        %v3436 = vpop.f32.mrf.mxu0
        %v3437 = vadd.f32 %v3423, %v3436
        %v3438 = vpop.f32.mrf.mxu0
        %v3439 = vadd.f32 %v3425, %v3438
        %3440 = vdwg.mxu0
        %v3441 = vadd.f32 %v1491, %v3437
        %v3442 = vadd.f32 %v1492, %v3439
        %v3443 = vld [vmem:[%s709] sm:$0x1]
        %v3444 = vld [vmem:[%s712] sm:$0x1]
        %v3445 = vsel %vm811, %v3441, 0.0
        %3446 = vadd.xlane.f32.xlu0 %v3445
        %v3447 = vpop.xlane.xlu0 %3446
        %v3448 = vsel %vm811, %v3442, 0.0
        %3449 = vadd.xlane.f32.xlu0 %v3448
        %v3450 = vpop.xlane.xlu0 %3449
        %v3451 = vmul.f32 %v3447, %v1444
        %v3452 = vmul.f32 %v3450, %v1444
        %v3453 = vsub.f32 %v3441, %v3451
        %v3454 = vsub.f32 %v3442, %v3452
        %v3455 = vmul.f32 %v3453, %v3453
        %v3456 = vmul.f32 %v3454, %v3454
        %v3457 = vsel %vm811, %v3455, 0.0
        %3458 = vadd.xlane.f32.xlu0 %v3457
        %v3459 = vpop.xlane.xlu0 %3458
        %v3460 = vsel %vm811, %v3456, 0.0
        %3461 = vadd.xlane.f32.xlu0 %v3460
        %v3462 = vpop.xlane.xlu0 %3461
        %v3463 = vmul.f32 %v3459, %v1444
        %v3464 = vmul.f32 %v3462, %v1444
        %v3465 = vadd.f32 %v3463, 1e-05
        %v3466 = vadd.f32 %v3464, 1e-05
        %v3467 = vrsqrt.pop %v3465
        %v3468 = vmul.f32 %v3467, %v3465
        %v3469 = vmul.f32 %v3468, %v3467
        %v3470 = vmul.f32 0.5, %v3469
        %v3471 = vsub.f32 1.5, %v3470
        %v3472 = vmul.f32 %v3467, %v3471
        %vm3473 = vweird.f32 %v3465
        %vm3474 = vweird.f32 %v3467
        %vm3475 = vmor %vm3473, %vm3474
        %v3476 = vsel %vm3475, %v3467, %v3472
        %v3477 = vrsqrt.pop %v3466
        %v3478 = vmul.f32 %v3477, %v3466
        %v3479 = vmul.f32 %v3478, %v3477
        %v3480 = vmul.f32 0.5, %v3479
        %v3481 = vsub.f32 1.5, %v3480
        %v3482 = vmul.f32 %v3477, %v3481
        %vm3483 = vweird.f32 %v3466
        %vm3484 = vweird.f32 %v3477
        %vm3485 = vmor %vm3483, %vm3484
        %v3486 = vsel %vm3485, %v3477, %v3482
        %v3487 = vmul.f32 %v3453, %v3476
        %v3488 = vmul.f32 %v3454, %v3486
        %v3490 = vperm.slane %v3443, 0
        %v3492 = vmul.f32 %v3487, %v3490
        %v3493 = vmul.f32 %v3488, %v3490
        %v3495 = vperm.slane %v3444, 0
        %v3497 = vadd.f32 %v3492, %v3495
        %v3498 = vadd.f32 %v3493, %v3495
        %3499 = vst.msk [vmem:[#allocation2] sm:$0xff] %vm811, %v3497
        %3500 = vst.msk [vmem:[#allocation2 + $0x8] sm:$0xff] %vm811, %v3498
        %p3501 = scmp.eq.s32.totalorder %s29, 1
        // Predicated region
        $region93: #{transformer_forward.1} parent=87 // pred_check
          %p3502 = pneg %p3501
        $region94: #{transformer_forward.1} parent=87 // pred_check_branch
          %3504 = sbr.rel (%p3502) target = $region96
        $region95: #{transformer_forward.1} parent=87 // pred_region
          %v3506 = vrot.slane %v3497, 7
          %v3509 = vrot.slane %v3498, 6
          %vm3511 = vcmask 1040384
          %v3512 = vsel %vm3511, %v3506, %v3509
          %v3513 = vld [vmem:[%s3] sm:$0xf]
          %v3514 = vld [vmem:[%s3 + $0x4] sm:$0xf]
          %v3515 = vld [vmem:[%s3 + $0x8] sm:$0xf]
          %v3516 = vld [vmem:[%s3 + $0xc] sm:$0xf]
          %v3517 = vld [vmem:[%s3 + $0x10] sm:$0xf]
          %v3518 = vld [vmem:[%s3 + $0x14] sm:$0xf]
          %v3519 = vld [vmem:[%s3 + $0x18] sm:$0xf]
          %v3520 = vld [vmem:[%s3 + $0x1c] sm:$0xf]
          %v3521 = vpack.c.bf16 %v3512, %v3512
          %v3522 = vld [vmem:[%s4] sm:$0x1]
          %v3524 = vperm.slane %v3522, 0
          %v3534 = vunpack.c.l.b16 %v3513
          %v3535 = vunpack.c.l.b16 %v3514
          %v3536 = vunpack.c.l.b16 %v3515
          %v3537 = vunpack.c.l.b16 %v3516
          %v3538 = vunpack.c.l.b16 %v3517
          %v3539 = vunpack.c.l.b16 %v3518
          %v3540 = vunpack.c.l.b16 %v3519
          %v3541 = vunpack.c.l.b16 %v3520
          %v3542 = vpack.c.b16 %v3535, %v3534
          %v3543 = vpack.c.b16 %v3537, %v3536
          %v3544 = vpack.c.b16 %v3539, %v3538
          %v3545 = vpack.c.b16 %v3541, %v3540
          %v3551 = vsel %vm811, %v3521, 0
          %3553 = vmatpush.bf16.msra.mxu0 0
          %3554 = vmatpush.bf16.msra.mxu0 0
          %3555 = vmatpush.bf16.msra.mxu0 0
          %3556 = vmatpush.bf16.msra.mxu0 0
          %3557 = vmatpush.bf16.msra.mxu0 %v3545
          %3558 = vmatpush.bf16.msra.mxu0 %v3544
          %3559 = vmatpush.bf16.msra.mxu0 %v3543
          %3560 = vmatpush.bf16.msra.mxu0 %v3542
          %3561 = vmatmul.bf16.gmra.mxu0 %v3551
          %v3562 = vpop.f32.mrf.mxu0
          %v3563 = vadd.f32 %v3524, %v3562
          %v3564 = vpop.f32.mrf.mxu0
          %3565 = vdwg.mxu0
          %vm3566 = vcmask 50176
          %3567 = vst.msk [vmem:[#allocation3] sm:$0x3] %vm3566, %v3563
        $region96: #{transformer_forward.1} parent=87 // pred_fallthru
          _
        // Predicated region
        $region97: #{transformer_forward.1} parent=87 // pred_check
          %p3568 = pneg %p459
        $region98: #{transformer_forward.1} parent=87 // pred_check_branch
          %3570 = sbr.rel (%p3568) target = $region100
        $region99: #{transformer_forward.1} parent=87 // pred_region
          %3572 = vsyncadd [#allocation4], 0
          %s3574 = sshll.u32 [#allocation3], 4
          %s3575 = int_to_ptr.vmem [resolvable:$true] %s3574
          %s3576 = sshll.u32 %s17, 4
          %s3577 = int_to_ptr.hbm [resolvable:$true] %s3576
          %3579 = dma.vmem_to_hbm [thread:$0]  %s3575, 32, %s3577, [#allocation4]
        $region100: #{transformer_forward.1} parent=87 // pred_fallthru
          _
        // Predicated region
        $region101: #{transformer_forward.1} parent=87 // pred_check
          %p3580 = pneg %p459
        $region102: #{transformer_forward.1} parent=87 // pred_check_branch
          %3582 = sbr.rel (%p3580) target = $region104
        $region103: #{transformer_forward.1} parent=87 // pred_region
          %3584 = dma.done [#allocation4], 32
        $region104: #{transformer_forward.1} parent=87 // pred_fallthru
          _
      $region88: #{transformer_forward.1} parent=5 // pred_fallthru
        _
      %p3585 = scmp.le.s32.totalorder 2, %s24
      // Predicated region
      $region105: #{transformer_forward.1} parent=5 // pred_check
        %p3586 = pneg %p3585
      $region106: #{transformer_forward.1} parent=5 // pred_check_branch
        %3588 = sbr.rel (%p3586) target = $region108
      $region107: #{transformer_forward.1} parent=5 // pred_region
        %s3589 = ssub.s32 %s24, 2
      $region108: #{transformer_forward.1} parent=5 // pred_fallthru
        _
    $region6: #{transformer_forward.1} parent=1 // loop_footer
      %s28 = sadd.s32 1, %s24
    $region7: #{transformer_forward.1} parent=1 // loop_footer_branch
      %23 = sbr.rel target = $region3
    $region8: #{transformer_forward.1} parent=1 // loop_exit
      _
    %3590 = vsyncpa [#allocation4], 1
    %s3591 = scalar_lea.sflag [#allocation4], 1
    %3592 = vsyncpa %s3591, 1

</llo_original>
